<compile_context>
chip_gen: v7x
topology: tpu7x:2x2x1
jax: 0.10.0
libtpu: 0.0.40
codegen_flags: <defaults>
</compile_context>

<pallas_src>
import functools
import math

import jax
import jax.numpy as jnp
from jax import lax
from jax.experimental import pallas as pl
from jax.experimental.pallas import tpu as pltpu


# ----------------------------- fused Pallas kernel ---------------------------

def _basic_block_kernel(x_ref, dw_ref, gd_ref, pw_ref, gp_ref, bp_ref,
                        o_ref, pad_ref, *, stride, eps, mxu_bf16):
    # x_ref : (N, H, W, Cin)   NHWC activations (C on the 128-lane axis)
    # dw_ref: (9, Cin)         depthwise 3x3 weights, tap-major (ky*3 + kx)
    # gd    : (1, Cin)         BN-depth gamma (beta_d not needed -- see header)
    # pw_ref: (Cin, Cout)      pointwise 1x1 weights
    # gp/bp : (1, Cout)        BN-point gamma / beta
    # o_ref : (N*Ho*Wo, Cout)  fused-block output (reshaped to NHWC outside)
    # pad_ref: VMEM scratch (N, H+2, W+2, Cin) -- x with a 1-pixel zero halo
    N, H, W, Cin = x_ref.shape
    Cout = o_ref.shape[1]
    Ho = (H - 1) // stride + 1
    Wo = (W - 1) // stride + 1
    R = N * Ho * Wo
    inv_r = 1.0 / R

    # ---- 1-pixel zero halo built in VMEM (only borders zeroed, interior = x) ----
    zrow = jnp.zeros((N, 1, W + 2, Cin), jnp.float32)
    pad_ref[:, 0:1, :, :] = zrow
    pad_ref[:, H + 1:H + 2, :, :] = zrow
    zcol = jnp.zeros((N, H + 2, 1, Cin), jnp.float32)
    pad_ref[:, :, 0:1, :] = zcol
    pad_ref[:, :, W + 1:W + 2, :] = zcol
    pad_ref[:, 1:H + 1, 1:W + 1, :] = x_ref[...]

    # ---- depthwise 3x3: 9 shifted multiply-adds; stride applied in the reads ----
    acc = jnp.zeros((N, Ho, Wo, Cin), jnp.float32)
    for ky in range(3):
        for kx in range(3):
            if stride == 1:
                tap = pad_ref[:, ky:ky + Ho, kx:kx + Wo, :]
            else:
                tap = pad_ref[:, pl.ds(ky, Ho, stride), pl.ds(kx, Wo, stride), :]
            w_tap = dw_ref[pl.ds(ky * 3 + kx, 1), :]          # (1, Cin)
            acc = acc + tap * w_tap

    # ---- BN(depth): single-pass batch stats; only the per-channel SCALE matters,
    #      and it is folded into the pointwise weights (the shift is a row constant
    #      through the 1x1 conv and is removed exactly by BN(point)). ----
    a2 = acc.reshape(R, Cin)
    mean_d = jnp.sum(a2, axis=0, keepdims=True) * inv_r
    ex2_d = jnp.sum(a2 * a2, axis=0, keepdims=True) * inv_r
    var_d = jnp.maximum(ex2_d - mean_d * mean_d, 0.0)
    scale_d = lax.rsqrt(var_d + eps) * gd_ref[...]             # (1, Cin)
    pw_scaled = pw_ref[...] * scale_d.reshape(Cin, 1)          # (Cin, Cout)

    # ---- pointwise 1x1 conv on the MXU (single full-block matmul) ----
    if mxu_bf16:
        z = jnp.dot(a2.astype(jnp.bfloat16), pw_scaled.astype(jnp.bfloat16),
                    preferred_element_type=jnp.float32)
    else:
        z = jnp.dot(a2, pw_scaled, preferred_element_type=jnp.float32)

    # ---- BN(point): single-pass batch stats, fused affine epilogue ----
    mean_p = jnp.sum(z, axis=0, keepdims=True) * inv_r
    ex2_p = jnp.sum(z * z, axis=0, keepdims=True) * inv_r
    var_p = jnp.maximum(ex2_p - mean_p * mean_p, 0.0)
    scale_p = lax.rsqrt(var_p + eps) * gp_ref[...]
    o_ref[...] = (z * scale_p + (bp_ref[...] - mean_p * scale_p)).astype(o_ref.dtype)


# ----------------------------- wrapper ---------------------------------------

def basic_block_gumbel_forward(x_nchw, params, temp=1.0, is_hard=False, *,
                               stride=1, eps=1e-5, mxu_bf16=False):
    """BasicBlockGumbel.forward(x, temp, is_hard). temp/is_hard are no-ops with the
    plain nn.Conv2d conv_func, so they do not affect the dense math."""
    del temp, is_hard
    N, Cin, H, W = x_nchw.shape
    Cout = params["pw_w"].shape[1]
    Ho = (H - 1) // stride + 1
    Wo = (W - 1) // stride + 1

    x = jnp.transpose(x_nchw, (0, 2, 3, 1)).astype(jnp.float32)   # NHWC for the kernel

    kernel = functools.partial(_basic_block_kernel, stride=stride, eps=eps,
                               mxu_bf16=mxu_bf16)
    out2d = pl.pallas_call(
        kernel,
        out_shape=jax.ShapeDtypeStruct((N * Ho * Wo, Cout), jnp.float32),
        in_specs=[pl.BlockSpec(memory_space=pltpu.MemorySpace.VMEM)] * 6,
        out_specs=pl.BlockSpec(memory_space=pltpu.MemorySpace.VMEM),
        scratch_shapes=[pltpu.VMEM((N, H + 2, W + 2, Cin), jnp.float32)],
    )(x,
      params["dw_w"],
      params["bn_d_g"].reshape(1, Cin),
      params["pw_w"],
      params["bn_p_g"].reshape(1, Cout),
      params["bn_p_b"].reshape(1, Cout))

    out = out2d.reshape(N, Ho, Wo, Cout)
    return jnp.transpose(out, (0, 3, 1, 2))                      # back to NCHW


# ----------------------------- parameters ------------------------------------

def init_params(key, inp, oup):
    k1, k2 = jax.random.split(key)
    # kaiming_normal_(mode='fan_out') style scales; BN fresh-module defaults gamma=1, beta=0.
    dw_w = jax.random.normal(k1, (9, inp), jnp.float32) * math.sqrt(2.0 / 9.0)
    pw_w = jax.random.normal(k2, (inp, oup), jnp.float32) * math.sqrt(2.0 / oup)
    return dict(
        dw_w=dw_w,
        bn_d_g=jnp.ones((inp,), jnp.float32), bn_d_b=jnp.zeros((inp,), jnp.float32),
        pw_w=pw_w,
        bn_p_g=jnp.ones((oup,), jnp.float32), bn_p_b=jnp.zeros((oup,), jnp.float32),
    )


# ----------------------------- pure-JAX reference (for self-check) -----------

def _bn_ref(x, g, b, eps):
    mean = jnp.mean(x, axis=(0, 2, 3), keepdims=True)
    var = jnp.mean((x - mean) ** 2, axis=(0, 2, 3), keepdims=True)   # biased variance
    return (x - mean) * lax.rsqrt(var + eps) * g.reshape(1, -1, 1, 1) + b.reshape(1, -1, 1, 1)


def _reference_forward(x_nchw, params, *, stride, eps=1e-5):
    x = x_nchw.astype(jnp.float32)
    cin = x.shape[1]
    rhs = jnp.transpose(params["dw_w"].reshape(3, 3, cin), (2, 0, 1))[:, None, :, :]  # (Cin,1,3,3)
    y = lax.conv_general_dilated(
        x, rhs, window_strides=(stride, stride), padding=((1, 1), (1, 1)),
        dimension_numbers=("NCHW", "OIHW", "NCHW"),
        feature_group_count=cin, precision=lax.Precision.HIGHEST)
    y = _bn_ref(y, params["bn_d_g"], params["bn_d_b"], eps)
    z = jnp.einsum("nchw,cd->ndhw", y, params["pw_w"], precision=lax.Precision.HIGHEST)
    return _bn_ref(z, params["bn_p_g"], params["bn_p_b"], eps)


# ----------------------------- demo -------------------------------------------

if __name__ == "__main__":
    key = jax.random.PRNGKey(0)
    kx, kp, kg1, kb1, kg2, kb2 = jax.random.split(key, 6)
    N, Cin, Cout, H, W = 2, 8, 16, 16, 16
    x = jax.random.normal(kx, (N, Cin, H, W), jnp.float32)
    params = init_params(kp, Cin, Cout)
    # Non-trivial BN affine params so the self-check actually exercises the
    # gamma/beta handling (in particular the BN-depth fold, incl. dropped beta_d).
    params["bn_d_g"] = 1.0 + 0.2 * jax.random.normal(kg1, (Cin,), jnp.float32)
    params["bn_d_b"] = 0.3 * jax.random.normal(kb1, (Cin,), jnp.float32)
    params["bn_p_g"] = 1.0 + 0.2 * jax.random.normal(kg2, (Cout,), jnp.float32)
    params["bn_p_b"] = 0.3 * jax.random.normal(kb2, (Cout,), jnp.float32)

    for stride in (1, 2):
        fwd = jax.jit(functools.partial(basic_block_gumbel_forward, stride=stride))
        out = fwd(x, params)
        jax.block_until_ready(out)
        Ho = (H - 1) // stride + 1
        assert out.shape == (N, Cout, Ho, Ho) and out.dtype == jnp.float32
        ref = _reference_forward(x, params, stride=stride)
        err = float(jnp.max(jnp.abs(out - ref)))
        assert err < 5e-3, f"stride={stride}: max abs error {err}"

    print("KERNEL_OK")
</pallas_src>

<mosaic_0001>
module attributes {stable_mosaic.version = 11 : i64} {
  func.func @_basic_block_kernel(%arg0: memref<2x16x16x8xf32, #tpu.memory_space<vmem>>, %arg1: memref<9x8xf32, #tpu.memory_space<vmem>>, %arg2: memref<1x8xf32, #tpu.memory_space<vmem>>, %arg3: memref<8x16xf32, #tpu.memory_space<vmem>>, %arg4: memref<1x16xf32, #tpu.memory_space<vmem>>, %arg5: memref<1x16xf32, #tpu.memory_space<vmem>>, %arg6: memref<512x16xf32, #tpu.memory_space<vmem>>, %arg7: memref<2x18x18x8xf32, #tpu.memory_space<vmem>>) attributes {dimension_semantics = [], scalar_prefetch = 0 : i64, scratch_operands = 1 : i64, tpu.core_type = #tpu.core_type<tc>} {
    %cst = arith.constant 0.000000e+00 : f32
    %0 = vector.broadcast %cst : f32 to vector<2x1x18x8xf32>
    %c0 = arith.constant 0 : index
    %c0_0 = arith.constant 0 : index
    %c0_1 = arith.constant 0 : index
    %c0_2 = arith.constant 0 : index
    %1 = vector.load %arg7[%c0, %c0_0, %c0_1, %c0_2] : memref<2x18x18x8xf32, #tpu.memory_space<vmem>>, vector<2x1x18x8xf32>
    tpu.vector_store %arg7[%c0, %c0_0, %c0_1, %c0_2], %0 {strides = array<i32>} : memref<2x18x18x8xf32, #tpu.memory_space<vmem>>, vector<2x1x18x8xf32>,
    %c0_3 = arith.constant 0 : index
    %c17 = arith.constant 17 : index
    %c0_4 = arith.constant 0 : index
    %c0_5 = arith.constant 0 : index
    %2 = vector.load %arg7[%c0_3, %c17, %c0_4, %c0_5] : memref<2x18x18x8xf32, #tpu.memory_space<vmem>>, vector<2x1x18x8xf32>
    tpu.vector_store %arg7[%c0_3, %c17, %c0_4, %c0_5], %0 {strides = array<i32>} : memref<2x18x18x8xf32, #tpu.memory_space<vmem>>, vector<2x1x18x8xf32>,
    %cst_6 = arith.constant 0.000000e+00 : f32
    %3 = vector.broadcast %cst_6 : f32 to vector<2x18x1x8xf32>
    %c0_7 = arith.constant 0 : index
    %c0_8 = arith.constant 0 : index
    %c0_9 = arith.constant 0 : index
    %c0_10 = arith.constant 0 : index
    %4 = vector.load %arg7[%c0_7, %c0_8, %c0_9, %c0_10] : memref<2x18x18x8xf32, #tpu.memory_space<vmem>>, vector<2x18x1x8xf32>
    tpu.vector_store %arg7[%c0_7, %c0_8, %c0_9, %c0_10], %3 {strides = array<i32>} : memref<2x18x18x8xf32, #tpu.memory_space<vmem>>, vector<2x18x1x8xf32>,
    %c0_11 = arith.constant 0 : index
    %c0_12 = arith.constant 0 : index
    %c17_13 = arith.constant 17 : index
    %c0_14 = arith.constant 0 : index
    %5 = vector.load %arg7[%c0_11, %c0_12, %c17_13, %c0_14] : memref<2x18x18x8xf32, #tpu.memory_space<vmem>>, vector<2x18x1x8xf32>
    tpu.vector_store %arg7[%c0_11, %c0_12, %c17_13, %c0_14], %3 {strides = array<i32>} : memref<2x18x18x8xf32, #tpu.memory_space<vmem>>, vector<2x18x1x8xf32>,
    %c0_15 = arith.constant 0 : index
    %c0_16 = arith.constant 0 : index
    %c0_17 = arith.constant 0 : index
    %c0_18 = arith.constant 0 : index
    %6 = vector.load %arg0[%c0_15, %c0_16, %c0_17, %c0_18] : memref<2x16x16x8xf32, #tpu.memory_space<vmem>>, vector<2x16x16x8xf32>
    %c0_19 = arith.constant 0 : index
    %c1 = arith.constant 1 : index
    %c1_20 = arith.constant 1 : index
    %c0_21 = arith.constant 0 : index
    %7 = vector.load %arg7[%c0_19, %c1, %c1_20, %c0_21] : memref<2x18x18x8xf32, #tpu.memory_space<vmem>>, vector<2x16x16x8xf32>
    tpu.vector_store %arg7[%c0_19, %c1, %c1_20, %c0_21], %6 {strides = array<i32>} : memref<2x18x18x8xf32, #tpu.memory_space<vmem>>, vector<2x16x16x8xf32>,
    %cst_22 = arith.constant 0.000000e+00 : f32
    %8 = vector.broadcast %cst_22 : f32 to vector<2x16x16x8xf32>
    %c0_23 = arith.constant 0 : index
    %c0_24 = arith.constant 0 : index
    %c0_25 = arith.constant 0 : index
    %c0_26 = arith.constant 0 : index
    %9 = vector.load %arg7[%c0_23, %c0_24, %c0_25, %c0_26] : memref<2x18x18x8xf32, #tpu.memory_space<vmem>>, vector<2x16x16x8xf32>
    %c0_27 = arith.constant 0 : index
    %c0_28 = arith.constant 0 : index
    %10 = vector.load %arg1[%c0_27, %c0_28] : memref<9x8xf32, #tpu.memory_space<vmem>>, vector<1x8xf32>
    %11 = vector.shape_cast %10 : vector<1x8xf32> to vector<1x1x1x8xf32>
    %12 = vector.broadcast %11 : vector<1x1x1x8xf32> to vector<2x16x16x8xf32>
    %13 = arith.mulf %9, %12 : vector<2x16x16x8xf32>
    %14 = arith.addf %8, %13 : vector<2x16x16x8xf32>
    %c0_29 = arith.constant 0 : index
    %c0_30 = arith.constant 0 : index
    %c1_31 = arith.constant 1 : index
    %c0_32 = arith.constant 0 : index
    %15 = vector.load %arg7[%c0_29, %c0_30, %c1_31, %c0_32] : memref<2x18x18x8xf32, #tpu.memory_space<vmem>>, vector<2x16x16x8xf32>
    %c1_33 = arith.constant 1 : index
    %c0_34 = arith.constant 0 : index
    %16 = vector.load %arg1[%c1_33, %c0_34] : memref<9x8xf32, #tpu.memory_space<vmem>>, vector<1x8xf32>
    %17 = vector.shape_cast %16 : vector<1x8xf32> to vector<1x1x1x8xf32>
    %18 = vector.broadcast %17 : vector<1x1x1x8xf32> to vector<2x16x16x8xf32>
    %19 = arith.mulf %15, %18 : vector<2x16x16x8xf32>
    %20 = arith.addf %14, %19 : vector<2x16x16x8xf32>
    %c0_35 = arith.constant 0 : index
    %c0_36 = arith.constant 0 : index
    %c2 = arith.constant 2 : index
    %c0_37 = arith.constant 0 : index
    %21 = vector.load %arg7[%c0_35, %c0_36, %c2, %c0_37] : memref<2x18x18x8xf32, #tpu.memory_space<vmem>>, vector<2x16x16x8xf32>
    %c2_38 = arith.constant 2 : index
    %c0_39 = arith.constant 0 : index
    %22 = vector.load %arg1[%c2_38, %c0_39] : memref<9x8xf32, #tpu.memory_space<vmem>>, vector<1x8xf32>
    %23 = vector.shape_cast %22 : vector<1x8xf32> to vector<1x1x1x8xf32>
    %24 = vector.broadcast %23 : vector<1x1x1x8xf32> to vector<2x16x16x8xf32>
    %25 = arith.mulf %21, %24 : vector<2x16x16x8xf32>
    %26 = arith.addf %20, %25 : vector<2x16x16x8xf32>
    %c0_40 = arith.constant 0 : index
    %c1_41 = arith.constant 1 : index
    %c0_42 = arith.constant 0 : index
    %c0_43 = arith.constant 0 : index
    %27 = vector.load %arg7[%c0_40, %c1_41, %c0_42, %c0_43] : memref<2x18x18x8xf32, #tpu.memory_space<vmem>>, vector<2x16x16x8xf32>
    %c3 = arith.constant 3 : index
    %c0_44 = arith.constant 0 : index
    %28 = vector.load %arg1[%c3, %c0_44] : memref<9x8xf32, #tpu.memory_space<vmem>>, vector<1x8xf32>
    %29 = vector.shape_cast %28 : vector<1x8xf32> to vector<1x1x1x8xf32>
    %30 = vector.broadcast %29 : vector<1x1x1x8xf32> to vector<2x16x16x8xf32>
    %31 = arith.mulf %27, %30 : vector<2x16x16x8xf32>
    %32 = arith.addf %26, %31 : vector<2x16x16x8xf32>
    %c0_45 = arith.constant 0 : index
    %c1_46 = arith.constant 1 : index
    %c1_47 = arith.constant 1 : index
    %c0_48 = arith.constant 0 : index
    %33 = vector.load %arg7[%c0_45, %c1_46, %c1_47, %c0_48] : memref<2x18x18x8xf32, #tpu.memory_space<vmem>>, vector<2x16x16x8xf32>
    %c4 = arith.constant 4 : index
    %c0_49 = arith.constant 0 : index
    %34 = vector.load %arg1[%c4, %c0_49] : memref<9x8xf32, #tpu.memory_space<vmem>>, vector<1x8xf32>
    %35 = vector.shape_cast %34 : vector<1x8xf32> to vector<1x1x1x8xf32>
    %36 = vector.broadcast %35 : vector<1x1x1x8xf32> to vector<2x16x16x8xf32>
    %37 = arith.mulf %33, %36 : vector<2x16x16x8xf32>
    %38 = arith.addf %32, %37 : vector<2x16x16x8xf32>
    %c0_50 = arith.constant 0 : index
    %c1_51 = arith.constant 1 : index
    %c2_52 = arith.constant 2 : index
    %c0_53 = arith.constant 0 : index
    %39 = vector.load %arg7[%c0_50, %c1_51, %c2_52, %c0_53] : memref<2x18x18x8xf32, #tpu.memory_space<vmem>>, vector<2x16x16x8xf32>
    %c5 = arith.constant 5 : index
    %c0_54 = arith.constant 0 : index
    %40 = vector.load %arg1[%c5, %c0_54] : memref<9x8xf32, #tpu.memory_space<vmem>>, vector<1x8xf32>
    %41 = vector.shape_cast %40 : vector<1x8xf32> to vector<1x1x1x8xf32>
    %42 = vector.broadcast %41 : vector<1x1x1x8xf32> to vector<2x16x16x8xf32>
    %43 = arith.mulf %39, %42 : vector<2x16x16x8xf32>
    %44 = arith.addf %38, %43 : vector<2x16x16x8xf32>
    %c0_55 = arith.constant 0 : index
    %c2_56 = arith.constant 2 : index
    %c0_57 = arith.constant 0 : index
    %c0_58 = arith.constant 0 : index
    %45 = vector.load %arg7[%c0_55, %c2_56, %c0_57, %c0_58] : memref<2x18x18x8xf32, #tpu.memory_space<vmem>>, vector<2x16x16x8xf32>
    %c6 = arith.constant 6 : index
    %c0_59 = arith.constant 0 : index
    %46 = vector.load %arg1[%c6, %c0_59] : memref<9x8xf32, #tpu.memory_space<vmem>>, vector<1x8xf32>
    %47 = vector.shape_cast %46 : vector<1x8xf32> to vector<1x1x1x8xf32>
    %48 = vector.broadcast %47 : vector<1x1x1x8xf32> to vector<2x16x16x8xf32>
    %49 = arith.mulf %45, %48 : vector<2x16x16x8xf32>
    %50 = arith.addf %44, %49 : vector<2x16x16x8xf32>
    %c0_60 = arith.constant 0 : index
    %c2_61 = arith.constant 2 : index
    %c1_62 = arith.constant 1 : index
    %c0_63 = arith.constant 0 : index
    %51 = vector.load %arg7[%c0_60, %c2_61, %c1_62, %c0_63] : memref<2x18x18x8xf32, #tpu.memory_space<vmem>>, vector<2x16x16x8xf32>
    %c7 = arith.constant 7 : index
    %c0_64 = arith.constant 0 : index
    %52 = vector.load %arg1[%c7, %c0_64] : memref<9x8xf32, #tpu.memory_space<vmem>>, vector<1x8xf32>
    %53 = vector.shape_cast %52 : vector<1x8xf32> to vector<1x1x1x8xf32>
    %54 = vector.broadcast %53 : vector<1x1x1x8xf32> to vector<2x16x16x8xf32>
    %55 = arith.mulf %51, %54 : vector<2x16x16x8xf32>
    %56 = arith.addf %50, %55 : vector<2x16x16x8xf32>
    %c0_65 = arith.constant 0 : index
    %c2_66 = arith.constant 2 : index
    %c2_67 = arith.constant 2 : index
    %c0_68 = arith.constant 0 : index
    %57 = vector.load %arg7[%c0_65, %c2_66, %c2_67, %c0_68] : memref<2x18x18x8xf32, #tpu.memory_space<vmem>>, vector<2x16x16x8xf32>
    %c8 = arith.constant 8 : index
    %c0_69 = arith.constant 0 : index
    %58 = vector.load %arg1[%c8, %c0_69] : memref<9x8xf32, #tpu.memory_space<vmem>>, vector<1x8xf32>
    %59 = vector.shape_cast %58 : vector<1x8xf32> to vector<1x1x1x8xf32>
    %60 = vector.broadcast %59 : vector<1x1x1x8xf32> to vector<2x16x16x8xf32>
    %61 = arith.mulf %57, %60 : vector<2x16x16x8xf32>
    %62 = arith.addf %56, %61 : vector<2x16x16x8xf32>
    %63 = vector.shape_cast %62 : vector<2x16x16x8xf32> to vector<512x8xf32>
    %cst_70 = arith.constant dense<0.000000e+00> : vector<8xf32>
    %64 = vector.multi_reduction <add>, %63, %cst_70 [0] : vector<512x8xf32> to vector<8xf32>
    %65 = vector.shape_cast %64 : vector<8xf32> to vector<1x8xf32>
    %cst_71 = arith.constant 0.001953125 : f32
    %66 = vector.broadcast %cst_71 : f32 to vector<1x8xf32>
    %67 = arith.mulf %65, %66 : vector<1x8xf32>
    %68 = arith.mulf %63, %63 : vector<512x8xf32>
    %cst_72 = arith.constant dense<0.000000e+00> : vector<8xf32>
    %69 = vector.multi_reduction <add>, %68, %cst_72 [0] : vector<512x8xf32> to vector<8xf32>
    %70 = vector.shape_cast %69 : vector<8xf32> to vector<1x8xf32>
    %cst_73 = arith.constant 0.001953125 : f32
    %71 = vector.broadcast %cst_73 : f32 to vector<1x8xf32>
    %72 = arith.mulf %70, %71 : vector<1x8xf32>
    %73 = arith.mulf %67, %67 : vector<1x8xf32>
    %74 = arith.subf %72, %73 : vector<1x8xf32>
    %cst_74 = arith.constant 0.000000e+00 : f32
    %75 = vector.broadcast %cst_74 : f32 to vector<1x8xf32>
    %76 = arith.maximumf %74, %75 : vector<1x8xf32>
    %cst_75 = arith.constant 9.99999974E-6 : f32
    %77 = vector.broadcast %cst_75 : f32 to vector<1x8xf32>
    %78 = arith.addf %76, %77 : vector<1x8xf32>
    %79 = math.rsqrt %78 : vector<1x8xf32>
    %c0_76 = arith.constant 0 : index
    %c0_77 = arith.constant 0 : index
    %80 = vector.load %arg2[%c0_76, %c0_77] : memref<1x8xf32, #tpu.memory_space<vmem>>, vector<1x8xf32>
    %81 = arith.mulf %79, %80 : vector<1x8xf32>
    %c0_78 = arith.constant 0 : index
    %c0_79 = arith.constant 0 : index
    %82 = vector.load %arg3[%c0_78, %c0_79] : memref<8x16xf32, #tpu.memory_space<vmem>>, vector<8x16xf32>
    %83 = vector.shape_cast %81 : vector<1x8xf32> to vector<8x1xf32>
    %84 = vector.broadcast %83 : vector<8x1xf32> to vector<8x16xf32>
    %85 = arith.mulf %82, %84 : vector<8x16xf32>
    %cst_80 = arith.constant dense<0.000000e+00> : vector<512x16xf32>
    %86 = tpu.matmul %63, %85, %cst_80 {dimension_numbers = #tpu.dot_dimension_numbers<[1], [0], [0], [1], [0, 0, 1, 1], [], []>} : vector<512x8xf32>, vector<8x16xf32>, vector<512x16xf32> -> vector<512x16xf32>
    %cst_81 = arith.constant dense<0.000000e+00> : vector<16xf32>
    %87 = vector.multi_reduction <add>, %86, %cst_81 [0] : vector<512x16xf32> to vector<16xf32>
    %88 = vector.shape_cast %87 : vector<16xf32> to vector<1x16xf32>
    %cst_82 = arith.constant 0.001953125 : f32
    %89 = vector.broadcast %cst_82 : f32 to vector<1x16xf32>
    %90 = arith.mulf %88, %89 : vector<1x16xf32>
    %91 = arith.mulf %86, %86 : vector<512x16xf32>
    %cst_83 = arith.constant dense<0.000000e+00> : vector<16xf32>
    %92 = vector.multi_reduction <add>, %91, %cst_83 [0] : vector<512x16xf32> to vector<16xf32>
    %93 = vector.shape_cast %92 : vector<16xf32> to vector<1x16xf32>
    %cst_84 = arith.constant 0.001953125 : f32
    %94 = vector.broadcast %cst_84 : f32 to vector<1x16xf32>
    %95 = arith.mulf %93, %94 : vector<1x16xf32>
    %96 = arith.mulf %90, %90 : vector<1x16xf32>
    %97 = arith.subf %95, %96 : vector<1x16xf32>
    %cst_85 = arith.constant 0.000000e+00 : f32
    %98 = vector.broadcast %cst_85 : f32 to vector<1x16xf32>
    %99 = arith.maximumf %97, %98 : vector<1x16xf32>
    %cst_86 = arith.constant 9.99999974E-6 : f32
    %100 = vector.broadcast %cst_86 : f32 to vector<1x16xf32>
    %101 = arith.addf %99, %100 : vector<1x16xf32>
    %102 = math.rsqrt %101 : vector<1x16xf32>
    %c0_87 = arith.constant 0 : index
    %c0_88 = arith.constant 0 : index
    %103 = vector.load %arg4[%c0_87, %c0_88] : memref<1x16xf32, #tpu.memory_space<vmem>>, vector<1x16xf32>
    %104 = arith.mulf %102, %103 : vector<1x16xf32>
    %105 = vector.broadcast %104 : vector<1x16xf32> to vector<512x16xf32>
    %106 = arith.mulf %86, %105 : vector<512x16xf32>
    %c0_89 = arith.constant 0 : index
    %c0_90 = arith.constant 0 : index
    %107 = vector.load %arg5[%c0_89, %c0_90] : memref<1x16xf32, #tpu.memory_space<vmem>>, vector<1x16xf32>
    %108 = arith.mulf %90, %104 : vector<1x16xf32>
    %109 = arith.subf %107, %108 : vector<1x16xf32>
    %110 = vector.broadcast %109 : vector<1x16xf32> to vector<512x16xf32>
    %111 = arith.addf %106, %110 : vector<512x16xf32>
    %c0_91 = arith.constant 0 : index
    %c0_92 = arith.constant 0 : index
    %112 = vector.load %arg6[%c0_91, %c0_92] : memref<512x16xf32, #tpu.memory_space<vmem>>, vector<512x16xf32>
    tpu.vector_store %arg6[%c0_91, %c0_92], %111 {strides = array<i32>} : memref<512x16xf32, #tpu.memory_space<vmem>>, vector<512x16xf32>,
    return
  }
}

</mosaic_0001>

<llo_original>
// kernel: basic_block_gumbel_forward.1
$region0: #{basic_block_gumbel_forward.1}
  #allocation0 [shape = 'u32[]', space=smem, size = 0x4, offset = 0x4, fixed_abs, tag = 'smem constant byte address 0x4 - core index']
  #allocation1 [shape = 'u32[144,128]{1,0:T(1,128)}', space=vmem, size = 0x12000, scoped, tag = 'internal scratch']
  #allocation2 [shape = 'f32[2,18,18,8]{3,2,1,0:T(8,128)}', space=vmem, size = 0x6c000, scoped, tag = 'scratch operand']
  %s0 = inlined_call_operand.vmem [shape: f32[2,16,16,8], index: 0, kind: input, shape index: {}]
  %s1 = inlined_call_operand.vmem [shape: f32[9,8], index: 1, kind: input, shape index: {}]
  %s2 = inlined_call_operand.vmem [shape: f32[1,8], index: 2, kind: input, shape index: {}]
  %s3 = inlined_call_operand.vmem [shape: f32[8,16], index: 3, kind: input, shape index: {}]
  %s4 = inlined_call_operand.vmem [shape: f32[1,16], index: 4, kind: input, shape index: {}]
  %s5 = inlined_call_operand.vmem [shape: f32[1,16], index: 5, kind: input, shape index: {}]
  %s6 = inlined_call_operand.vmem [shape: f32[512,16], index: 6, kind: output, shape index: {}]
  %s7 = sld [smem:[#allocation0]]
  $region34: #{basic_block_gumbel_forward.1} parent=0
    _
  %s9 = ssub.s32 1, %s7
  %s10 = scalar_select 0, %s9, %s7
  // Predicated region
  $region2: #{basic_block_gumbel_forward.1} parent=0 // pred_check
    _
  $region3: #{basic_block_gumbel_forward.1} parent=0 // pred_check_branch
    %12 = sbr.rel (0) target = $region5
  $region4: #{basic_block_gumbel_forward.1} parent=0 // pred_region
    _
  $region5: #{basic_block_gumbel_forward.1} parent=0 // pred_fallthru
    _
  // Predicated region
  $region6: #{basic_block_gumbel_forward.1} parent=0 // pred_check
    _
  $region7: #{basic_block_gumbel_forward.1} parent=0 // pred_check_branch
    %14 = sbr.rel (0) target = $region9
  $region8: #{basic_block_gumbel_forward.1} parent=0 // pred_region
    _
  $region9: #{basic_block_gumbel_forward.1} parent=0 // pred_fallthru
    _
  // Predicated region
  $region10: #{basic_block_gumbel_forward.1} parent=0 // pred_check
    _
  $region11: #{basic_block_gumbel_forward.1} parent=0 // pred_check_branch
    %16 = sbr.rel (0) target = $region13
  $region12: #{basic_block_gumbel_forward.1} parent=0 // pred_region
    _
  $region13: #{basic_block_gumbel_forward.1} parent=0 // pred_fallthru
    _
  // Predicated region
  $region14: #{basic_block_gumbel_forward.1} parent=0 // pred_check
    _
  $region15: #{basic_block_gumbel_forward.1} parent=0 // pred_check_branch
    %18 = sbr.rel (0) target = $region17
  $region16: #{basic_block_gumbel_forward.1} parent=0 // pred_region
    _
  $region17: #{basic_block_gumbel_forward.1} parent=0 // pred_fallthru
    _
  // Predicated region
  $region18: #{basic_block_gumbel_forward.1} parent=0 // pred_check
    _
  $region19: #{basic_block_gumbel_forward.1} parent=0 // pred_check_branch
    %20 = sbr.rel (0) target = $region21
  $region20: #{basic_block_gumbel_forward.1} parent=0 // pred_region
    _
  $region21: #{basic_block_gumbel_forward.1} parent=0 // pred_fallthru
    _
  // Predicated region
  $region22: #{basic_block_gumbel_forward.1} parent=0 // pred_check
    _
  $region23: #{basic_block_gumbel_forward.1} parent=0 // pred_check_branch
    %22 = sbr.rel (0) target = $region25
  $region24: #{basic_block_gumbel_forward.1} parent=0 // pred_region
    _
  $region25: #{basic_block_gumbel_forward.1} parent=0 // pred_fallthru
    _
  %vm23 = vcmask 64512
  %24 = vst.msk [vmem:[#allocation2] sm:$0xff] %vm23, 0.0
  %25 = vst.msk [vmem:[#allocation2 + $0x8] sm:$0xff] %vm23, 0.0
  %vm26 = vcmask 58368
  %27 = vst.msk [vmem:[#allocation2 + $0x10] sm:$0x3] %vm26, 0.0
  %28 = vst.msk [vmem:[#allocation2 + $0x1b0] sm:$0xff] %vm23, 0.0
  %29 = vst.msk [vmem:[#allocation2 + $0x1b8] sm:$0xff] %vm23, 0.0
  %30 = vst.msk [vmem:[#allocation2 + $0x1c0] sm:$0x3] %vm26, 0.0
  %s31 = scalar_lea.vmem [#allocation2], 408
  %32 = vst.msk [vmem:[%s31] sm:$0xff] %vm23, 0.0
  %33 = vst.msk [vmem:[%s31 + $0x8] sm:$0xff] %vm23, 0.0
  %34 = vst.msk [vmem:[%s31 + $0x10] sm:$0x3] %vm26, 0.0
  %35 = vst.msk [vmem:[%s31 + $0x1b0] sm:$0xff] %vm23, 0.0
  %36 = vst.msk [vmem:[%s31 + $0x1b8] sm:$0xff] %vm23, 0.0
  %37 = vst.msk [vmem:[%s31 + $0x1c0] sm:$0x3] %vm26, 0.0
  %vm38 = vcmask 57344
  %39 = vst.msk [vmem:[#allocation2] sm:$0x1] %vm38, 0.0
  %40 = vst.msk [vmem:[#allocation2 + $0x18] sm:$0x1] %vm38, 0.0
  %41 = vst.msk [vmem:[#allocation2 + $0x30] sm:$0x1] %vm38, 0.0
  %42 = vst.msk [vmem:[#allocation2 + $0x48] sm:$0x1] %vm38, 0.0
  %43 = vst.msk [vmem:[#allocation2 + $0x60] sm:$0x1] %vm38, 0.0
  %44 = vst.msk [vmem:[#allocation2 + $0x78] sm:$0x1] %vm38, 0.0
  %45 = vst.msk [vmem:[#allocation2 + $0x90] sm:$0x1] %vm38, 0.0
  %46 = vst.msk [vmem:[#allocation2 + $0xa8] sm:$0x1] %vm38, 0.0
  %47 = vst.msk [vmem:[#allocation2 + $0xc0] sm:$0x1] %vm38, 0.0
  %48 = vst.msk [vmem:[#allocation2 + $0xd8] sm:$0x1] %vm38, 0.0
  %49 = vst.msk [vmem:[#allocation2 + $0xf0] sm:$0x1] %vm38, 0.0
  %50 = vst.msk [vmem:[#allocation2 + $0x108] sm:$0x1] %vm38, 0.0
  %51 = vst.msk [vmem:[#allocation2 + $0x120] sm:$0x1] %vm38, 0.0
  %52 = vst.msk [vmem:[#allocation2 + $0x138] sm:$0x1] %vm38, 0.0
  %53 = vst.msk [vmem:[#allocation2 + $0x150] sm:$0x1] %vm38, 0.0
  %54 = vst.msk [vmem:[#allocation2 + $0x168] sm:$0x1] %vm38, 0.0
  %55 = vst.msk [vmem:[#allocation2 + $0x180] sm:$0x1] %vm38, 0.0
  %56 = vst.msk [vmem:[#allocation2 + $0x198] sm:$0x1] %vm38, 0.0
  %57 = vst.msk [vmem:[#allocation2 + $0x1b0] sm:$0x1] %vm38, 0.0
  %58 = vst.msk [vmem:[#allocation2 + $0x1c8] sm:$0x1] %vm38, 0.0
  %59 = vst.msk [vmem:[#allocation2 + $0x1e0] sm:$0x1] %vm38, 0.0
  %60 = vst.msk [vmem:[#allocation2 + $0x1f8] sm:$0x1] %vm38, 0.0
  %61 = vst.msk [vmem:[#allocation2 + $0x210] sm:$0x1] %vm38, 0.0
  %62 = vst.msk [vmem:[#allocation2 + $0x228] sm:$0x1] %vm38, 0.0
  %63 = vst.msk [vmem:[#allocation2 + $0x240] sm:$0x1] %vm38, 0.0
  %64 = vst.msk [vmem:[#allocation2 + $0x258] sm:$0x1] %vm38, 0.0
  %65 = vst.msk [vmem:[#allocation2 + $0x270] sm:$0x1] %vm38, 0.0
  %66 = vst.msk [vmem:[#allocation2 + $0x288] sm:$0x1] %vm38, 0.0
  %67 = vst.msk [vmem:[#allocation2 + $0x2a0] sm:$0x1] %vm38, 0.0
  %68 = vst.msk [vmem:[#allocation2 + $0x2b8] sm:$0x1] %vm38, 0.0
  %69 = vst.msk [vmem:[#allocation2 + $0x2d0] sm:$0x1] %vm38, 0.0
  %70 = vst.msk [vmem:[#allocation2 + $0x2e8] sm:$0x1] %vm38, 0.0
  %71 = vst.msk [vmem:[#allocation2 + $0x300] sm:$0x1] %vm38, 0.0
  %72 = vst.msk [vmem:[#allocation2 + $0x318] sm:$0x1] %vm38, 0.0
  %73 = vst.msk [vmem:[#allocation2 + $0x330] sm:$0x1] %vm38, 0.0
  %74 = vst.msk [vmem:[#allocation2 + $0x348] sm:$0x1] %vm38, 0.0
  %75 = vst.msk [vmem:[#allocation2 + $0x11] sm:$0x1] %vm38, 0.0
  %76 = vst.msk [vmem:[#allocation2 + $0x29] sm:$0x1] %vm38, 0.0
  %77 = vst.msk [vmem:[#allocation2 + $0x41] sm:$0x1] %vm38, 0.0
  %78 = vst.msk [vmem:[#allocation2 + $0x59] sm:$0x1] %vm38, 0.0
  %79 = vst.msk [vmem:[#allocation2 + $0x71] sm:$0x1] %vm38, 0.0
  %80 = vst.msk [vmem:[#allocation2 + $0x89] sm:$0x1] %vm38, 0.0
  %81 = vst.msk [vmem:[#allocation2 + $0xa1] sm:$0x1] %vm38, 0.0
  %82 = vst.msk [vmem:[#allocation2 + $0xb9] sm:$0x1] %vm38, 0.0
  %83 = vst.msk [vmem:[#allocation2 + $0xd1] sm:$0x1] %vm38, 0.0
  %84 = vst.msk [vmem:[#allocation2 + $0xe9] sm:$0x1] %vm38, 0.0
  %85 = vst.msk [vmem:[#allocation2 + $0x101] sm:$0x1] %vm38, 0.0
  %86 = vst.msk [vmem:[#allocation2 + $0x119] sm:$0x1] %vm38, 0.0
  %87 = vst.msk [vmem:[#allocation2 + $0x131] sm:$0x1] %vm38, 0.0
  %88 = vst.msk [vmem:[#allocation2 + $0x149] sm:$0x1] %vm38, 0.0
  %89 = vst.msk [vmem:[#allocation2 + $0x161] sm:$0x1] %vm38, 0.0
  %90 = vst.msk [vmem:[#allocation2 + $0x179] sm:$0x1] %vm38, 0.0
  %91 = vst.msk [vmem:[#allocation2 + $0x191] sm:$0x1] %vm38, 0.0
  %92 = vst.msk [vmem:[#allocation2 + $0x1a9] sm:$0x1] %vm38, 0.0
  %93 = vst.msk [vmem:[#allocation2 + $0x1c1] sm:$0x1] %vm38, 0.0
  %94 = vst.msk [vmem:[#allocation2 + $0x1d9] sm:$0x1] %vm38, 0.0
  %95 = vst.msk [vmem:[#allocation2 + $0x1f1] sm:$0x1] %vm38, 0.0
  %96 = vst.msk [vmem:[#allocation2 + $0x209] sm:$0x1] %vm38, 0.0
  %97 = vst.msk [vmem:[#allocation2 + $0x221] sm:$0x1] %vm38, 0.0
  %98 = vst.msk [vmem:[#allocation2 + $0x239] sm:$0x1] %vm38, 0.0
  %99 = vst.msk [vmem:[#allocation2 + $0x251] sm:$0x1] %vm38, 0.0
  %100 = vst.msk [vmem:[#allocation2 + $0x269] sm:$0x1] %vm38, 0.0
  %101 = vst.msk [vmem:[#allocation2 + $0x281] sm:$0x1] %vm38, 0.0
  %102 = vst.msk [vmem:[#allocation2 + $0x299] sm:$0x1] %vm38, 0.0
  %103 = vst.msk [vmem:[#allocation2 + $0x2b1] sm:$0x1] %vm38, 0.0
  %104 = vst.msk [vmem:[#allocation2 + $0x2c9] sm:$0x1] %vm38, 0.0
  %105 = vst.msk [vmem:[#allocation2 + $0x2e1] sm:$0x1] %vm38, 0.0
  %106 = vst.msk [vmem:[#allocation2 + $0x2f9] sm:$0x1] %vm38, 0.0
  %107 = vst.msk [vmem:[#allocation2 + $0x311] sm:$0x1] %vm38, 0.0
  %108 = vst.msk [vmem:[#allocation2 + $0x329] sm:$0x1] %vm38, 0.0
  %109 = vst.msk [vmem:[#allocation2 + $0x341] sm:$0x1] %vm38, 0.0
  %110 = vst.msk [vmem:[#allocation2 + $0x359] sm:$0x1] %vm38, 0.0
  %v111 = vld [vmem:[%s0] sm:$0xff]
  %v112 = vld [vmem:[%s0 + $0x8] sm:$0xff]
  %v113 = vld [vmem:[%s0 + $0x10] sm:$0xff]
  %v114 = vld [vmem:[%s0 + $0x18] sm:$0xff]
  %v115 = vld [vmem:[%s0 + $0x20] sm:$0xff]
  %v116 = vld [vmem:[%s0 + $0x28] sm:$0xff]
  %v117 = vld [vmem:[%s0 + $0x30] sm:$0xff]
  %v118 = vld [vmem:[%s0 + $0x38] sm:$0xff]
  %v119 = vld [vmem:[%s0 + $0x40] sm:$0xff]
  %v120 = vld [vmem:[%s0 + $0x48] sm:$0xff]
  %v121 = vld [vmem:[%s0 + $0x50] sm:$0xff]
  %v122 = vld [vmem:[%s0 + $0x58] sm:$0xff]
  %v123 = vld [vmem:[%s0 + $0x60] sm:$0xff]
  %v124 = vld [vmem:[%s0 + $0x68] sm:$0xff]
  %v125 = vld [vmem:[%s0 + $0x70] sm:$0xff]
  %v126 = vld [vmem:[%s0 + $0x78] sm:$0xff]
  %v127 = vld [vmem:[%s0 + $0x80] sm:$0xff]
  %v128 = vld [vmem:[%s0 + $0x88] sm:$0xff]
  %v129 = vld [vmem:[%s0 + $0x90] sm:$0xff]
  %v130 = vld [vmem:[%s0 + $0x98] sm:$0xff]
  %v131 = vld [vmem:[%s0 + $0xa0] sm:$0xff]
  %v132 = vld [vmem:[%s0 + $0xa8] sm:$0xff]
  %v133 = vld [vmem:[%s0 + $0xb0] sm:$0xff]
  %v134 = vld [vmem:[%s0 + $0xb8] sm:$0xff]
  %v135 = vld [vmem:[%s0 + $0xc0] sm:$0xff]
  %v136 = vld [vmem:[%s0 + $0xc8] sm:$0xff]
  %v137 = vld [vmem:[%s0 + $0xd0] sm:$0xff]
  %v138 = vld [vmem:[%s0 + $0xd8] sm:$0xff]
  %v139 = vld [vmem:[%s0 + $0xe0] sm:$0xff]
  %v140 = vld [vmem:[%s0 + $0xe8] sm:$0xff]
  %v141 = vld [vmem:[%s0 + $0xf0] sm:$0xff]
  %v142 = vld [vmem:[%s0 + $0xf8] sm:$0xff]
  %v143 = vld [vmem:[%s0 + $0x100] sm:$0xff]
  %v144 = vld [vmem:[%s0 + $0x108] sm:$0xff]
  %v145 = vld [vmem:[%s0 + $0x110] sm:$0xff]
  %v146 = vld [vmem:[%s0 + $0x118] sm:$0xff]
  %v147 = vld [vmem:[%s0 + $0x120] sm:$0xff]
  %v148 = vld [vmem:[%s0 + $0x128] sm:$0xff]
  %v149 = vld [vmem:[%s0 + $0x130] sm:$0xff]
  %v150 = vld [vmem:[%s0 + $0x138] sm:$0xff]
  %v151 = vld [vmem:[%s0 + $0x140] sm:$0xff]
  %v152 = vld [vmem:[%s0 + $0x148] sm:$0xff]
  %v153 = vld [vmem:[%s0 + $0x150] sm:$0xff]
  %v154 = vld [vmem:[%s0 + $0x158] sm:$0xff]
  %v155 = vld [vmem:[%s0 + $0x160] sm:$0xff]
  %v156 = vld [vmem:[%s0 + $0x168] sm:$0xff]
  %v157 = vld [vmem:[%s0 + $0x170] sm:$0xff]
  %v158 = vld [vmem:[%s0 + $0x178] sm:$0xff]
  %v159 = vld [vmem:[%s0 + $0x180] sm:$0xff]
  %v160 = vld [vmem:[%s0 + $0x188] sm:$0xff]
  %v161 = vld [vmem:[%s0 + $0x190] sm:$0xff]
  %v162 = vld [vmem:[%s0 + $0x198] sm:$0xff]
  %v163 = vld [vmem:[%s0 + $0x1a0] sm:$0xff]
  %v164 = vld [vmem:[%s0 + $0x1a8] sm:$0xff]
  %v165 = vld [vmem:[%s0 + $0x1b0] sm:$0xff]
  %v166 = vld [vmem:[%s0 + $0x1b8] sm:$0xff]
  %v167 = vld [vmem:[%s0 + $0x1c0] sm:$0xff]
  %v168 = vld [vmem:[%s0 + $0x1c8] sm:$0xff]
  %v169 = vld [vmem:[%s0 + $0x1d0] sm:$0xff]
  %v170 = vld [vmem:[%s0 + $0x1d8] sm:$0xff]
  %v171 = vld [vmem:[%s0 + $0x1e0] sm:$0xff]
  %v172 = vld [vmem:[%s0 + $0x1e8] sm:$0xff]
  %v173 = vld [vmem:[%s0 + $0x1f0] sm:$0xff]
  %v174 = vld [vmem:[%s0 + $0x1f8] sm:$0xff]
  %s175 = scalar_lea.vmem [#allocation2], 24
  %176 = vst.msk [vmem:[%s175 + $0x1] sm:$0xff] %vm23, %v111
  %177 = vst.msk [vmem:[%s175 + $0x9] sm:$0xff] %vm23, %v112
  %178 = vst.msk [vmem:[%s175 + $0x19] sm:$0xff] %vm23, %v113
  %179 = vst.msk [vmem:[%s175 + $0x21] sm:$0xff] %vm23, %v114
  %180 = vst.msk [vmem:[%s175 + $0x31] sm:$0xff] %vm23, %v115
  %181 = vst.msk [vmem:[%s175 + $0x39] sm:$0xff] %vm23, %v116
  %182 = vst.msk [vmem:[%s175 + $0x49] sm:$0xff] %vm23, %v117
  %183 = vst.msk [vmem:[%s175 + $0x51] sm:$0xff] %vm23, %v118
  %184 = vst.msk [vmem:[%s175 + $0x61] sm:$0xff] %vm23, %v119
  %185 = vst.msk [vmem:[%s175 + $0x69] sm:$0xff] %vm23, %v120
  %186 = vst.msk [vmem:[%s175 + $0x79] sm:$0xff] %vm23, %v121
  %187 = vst.msk [vmem:[%s175 + $0x81] sm:$0xff] %vm23, %v122
  %188 = vst.msk [vmem:[%s175 + $0x91] sm:$0xff] %vm23, %v123
  %189 = vst.msk [vmem:[%s175 + $0x99] sm:$0xff] %vm23, %v124
  %190 = vst.msk [vmem:[%s175 + $0xa9] sm:$0xff] %vm23, %v125
  %191 = vst.msk [vmem:[%s175 + $0xb1] sm:$0xff] %vm23, %v126
  %192 = vst.msk [vmem:[%s175 + $0xc1] sm:$0xff] %vm23, %v127
  %193 = vst.msk [vmem:[%s175 + $0xc9] sm:$0xff] %vm23, %v128
  %194 = vst.msk [vmem:[%s175 + $0xd9] sm:$0xff] %vm23, %v129
  %195 = vst.msk [vmem:[%s175 + $0xe1] sm:$0xff] %vm23, %v130
  %196 = vst.msk [vmem:[%s175 + $0xf1] sm:$0xff] %vm23, %v131
  %197 = vst.msk [vmem:[%s175 + $0xf9] sm:$0xff] %vm23, %v132
  %198 = vst.msk [vmem:[%s175 + $0x109] sm:$0xff] %vm23, %v133
  %199 = vst.msk [vmem:[%s175 + $0x111] sm:$0xff] %vm23, %v134
  %200 = vst.msk [vmem:[%s175 + $0x121] sm:$0xff] %vm23, %v135
  %201 = vst.msk [vmem:[%s175 + $0x129] sm:$0xff] %vm23, %v136
  %202 = vst.msk [vmem:[%s175 + $0x139] sm:$0xff] %vm23, %v137
  %203 = vst.msk [vmem:[%s175 + $0x141] sm:$0xff] %vm23, %v138
  %204 = vst.msk [vmem:[%s175 + $0x151] sm:$0xff] %vm23, %v139
  %205 = vst.msk [vmem:[%s175 + $0x159] sm:$0xff] %vm23, %v140
  %206 = vst.msk [vmem:[%s175 + $0x169] sm:$0xff] %vm23, %v141
  %207 = vst.msk [vmem:[%s175 + $0x171] sm:$0xff] %vm23, %v142
  %208 = vst.msk [vmem:[%s175 + $0x1b1] sm:$0xff] %vm23, %v143
  %209 = vst.msk [vmem:[%s175 + $0x1b9] sm:$0xff] %vm23, %v144
  %210 = vst.msk [vmem:[%s175 + $0x1c9] sm:$0xff] %vm23, %v145
  %211 = vst.msk [vmem:[%s175 + $0x1d1] sm:$0xff] %vm23, %v146
  %212 = vst.msk [vmem:[%s175 + $0x1e1] sm:$0xff] %vm23, %v147
  %213 = vst.msk [vmem:[%s175 + $0x1e9] sm:$0xff] %vm23, %v148
  %214 = vst.msk [vmem:[%s175 + $0x1f9] sm:$0xff] %vm23, %v149
  %215 = vst.msk [vmem:[%s175 + $0x201] sm:$0xff] %vm23, %v150
  %216 = vst.msk [vmem:[%s175 + $0x211] sm:$0xff] %vm23, %v151
  %217 = vst.msk [vmem:[%s175 + $0x219] sm:$0xff] %vm23, %v152
  %218 = vst.msk [vmem:[%s175 + $0x229] sm:$0xff] %vm23, %v153
  %219 = vst.msk [vmem:[%s175 + $0x231] sm:$0xff] %vm23, %v154
  %220 = vst.msk [vmem:[%s175 + $0x241] sm:$0xff] %vm23, %v155
  %221 = vst.msk [vmem:[%s175 + $0x249] sm:$0xff] %vm23, %v156
  %222 = vst.msk [vmem:[%s175 + $0x259] sm:$0xff] %vm23, %v157
  %223 = vst.msk [vmem:[%s175 + $0x261] sm:$0xff] %vm23, %v158
  %224 = vst.msk [vmem:[%s175 + $0x271] sm:$0xff] %vm23, %v159
  %225 = vst.msk [vmem:[%s175 + $0x279] sm:$0xff] %vm23, %v160
  %226 = vst.msk [vmem:[%s175 + $0x289] sm:$0xff] %vm23, %v161
  %227 = vst.msk [vmem:[%s175 + $0x291] sm:$0xff] %vm23, %v162
  %228 = vst.msk [vmem:[%s175 + $0x2a1] sm:$0xff] %vm23, %v163
  %229 = vst.msk [vmem:[%s175 + $0x2a9] sm:$0xff] %vm23, %v164
  %230 = vst.msk [vmem:[%s175 + $0x2b9] sm:$0xff] %vm23, %v165
  %231 = vst.msk [vmem:[%s175 + $0x2c1] sm:$0xff] %vm23, %v166
  %232 = vst.msk [vmem:[%s175 + $0x2d1] sm:$0xff] %vm23, %v167
  %233 = vst.msk [vmem:[%s175 + $0x2d9] sm:$0xff] %vm23, %v168
  %234 = vst.msk [vmem:[%s175 + $0x2e9] sm:$0xff] %vm23, %v169
  %235 = vst.msk [vmem:[%s175 + $0x2f1] sm:$0xff] %vm23, %v170
  %236 = vst.msk [vmem:[%s175 + $0x301] sm:$0xff] %vm23, %v171
  %237 = vst.msk [vmem:[%s175 + $0x309] sm:$0xff] %vm23, %v172
  %238 = vst.msk [vmem:[%s175 + $0x319] sm:$0xff] %vm23, %v173
  %239 = vst.msk [vmem:[%s175 + $0x321] sm:$0xff] %vm23, %v174
  %v240 = vld [vmem:[#allocation2] sm:$0xff]
  %v241 = vld [vmem:[#allocation2 + $0x8] sm:$0xff]
  %v242 = vld [vmem:[#allocation2 + $0x18] sm:$0xff]
  %v243 = vld [vmem:[#allocation2 + $0x20] sm:$0xff]
  %v244 = vld [vmem:[#allocation2 + $0x30] sm:$0xff]
  %v245 = vld [vmem:[#allocation2 + $0x38] sm:$0xff]
  %v246 = vld [vmem:[#allocation2 + $0x48] sm:$0xff]
  %v247 = vld [vmem:[#allocation2 + $0x50] sm:$0xff]
  %v248 = vld [vmem:[#allocation2 + $0x60] sm:$0xff]
  %v249 = vld [vmem:[#allocation2 + $0x68] sm:$0xff]
  %v250 = vld [vmem:[#allocation2 + $0x78] sm:$0xff]
  %v251 = vld [vmem:[#allocation2 + $0x80] sm:$0xff]
  %v252 = vld [vmem:[#allocation2 + $0x90] sm:$0xff]
  %v253 = vld [vmem:[#allocation2 + $0x98] sm:$0xff]
  %v254 = vld [vmem:[#allocation2 + $0xa8] sm:$0xff]
  %v255 = vld [vmem:[#allocation2 + $0xb0] sm:$0xff]
  %v256 = vld [vmem:[#allocation2 + $0xc0] sm:$0xff]
  %v257 = vld [vmem:[#allocation2 + $0xc8] sm:$0xff]
  %v258 = vld [vmem:[#allocation2 + $0xd8] sm:$0xff]
  %v259 = vld [vmem:[#allocation2 + $0xe0] sm:$0xff]
  %v260 = vld [vmem:[#allocation2 + $0xf0] sm:$0xff]
  %v261 = vld [vmem:[#allocation2 + $0xf8] sm:$0xff]
  %v262 = vld [vmem:[#allocation2 + $0x108] sm:$0xff]
  %v263 = vld [vmem:[#allocation2 + $0x110] sm:$0xff]
  %v264 = vld [vmem:[#allocation2 + $0x120] sm:$0xff]
  %v265 = vld [vmem:[#allocation2 + $0x128] sm:$0xff]
  %v266 = vld [vmem:[#allocation2 + $0x138] sm:$0xff]
  %v267 = vld [vmem:[#allocation2 + $0x140] sm:$0xff]
  %v268 = vld [vmem:[#allocation2 + $0x150] sm:$0xff]
  %v269 = vld [vmem:[#allocation2 + $0x158] sm:$0xff]
  %v270 = vld [vmem:[#allocation2 + $0x168] sm:$0xff]
  %v271 = vld [vmem:[#allocation2 + $0x170] sm:$0xff]
  %v272 = vld [vmem:[#allocation2 + $0x1b0] sm:$0xff]
  %v273 = vld [vmem:[#allocation2 + $0x1b8] sm:$0xff]
  %v274 = vld [vmem:[#allocation2 + $0x1c8] sm:$0xff]
  %v275 = vld [vmem:[#allocation2 + $0x1d0] sm:$0xff]
  %v276 = vld [vmem:[#allocation2 + $0x1e0] sm:$0xff]
  %v277 = vld [vmem:[#allocation2 + $0x1e8] sm:$0xff]
  %v278 = vld [vmem:[#allocation2 + $0x1f8] sm:$0xff]
  %v279 = vld [vmem:[#allocation2 + $0x200] sm:$0xff]
  %v280 = vld [vmem:[#allocation2 + $0x210] sm:$0xff]
  %v281 = vld [vmem:[#allocation2 + $0x218] sm:$0xff]
  %v282 = vld [vmem:[#allocation2 + $0x228] sm:$0xff]
  %v283 = vld [vmem:[#allocation2 + $0x230] sm:$0xff]
  %v284 = vld [vmem:[#allocation2 + $0x240] sm:$0xff]
  %v285 = vld [vmem:[#allocation2 + $0x248] sm:$0xff]
  %v286 = vld [vmem:[#allocation2 + $0x258] sm:$0xff]
  %v287 = vld [vmem:[#allocation2 + $0x260] sm:$0xff]
  %v288 = vld [vmem:[#allocation2 + $0x270] sm:$0xff]
  %v289 = vld [vmem:[#allocation2 + $0x278] sm:$0xff]
  %v290 = vld [vmem:[#allocation2 + $0x288] sm:$0xff]
  %v291 = vld [vmem:[#allocation2 + $0x290] sm:$0xff]
  %v292 = vld [vmem:[#allocation2 + $0x2a0] sm:$0xff]
  %v293 = vld [vmem:[#allocation2 + $0x2a8] sm:$0xff]
  %v294 = vld [vmem:[#allocation2 + $0x2b8] sm:$0xff]
  %v295 = vld [vmem:[#allocation2 + $0x2c0] sm:$0xff]
  %v296 = vld [vmem:[#allocation2 + $0x2d0] sm:$0xff]
  %v297 = vld [vmem:[#allocation2 + $0x2d8] sm:$0xff]
  %v298 = vld [vmem:[#allocation2 + $0x2e8] sm:$0xff]
  %v299 = vld [vmem:[#allocation2 + $0x2f0] sm:$0xff]
  %v300 = vld [vmem:[#allocation2 + $0x300] sm:$0xff]
  %v301 = vld [vmem:[#allocation2 + $0x308] sm:$0xff]
  %v302 = vld [vmem:[#allocation2 + $0x318] sm:$0xff]
  %v303 = vld [vmem:[#allocation2 + $0x320] sm:$0xff]
  %v304 = vld [vmem:[%s1] sm:$0x1]
  %v305 = vlaneseq
  %v306 = vshrl.u32 %v305, 7
  %v307 = vsub.s32 0, %v306
  %v308 = vrot.slane %v304, %v307
  %v309 = vmul.f32 %v240, %v308
  %v310 = vmul.f32 %v241, %v308
  %v311 = vmul.f32 %v242, %v308
  %v312 = vmul.f32 %v243, %v308
  %v313 = vmul.f32 %v244, %v308
  %v314 = vmul.f32 %v245, %v308
  %v315 = vmul.f32 %v246, %v308
  %v316 = vmul.f32 %v247, %v308
  %v317 = vmul.f32 %v248, %v308
  %v318 = vmul.f32 %v249, %v308
  %v319 = vmul.f32 %v250, %v308
  %v320 = vmul.f32 %v251, %v308
  %v321 = vmul.f32 %v252, %v308
  %v322 = vmul.f32 %v253, %v308
  %v323 = vmul.f32 %v254, %v308
  %v324 = vmul.f32 %v255, %v308
  %v325 = vmul.f32 %v256, %v308
  %v326 = vmul.f32 %v257, %v308
  %v327 = vmul.f32 %v258, %v308
  %v328 = vmul.f32 %v259, %v308
  %v329 = vmul.f32 %v260, %v308
  %v330 = vmul.f32 %v261, %v308
  %v331 = vmul.f32 %v262, %v308
  %v332 = vmul.f32 %v263, %v308
  %v333 = vmul.f32 %v264, %v308
  %v334 = vmul.f32 %v265, %v308
  %v335 = vmul.f32 %v266, %v308
  %v336 = vmul.f32 %v267, %v308
  %v337 = vmul.f32 %v268, %v308
  %v338 = vmul.f32 %v269, %v308
  %v339 = vmul.f32 %v270, %v308
  %v340 = vmul.f32 %v271, %v308
  %v341 = vmul.f32 %v272, %v308
  %v342 = vmul.f32 %v273, %v308
  %v343 = vmul.f32 %v274, %v308
  %v344 = vmul.f32 %v275, %v308
  %v345 = vmul.f32 %v276, %v308
  %v346 = vmul.f32 %v277, %v308
  %v347 = vmul.f32 %v278, %v308
  %v348 = vmul.f32 %v279, %v308
  %v349 = vmul.f32 %v280, %v308
  %v350 = vmul.f32 %v281, %v308
  %v351 = vmul.f32 %v282, %v308
  %v352 = vmul.f32 %v283, %v308
  %v353 = vmul.f32 %v284, %v308
  %v354 = vmul.f32 %v285, %v308
  %v355 = vmul.f32 %v286, %v308
  %v356 = vmul.f32 %v287, %v308
  %v357 = vmul.f32 %v288, %v308
  %v358 = vmul.f32 %v289, %v308
  %v359 = vmul.f32 %v290, %v308
  %v360 = vmul.f32 %v291, %v308
  %v361 = vmul.f32 %v292, %v308
  %v362 = vmul.f32 %v293, %v308
  %v363 = vmul.f32 %v294, %v308
  %v364 = vmul.f32 %v295, %v308
  %v365 = vmul.f32 %v296, %v308
  %v366 = vmul.f32 %v297, %v308
  %v367 = vmul.f32 %v298, %v308
  %v368 = vmul.f32 %v299, %v308
  %v369 = vmul.f32 %v300, %v308
  %v370 = vmul.f32 %v301, %v308
  %v371 = vmul.f32 %v302, %v308
  %v372 = vmul.f32 %v303, %v308
  %v373 = vadd.f32 %v309, 0.0
  %v374 = vadd.f32 %v310, 0.0
  %v375 = vadd.f32 %v311, 0.0
  %v376 = vadd.f32 %v312, 0.0
  %v377 = vadd.f32 %v313, 0.0
  %v378 = vadd.f32 %v314, 0.0
  %v379 = vadd.f32 %v315, 0.0
  %v380 = vadd.f32 %v316, 0.0
  %v381 = vadd.f32 %v317, 0.0
  %v382 = vadd.f32 %v318, 0.0
  %v383 = vadd.f32 %v319, 0.0
  %v384 = vadd.f32 %v320, 0.0
  %v385 = vadd.f32 %v321, 0.0
  %v386 = vadd.f32 %v322, 0.0
  %v387 = vadd.f32 %v323, 0.0
  %v388 = vadd.f32 %v324, 0.0
  %v389 = vadd.f32 %v325, 0.0
  %v390 = vadd.f32 %v326, 0.0
  %v391 = vadd.f32 %v327, 0.0
  %v392 = vadd.f32 %v328, 0.0
  %v393 = vadd.f32 %v329, 0.0
  %v394 = vadd.f32 %v330, 0.0
  %v395 = vadd.f32 %v331, 0.0
  %v396 = vadd.f32 %v332, 0.0
  %v397 = vadd.f32 %v333, 0.0
  %v398 = vadd.f32 %v334, 0.0
  %v399 = vadd.f32 %v335, 0.0
  %v400 = vadd.f32 %v336, 0.0
  %v401 = vadd.f32 %v337, 0.0
  %v402 = vadd.f32 %v338, 0.0
  %v403 = vadd.f32 %v339, 0.0
  %v404 = vadd.f32 %v340, 0.0
  %v405 = vadd.f32 %v341, 0.0
  %v406 = vadd.f32 %v342, 0.0
  %v407 = vadd.f32 %v343, 0.0
  %v408 = vadd.f32 %v344, 0.0
  %v409 = vadd.f32 %v345, 0.0
  %v410 = vadd.f32 %v346, 0.0
  %v411 = vadd.f32 %v347, 0.0
  %v412 = vadd.f32 %v348, 0.0
  %v413 = vadd.f32 %v349, 0.0
  %v414 = vadd.f32 %v350, 0.0
  %v415 = vadd.f32 %v351, 0.0
  %v416 = vadd.f32 %v352, 0.0
  %v417 = vadd.f32 %v353, 0.0
  %v418 = vadd.f32 %v354, 0.0
  %v419 = vadd.f32 %v355, 0.0
  %v420 = vadd.f32 %v356, 0.0
  %v421 = vadd.f32 %v357, 0.0
  %v422 = vadd.f32 %v358, 0.0
  %v423 = vadd.f32 %v359, 0.0
  %v424 = vadd.f32 %v360, 0.0
  %v425 = vadd.f32 %v361, 0.0
  %v426 = vadd.f32 %v362, 0.0
  %v427 = vadd.f32 %v363, 0.0
  %v428 = vadd.f32 %v364, 0.0
  %v429 = vadd.f32 %v365, 0.0
  %v430 = vadd.f32 %v366, 0.0
  %v431 = vadd.f32 %v367, 0.0
  %v432 = vadd.f32 %v368, 0.0
  %v433 = vadd.f32 %v369, 0.0
  %v434 = vadd.f32 %v370, 0.0
  %v435 = vadd.f32 %v371, 0.0
  %v436 = vadd.f32 %v372, 0.0
  %v437 = vld [vmem:[#allocation2 + $0x1] sm:$0xff]
  %v438 = vld [vmem:[#allocation2 + $0x9] sm:$0xff]
  %v439 = vld [vmem:[#allocation2 + $0x19] sm:$0xff]
  %v440 = vld [vmem:[#allocation2 + $0x21] sm:$0xff]
  %v441 = vld [vmem:[#allocation2 + $0x31] sm:$0xff]
  %v442 = vld [vmem:[#allocation2 + $0x39] sm:$0xff]
  %v443 = vld [vmem:[#allocation2 + $0x49] sm:$0xff]
  %v444 = vld [vmem:[#allocation2 + $0x51] sm:$0xff]
  %v445 = vld [vmem:[#allocation2 + $0x61] sm:$0xff]
  %v446 = vld [vmem:[#allocation2 + $0x69] sm:$0xff]
  %v447 = vld [vmem:[#allocation2 + $0x79] sm:$0xff]
  %v448 = vld [vmem:[#allocation2 + $0x81] sm:$0xff]
  %v449 = vld [vmem:[#allocation2 + $0x91] sm:$0xff]
  %v450 = vld [vmem:[#allocation2 + $0x99] sm:$0xff]
  %v451 = vld [vmem:[#allocation2 + $0xa9] sm:$0xff]
  %v452 = vld [vmem:[#allocation2 + $0xb1] sm:$0xff]
  %v453 = vld [vmem:[#allocation2 + $0xc1] sm:$0xff]
  %v454 = vld [vmem:[#allocation2 + $0xc9] sm:$0xff]
  %v455 = vld [vmem:[#allocation2 + $0xd9] sm:$0xff]
  %v456 = vld [vmem:[#allocation2 + $0xe1] sm:$0xff]
  %v457 = vld [vmem:[#allocation2 + $0xf1] sm:$0xff]
  %v458 = vld [vmem:[#allocation2 + $0xf9] sm:$0xff]
  %v459 = vld [vmem:[#allocation2 + $0x109] sm:$0xff]
  %v460 = vld [vmem:[#allocation2 + $0x111] sm:$0xff]
  %v461 = vld [vmem:[#allocation2 + $0x121] sm:$0xff]
  %v462 = vld [vmem:[#allocation2 + $0x129] sm:$0xff]
  %v463 = vld [vmem:[#allocation2 + $0x139] sm:$0xff]
  %v464 = vld [vmem:[#allocation2 + $0x141] sm:$0xff]
  %v465 = vld [vmem:[#allocation2 + $0x151] sm:$0xff]
  %v466 = vld [vmem:[#allocation2 + $0x159] sm:$0xff]
  %v467 = vld [vmem:[#allocation2 + $0x169] sm:$0xff]
  %v468 = vld [vmem:[#allocation2 + $0x171] sm:$0xff]
  %v469 = vld [vmem:[#allocation2 + $0x1b1] sm:$0xff]
  %v470 = vld [vmem:[#allocation2 + $0x1b9] sm:$0xff]
  %v471 = vld [vmem:[#allocation2 + $0x1c9] sm:$0xff]
  %v472 = vld [vmem:[#allocation2 + $0x1d1] sm:$0xff]
  %v473 = vld [vmem:[#allocation2 + $0x1e1] sm:$0xff]
  %v474 = vld [vmem:[#allocation2 + $0x1e9] sm:$0xff]
  %v475 = vld [vmem:[#allocation2 + $0x1f9] sm:$0xff]
  %v476 = vld [vmem:[#allocation2 + $0x201] sm:$0xff]
  %v477 = vld [vmem:[#allocation2 + $0x211] sm:$0xff]
  %v478 = vld [vmem:[#allocation2 + $0x219] sm:$0xff]
  %v479 = vld [vmem:[#allocation2 + $0x229] sm:$0xff]
  %v480 = vld [vmem:[#allocation2 + $0x231] sm:$0xff]
  %v481 = vld [vmem:[#allocation2 + $0x241] sm:$0xff]
  %v482 = vld [vmem:[#allocation2 + $0x249] sm:$0xff]
  %v483 = vld [vmem:[#allocation2 + $0x259] sm:$0xff]
  %v484 = vld [vmem:[#allocation2 + $0x261] sm:$0xff]
  %v485 = vld [vmem:[#allocation2 + $0x271] sm:$0xff]
  %v486 = vld [vmem:[#allocation2 + $0x279] sm:$0xff]
  %v487 = vld [vmem:[#allocation2 + $0x289] sm:$0xff]
  %v488 = vld [vmem:[#allocation2 + $0x291] sm:$0xff]
  %v489 = vld [vmem:[#allocation2 + $0x2a1] sm:$0xff]
  %v490 = vld [vmem:[#allocation2 + $0x2a9] sm:$0xff]
  %v491 = vld [vmem:[#allocation2 + $0x2b9] sm:$0xff]
  %v492 = vld [vmem:[#allocation2 + $0x2c1] sm:$0xff]
  %v493 = vld [vmem:[#allocation2 + $0x2d1] sm:$0xff]
  %v494 = vld [vmem:[#allocation2 + $0x2d9] sm:$0xff]
  %v495 = vld [vmem:[#allocation2 + $0x2e9] sm:$0xff]
  %v496 = vld [vmem:[#allocation2 + $0x2f1] sm:$0xff]
  %v497 = vld [vmem:[#allocation2 + $0x301] sm:$0xff]
  %v498 = vld [vmem:[#allocation2 + $0x309] sm:$0xff]
  %v499 = vld [vmem:[#allocation2 + $0x319] sm:$0xff]
  %v500 = vld [vmem:[#allocation2 + $0x321] sm:$0xff]
  %v501 = vld [vmem:[%s1 + $0x1] sm:$0x1]
  %v502 = vlaneseq
  %v503 = vshrl.u32 %v502, 7
  %v504 = vsub.s32 0, %v503
  %v505 = vrot.slane %v501, %v504
  %v506 = vmul.f32 %v437, %v505
  %v507 = vmul.f32 %v438, %v505
  %v508 = vmul.f32 %v439, %v505
  %v509 = vmul.f32 %v440, %v505
  %v510 = vmul.f32 %v441, %v505
  %v511 = vmul.f32 %v442, %v505
  %v512 = vmul.f32 %v443, %v505
  %v513 = vmul.f32 %v444, %v505
  %v514 = vmul.f32 %v445, %v505
  %v515 = vmul.f32 %v446, %v505
  %v516 = vmul.f32 %v447, %v505
  %v517 = vmul.f32 %v448, %v505
  %v518 = vmul.f32 %v449, %v505
  %v519 = vmul.f32 %v450, %v505
  %v520 = vmul.f32 %v451, %v505
  %v521 = vmul.f32 %v452, %v505
  %v522 = vmul.f32 %v453, %v505
  %v523 = vmul.f32 %v454, %v505
  %v524 = vmul.f32 %v455, %v505
  %v525 = vmul.f32 %v456, %v505
  %v526 = vmul.f32 %v457, %v505
  %v527 = vmul.f32 %v458, %v505
  %v528 = vmul.f32 %v459, %v505
  %v529 = vmul.f32 %v460, %v505
  %v530 = vmul.f32 %v461, %v505
  %v531 = vmul.f32 %v462, %v505
  %v532 = vmul.f32 %v463, %v505
  %v533 = vmul.f32 %v464, %v505
  %v534 = vmul.f32 %v465, %v505
  %v535 = vmul.f32 %v466, %v505
  %v536 = vmul.f32 %v467, %v505
  %v537 = vmul.f32 %v468, %v505
  %v538 = vmul.f32 %v469, %v505
  %v539 = vmul.f32 %v470, %v505
  %v540 = vmul.f32 %v471, %v505
  %v541 = vmul.f32 %v472, %v505
  %v542 = vmul.f32 %v473, %v505
  %v543 = vmul.f32 %v474, %v505
  %v544 = vmul.f32 %v475, %v505
  %v545 = vmul.f32 %v476, %v505
  %v546 = vmul.f32 %v477, %v505
  %v547 = vmul.f32 %v478, %v505
  %v548 = vmul.f32 %v479, %v505
  %v549 = vmul.f32 %v480, %v505
  %v550 = vmul.f32 %v481, %v505
  %v551 = vmul.f32 %v482, %v505
  %v552 = vmul.f32 %v483, %v505
  %v553 = vmul.f32 %v484, %v505
  %v554 = vmul.f32 %v485, %v505
  %v555 = vmul.f32 %v486, %v505
  %v556 = vmul.f32 %v487, %v505
  %v557 = vmul.f32 %v488, %v505
  %v558 = vmul.f32 %v489, %v505
  %v559 = vmul.f32 %v490, %v505
  %v560 = vmul.f32 %v491, %v505
  %v561 = vmul.f32 %v492, %v505
  %v562 = vmul.f32 %v493, %v505
  %v563 = vmul.f32 %v494, %v505
  %v564 = vmul.f32 %v495, %v505
  %v565 = vmul.f32 %v496, %v505
  %v566 = vmul.f32 %v497, %v505
  %v567 = vmul.f32 %v498, %v505
  %v568 = vmul.f32 %v499, %v505
  %v569 = vmul.f32 %v500, %v505
  %v570 = vadd.f32 %v373, %v506
  %v571 = vadd.f32 %v374, %v507
  %v572 = vadd.f32 %v375, %v508
  %v573 = vadd.f32 %v376, %v509
  %v574 = vadd.f32 %v377, %v510
  %v575 = vadd.f32 %v378, %v511
  %v576 = vadd.f32 %v379, %v512
  %v577 = vadd.f32 %v380, %v513
  %v578 = vadd.f32 %v381, %v514
  %v579 = vadd.f32 %v382, %v515
  %v580 = vadd.f32 %v383, %v516
  %v581 = vadd.f32 %v384, %v517
  %v582 = vadd.f32 %v385, %v518
  %v583 = vadd.f32 %v386, %v519
  %v584 = vadd.f32 %v387, %v520
  %v585 = vadd.f32 %v388, %v521
  %v586 = vadd.f32 %v389, %v522
  %v587 = vadd.f32 %v390, %v523
  %v588 = vadd.f32 %v391, %v524
  %v589 = vadd.f32 %v392, %v525
  %v590 = vadd.f32 %v393, %v526
  %v591 = vadd.f32 %v394, %v527
  %v592 = vadd.f32 %v395, %v528
  %v593 = vadd.f32 %v396, %v529
  %v594 = vadd.f32 %v397, %v530
  %v595 = vadd.f32 %v398, %v531
  %v596 = vadd.f32 %v399, %v532
  %v597 = vadd.f32 %v400, %v533
  %v598 = vadd.f32 %v401, %v534
  %v599 = vadd.f32 %v402, %v535
  %v600 = vadd.f32 %v403, %v536
  %v601 = vadd.f32 %v404, %v537
  %v602 = vadd.f32 %v405, %v538
  %v603 = vadd.f32 %v406, %v539
  %v604 = vadd.f32 %v407, %v540
  %v605 = vadd.f32 %v408, %v541
  %v606 = vadd.f32 %v409, %v542
  %v607 = vadd.f32 %v410, %v543
  %v608 = vadd.f32 %v411, %v544
  %v609 = vadd.f32 %v412, %v545
  %v610 = vadd.f32 %v413, %v546
  %v611 = vadd.f32 %v414, %v547
  %v612 = vadd.f32 %v415, %v548
  %v613 = vadd.f32 %v416, %v549
  %v614 = vadd.f32 %v417, %v550
  %v615 = vadd.f32 %v418, %v551
  %v616 = vadd.f32 %v419, %v552
  %v617 = vadd.f32 %v420, %v553
  %v618 = vadd.f32 %v421, %v554
  %v619 = vadd.f32 %v422, %v555
  %v620 = vadd.f32 %v423, %v556
  %v621 = vadd.f32 %v424, %v557
  %v622 = vadd.f32 %v425, %v558
  %v623 = vadd.f32 %v426, %v559
  %v624 = vadd.f32 %v427, %v560
  %v625 = vadd.f32 %v428, %v561
  %v626 = vadd.f32 %v429, %v562
  %v627 = vadd.f32 %v430, %v563
  %v628 = vadd.f32 %v431, %v564
  %v629 = vadd.f32 %v432, %v565
  %v630 = vadd.f32 %v433, %v566
  %v631 = vadd.f32 %v434, %v567
  %v632 = vadd.f32 %v435, %v568
  %v633 = vadd.f32 %v436, %v569
  %v634 = vld [vmem:[#allocation2 + $0x2] sm:$0xff]
  %v635 = vld [vmem:[#allocation2 + $0xa] sm:$0xff]
  %v636 = vld [vmem:[#allocation2 + $0x1a] sm:$0xff]
  %v637 = vld [vmem:[#allocation2 + $0x22] sm:$0xff]
  %v638 = vld [vmem:[#allocation2 + $0x32] sm:$0xff]
  %v639 = vld [vmem:[#allocation2 + $0x3a] sm:$0xff]
  %v640 = vld [vmem:[#allocation2 + $0x4a] sm:$0xff]
  %v641 = vld [vmem:[#allocation2 + $0x52] sm:$0xff]
  %v642 = vld [vmem:[#allocation2 + $0x62] sm:$0xff]
  %v643 = vld [vmem:[#allocation2 + $0x6a] sm:$0xff]
  %v644 = vld [vmem:[#allocation2 + $0x7a] sm:$0xff]
  %v645 = vld [vmem:[#allocation2 + $0x82] sm:$0xff]
  %v646 = vld [vmem:[#allocation2 + $0x92] sm:$0xff]
  %v647 = vld [vmem:[#allocation2 + $0x9a] sm:$0xff]
  %v648 = vld [vmem:[#allocation2 + $0xaa] sm:$0xff]
  %v649 = vld [vmem:[#allocation2 + $0xb2] sm:$0xff]
  %v650 = vld [vmem:[#allocation2 + $0xc2] sm:$0xff]
  %v651 = vld [vmem:[#allocation2 + $0xca] sm:$0xff]
  %v652 = vld [vmem:[#allocation2 + $0xda] sm:$0xff]
  %v653 = vld [vmem:[#allocation2 + $0xe2] sm:$0xff]
  %v654 = vld [vmem:[#allocation2 + $0xf2] sm:$0xff]
  %v655 = vld [vmem:[#allocation2 + $0xfa] sm:$0xff]
  %v656 = vld [vmem:[#allocation2 + $0x10a] sm:$0xff]
  %v657 = vld [vmem:[#allocation2 + $0x112] sm:$0xff]
  %v658 = vld [vmem:[#allocation2 + $0x122] sm:$0xff]
  %v659 = vld [vmem:[#allocation2 + $0x12a] sm:$0xff]
  %v660 = vld [vmem:[#allocation2 + $0x13a] sm:$0xff]
  %v661 = vld [vmem:[#allocation2 + $0x142] sm:$0xff]
  %v662 = vld [vmem:[#allocation2 + $0x152] sm:$0xff]
  %v663 = vld [vmem:[#allocation2 + $0x15a] sm:$0xff]
  %v664 = vld [vmem:[#allocation2 + $0x16a] sm:$0xff]
  %v665 = vld [vmem:[#allocation2 + $0x172] sm:$0xff]
  %v666 = vld [vmem:[#allocation2 + $0x1b2] sm:$0xff]
  %v667 = vld [vmem:[#allocation2 + $0x1ba] sm:$0xff]
  %v668 = vld [vmem:[#allocation2 + $0x1ca] sm:$0xff]
  %v669 = vld [vmem:[#allocation2 + $0x1d2] sm:$0xff]
  %v670 = vld [vmem:[#allocation2 + $0x1e2] sm:$0xff]
  %v671 = vld [vmem:[#allocation2 + $0x1ea] sm:$0xff]
  %v672 = vld [vmem:[#allocation2 + $0x1fa] sm:$0xff]
  %v673 = vld [vmem:[#allocation2 + $0x202] sm:$0xff]
  %v674 = vld [vmem:[#allocation2 + $0x212] sm:$0xff]
  %v675 = vld [vmem:[#allocation2 + $0x21a] sm:$0xff]
  %v676 = vld [vmem:[#allocation2 + $0x22a] sm:$0xff]
  %v677 = vld [vmem:[#allocation2 + $0x232] sm:$0xff]
  %v678 = vld [vmem:[#allocation2 + $0x242] sm:$0xff]
  %v679 = vld [vmem:[#allocation2 + $0x24a] sm:$0xff]
  %v680 = vld [vmem:[#allocation2 + $0x25a] sm:$0xff]
  %v681 = vld [vmem:[#allocation2 + $0x262] sm:$0xff]
  %v682 = vld [vmem:[#allocation2 + $0x272] sm:$0xff]
  %v683 = vld [vmem:[#allocation2 + $0x27a] sm:$0xff]
  %v684 = vld [vmem:[#allocation2 + $0x28a] sm:$0xff]
  %v685 = vld [vmem:[#allocation2 + $0x292] sm:$0xff]
  %v686 = vld [vmem:[#allocation2 + $0x2a2] sm:$0xff]
  %v687 = vld [vmem:[#allocation2 + $0x2aa] sm:$0xff]
  %v688 = vld [vmem:[#allocation2 + $0x2ba] sm:$0xff]
  %v689 = vld [vmem:[#allocation2 + $0x2c2] sm:$0xff]
  %v690 = vld [vmem:[#allocation2 + $0x2d2] sm:$0xff]
  %v691 = vld [vmem:[#allocation2 + $0x2da] sm:$0xff]
  %v692 = vld [vmem:[#allocation2 + $0x2ea] sm:$0xff]
  %v693 = vld [vmem:[#allocation2 + $0x2f2] sm:$0xff]
  %v694 = vld [vmem:[#allocation2 + $0x302] sm:$0xff]
  %v695 = vld [vmem:[#allocation2 + $0x30a] sm:$0xff]
  %v696 = vld [vmem:[#allocation2 + $0x31a] sm:$0xff]
  %v697 = vld [vmem:[#allocation2 + $0x322] sm:$0xff]
  %v698 = vld [vmem:[%s1 + $0x2] sm:$0x1]
  %v699 = vlaneseq
  %v700 = vshrl.u32 %v699, 7
  %v701 = vsub.s32 0, %v700
  %v702 = vrot.slane %v698, %v701
  %v703 = vmul.f32 %v634, %v702
  %v704 = vmul.f32 %v635, %v702
  %v705 = vmul.f32 %v636, %v702
  %v706 = vmul.f32 %v637, %v702
  %v707 = vmul.f32 %v638, %v702
  %v708 = vmul.f32 %v639, %v702
  %v709 = vmul.f32 %v640, %v702
  %v710 = vmul.f32 %v641, %v702
  %v711 = vmul.f32 %v642, %v702
  %v712 = vmul.f32 %v643, %v702
  %v713 = vmul.f32 %v644, %v702
  %v714 = vmul.f32 %v645, %v702
  %v715 = vmul.f32 %v646, %v702
  %v716 = vmul.f32 %v647, %v702
  %v717 = vmul.f32 %v648, %v702
  %v718 = vmul.f32 %v649, %v702
  %v719 = vmul.f32 %v650, %v702
  %v720 = vmul.f32 %v651, %v702
  %v721 = vmul.f32 %v652, %v702
  %v722 = vmul.f32 %v653, %v702
  %v723 = vmul.f32 %v654, %v702
  %v724 = vmul.f32 %v655, %v702
  %v725 = vmul.f32 %v656, %v702
  %v726 = vmul.f32 %v657, %v702
  %v727 = vmul.f32 %v658, %v702
  %v728 = vmul.f32 %v659, %v702
  %v729 = vmul.f32 %v660, %v702
  %v730 = vmul.f32 %v661, %v702
  %v731 = vmul.f32 %v662, %v702
  %v732 = vmul.f32 %v663, %v702
  %v733 = vmul.f32 %v664, %v702
  %v734 = vmul.f32 %v665, %v702
  %v735 = vmul.f32 %v666, %v702
  %v736 = vmul.f32 %v667, %v702
  %v737 = vmul.f32 %v668, %v702
  %v738 = vmul.f32 %v669, %v702
  %v739 = vmul.f32 %v670, %v702
  %v740 = vmul.f32 %v671, %v702
  %v741 = vmul.f32 %v672, %v702
  %v742 = vmul.f32 %v673, %v702
  %v743 = vmul.f32 %v674, %v702
  %v744 = vmul.f32 %v675, %v702
  %v745 = vmul.f32 %v676, %v702
  %v746 = vmul.f32 %v677, %v702
  %v747 = vmul.f32 %v678, %v702
  %v748 = vmul.f32 %v679, %v702
  %v749 = vmul.f32 %v680, %v702
  %v750 = vmul.f32 %v681, %v702
  %v751 = vmul.f32 %v682, %v702
  %v752 = vmul.f32 %v683, %v702
  %v753 = vmul.f32 %v684, %v702
  %v754 = vmul.f32 %v685, %v702
  %v755 = vmul.f32 %v686, %v702
  %v756 = vmul.f32 %v687, %v702
  %v757 = vmul.f32 %v688, %v702
  %v758 = vmul.f32 %v689, %v702
  %v759 = vmul.f32 %v690, %v702
  %v760 = vmul.f32 %v691, %v702
  %v761 = vmul.f32 %v692, %v702
  %v762 = vmul.f32 %v693, %v702
  %v763 = vmul.f32 %v694, %v702
  %v764 = vmul.f32 %v695, %v702
  %v765 = vmul.f32 %v696, %v702
  %v766 = vmul.f32 %v697, %v702
  %v767 = vadd.f32 %v570, %v703
  %v768 = vadd.f32 %v571, %v704
  %v769 = vadd.f32 %v572, %v705
  %v770 = vadd.f32 %v573, %v706
  %v771 = vadd.f32 %v574, %v707
  %v772 = vadd.f32 %v575, %v708
  %v773 = vadd.f32 %v576, %v709
  %v774 = vadd.f32 %v577, %v710
  %v775 = vadd.f32 %v578, %v711
  %v776 = vadd.f32 %v579, %v712
  %v777 = vadd.f32 %v580, %v713
  %v778 = vadd.f32 %v581, %v714
  %v779 = vadd.f32 %v582, %v715
  %v780 = vadd.f32 %v583, %v716
  %v781 = vadd.f32 %v584, %v717
  %v782 = vadd.f32 %v585, %v718
  %v783 = vadd.f32 %v586, %v719
  %v784 = vadd.f32 %v587, %v720
  %v785 = vadd.f32 %v588, %v721
  %v786 = vadd.f32 %v589, %v722
  %v787 = vadd.f32 %v590, %v723
  %v788 = vadd.f32 %v591, %v724
  %v789 = vadd.f32 %v592, %v725
  %v790 = vadd.f32 %v593, %v726
  %v791 = vadd.f32 %v594, %v727
  %v792 = vadd.f32 %v595, %v728
  %v793 = vadd.f32 %v596, %v729
  %v794 = vadd.f32 %v597, %v730
  %v795 = vadd.f32 %v598, %v731
  %v796 = vadd.f32 %v599, %v732
  %v797 = vadd.f32 %v600, %v733
  %v798 = vadd.f32 %v601, %v734
  %v799 = vadd.f32 %v602, %v735
  %v800 = vadd.f32 %v603, %v736
  %v801 = vadd.f32 %v604, %v737
  %v802 = vadd.f32 %v605, %v738
  %v803 = vadd.f32 %v606, %v739
  %v804 = vadd.f32 %v607, %v740
  %v805 = vadd.f32 %v608, %v741
  %v806 = vadd.f32 %v609, %v742
  %v807 = vadd.f32 %v610, %v743
  %v808 = vadd.f32 %v611, %v744
  %v809 = vadd.f32 %v612, %v745
  %v810 = vadd.f32 %v613, %v746
  %v811 = vadd.f32 %v614, %v747
  %v812 = vadd.f32 %v615, %v748
  %v813 = vadd.f32 %v616, %v749
  %v814 = vadd.f32 %v617, %v750
  %v815 = vadd.f32 %v618, %v751
  %v816 = vadd.f32 %v619, %v752
  %v817 = vadd.f32 %v620, %v753
  %v818 = vadd.f32 %v621, %v754
  %v819 = vadd.f32 %v622, %v755
  %v820 = vadd.f32 %v623, %v756
  %v821 = vadd.f32 %v624, %v757
  %v822 = vadd.f32 %v625, %v758
  %v823 = vadd.f32 %v626, %v759
  %v824 = vadd.f32 %v627, %v760
  %v825 = vadd.f32 %v628, %v761
  %v826 = vadd.f32 %v629, %v762
  %v827 = vadd.f32 %v630, %v763
  %v828 = vadd.f32 %v631, %v764
  %v829 = vadd.f32 %v632, %v765
  %v830 = vadd.f32 %v633, %v766
  %v831 = vld [vmem:[%s175] sm:$0xff]
  %v832 = vld [vmem:[%s175 + $0x8] sm:$0xff]
  %v833 = vld [vmem:[%s175 + $0x18] sm:$0xff]
  %v834 = vld [vmem:[%s175 + $0x20] sm:$0xff]
  %v835 = vld [vmem:[%s175 + $0x30] sm:$0xff]
  %v836 = vld [vmem:[%s175 + $0x38] sm:$0xff]
  %v837 = vld [vmem:[%s175 + $0x48] sm:$0xff]
  %v838 = vld [vmem:[%s175 + $0x50] sm:$0xff]
  %v839 = vld [vmem:[%s175 + $0x60] sm:$0xff]
  %v840 = vld [vmem:[%s175 + $0x68] sm:$0xff]
  %v841 = vld [vmem:[%s175 + $0x78] sm:$0xff]
  %v842 = vld [vmem:[%s175 + $0x80] sm:$0xff]
  %v843 = vld [vmem:[%s175 + $0x90] sm:$0xff]
  %v844 = vld [vmem:[%s175 + $0x98] sm:$0xff]
  %v845 = vld [vmem:[%s175 + $0xa8] sm:$0xff]
  %v846 = vld [vmem:[%s175 + $0xb0] sm:$0xff]
  %v847 = vld [vmem:[%s175 + $0xc0] sm:$0xff]
  %v848 = vld [vmem:[%s175 + $0xc8] sm:$0xff]
  %v849 = vld [vmem:[%s175 + $0xd8] sm:$0xff]
  %v850 = vld [vmem:[%s175 + $0xe0] sm:$0xff]
  %v851 = vld [vmem:[%s175 + $0xf0] sm:$0xff]
  %v852 = vld [vmem:[%s175 + $0xf8] sm:$0xff]
  %v853 = vld [vmem:[%s175 + $0x108] sm:$0xff]
  %v854 = vld [vmem:[%s175 + $0x110] sm:$0xff]
  %v855 = vld [vmem:[%s175 + $0x120] sm:$0xff]
  %v856 = vld [vmem:[%s175 + $0x128] sm:$0xff]
  %v857 = vld [vmem:[%s175 + $0x138] sm:$0xff]
  %v858 = vld [vmem:[%s175 + $0x140] sm:$0xff]
  %v859 = vld [vmem:[%s175 + $0x150] sm:$0xff]
  %v860 = vld [vmem:[%s175 + $0x158] sm:$0xff]
  %v861 = vld [vmem:[%s175 + $0x168] sm:$0xff]
  %v862 = vld [vmem:[%s175 + $0x170] sm:$0xff]
  %v863 = vld [vmem:[%s175 + $0x1b0] sm:$0xff]
  %v864 = vld [vmem:[%s175 + $0x1b8] sm:$0xff]
  %v865 = vld [vmem:[%s175 + $0x1c8] sm:$0xff]
  %v866 = vld [vmem:[%s175 + $0x1d0] sm:$0xff]
  %v867 = vld [vmem:[%s175 + $0x1e0] sm:$0xff]
  %v868 = vld [vmem:[%s175 + $0x1e8] sm:$0xff]
  %v869 = vld [vmem:[%s175 + $0x1f8] sm:$0xff]
  %v870 = vld [vmem:[%s175 + $0x200] sm:$0xff]
  %v871 = vld [vmem:[%s175 + $0x210] sm:$0xff]
  %v872 = vld [vmem:[%s175 + $0x218] sm:$0xff]
  %v873 = vld [vmem:[%s175 + $0x228] sm:$0xff]
  %v874 = vld [vmem:[%s175 + $0x230] sm:$0xff]
  %v875 = vld [vmem:[%s175 + $0x240] sm:$0xff]
  %v876 = vld [vmem:[%s175 + $0x248] sm:$0xff]
  %v877 = vld [vmem:[%s175 + $0x258] sm:$0xff]
  %v878 = vld [vmem:[%s175 + $0x260] sm:$0xff]
  %v879 = vld [vmem:[%s175 + $0x270] sm:$0xff]
  %v880 = vld [vmem:[%s175 + $0x278] sm:$0xff]
  %v881 = vld [vmem:[%s175 + $0x288] sm:$0xff]
  %v882 = vld [vmem:[%s175 + $0x290] sm:$0xff]
  %v883 = vld [vmem:[%s175 + $0x2a0] sm:$0xff]
  %v884 = vld [vmem:[%s175 + $0x2a8] sm:$0xff]
  %v885 = vld [vmem:[%s175 + $0x2b8] sm:$0xff]
  %v886 = vld [vmem:[%s175 + $0x2c0] sm:$0xff]
  %v887 = vld [vmem:[%s175 + $0x2d0] sm:$0xff]
  %v888 = vld [vmem:[%s175 + $0x2d8] sm:$0xff]
  %v889 = vld [vmem:[%s175 + $0x2e8] sm:$0xff]
  %v890 = vld [vmem:[%s175 + $0x2f0] sm:$0xff]
  %v891 = vld [vmem:[%s175 + $0x300] sm:$0xff]
  %v892 = vld [vmem:[%s175 + $0x308] sm:$0xff]
  %v893 = vld [vmem:[%s175 + $0x318] sm:$0xff]
  %v894 = vld [vmem:[%s175 + $0x320] sm:$0xff]
  %v895 = vld [vmem:[%s1 + $0x3] sm:$0x1]
  %v896 = vlaneseq
  %v897 = vshrl.u32 %v896, 7
  %v898 = vsub.s32 0, %v897
  %v899 = vrot.slane %v895, %v898
  %v900 = vmul.f32 %v831, %v899
  %v901 = vmul.f32 %v832, %v899
  %v902 = vmul.f32 %v833, %v899
  %v903 = vmul.f32 %v834, %v899
  %v904 = vmul.f32 %v835, %v899
  %v905 = vmul.f32 %v836, %v899
  %v906 = vmul.f32 %v837, %v899
  %v907 = vmul.f32 %v838, %v899
  %v908 = vmul.f32 %v839, %v899
  %v909 = vmul.f32 %v840, %v899
  %v910 = vmul.f32 %v841, %v899
  %v911 = vmul.f32 %v842, %v899
  %v912 = vmul.f32 %v843, %v899
  %v913 = vmul.f32 %v844, %v899
  %v914 = vmul.f32 %v845, %v899
  %v915 = vmul.f32 %v846, %v899
  %v916 = vmul.f32 %v847, %v899
  %v917 = vmul.f32 %v848, %v899
  %v918 = vmul.f32 %v849, %v899
  %v919 = vmul.f32 %v850, %v899
  %v920 = vmul.f32 %v851, %v899
  %v921 = vmul.f32 %v852, %v899
  %v922 = vmul.f32 %v853, %v899
  %v923 = vmul.f32 %v854, %v899
  %v924 = vmul.f32 %v855, %v899
  %v925 = vmul.f32 %v856, %v899
  %v926 = vmul.f32 %v857, %v899
  %v927 = vmul.f32 %v858, %v899
  %v928 = vmul.f32 %v859, %v899
  %v929 = vmul.f32 %v860, %v899
  %v930 = vmul.f32 %v861, %v899
  %v931 = vmul.f32 %v862, %v899
  %v932 = vmul.f32 %v863, %v899
  %v933 = vmul.f32 %v864, %v899
  %v934 = vmul.f32 %v865, %v899
  %v935 = vmul.f32 %v866, %v899
  %v936 = vmul.f32 %v867, %v899
  %v937 = vmul.f32 %v868, %v899
  %v938 = vmul.f32 %v869, %v899
  %v939 = vmul.f32 %v870, %v899
  %v940 = vmul.f32 %v871, %v899
  %v941 = vmul.f32 %v872, %v899
  %v942 = vmul.f32 %v873, %v899
  %v943 = vmul.f32 %v874, %v899
  %v944 = vmul.f32 %v875, %v899
  %v945 = vmul.f32 %v876, %v899
  %v946 = vmul.f32 %v877, %v899
  %v947 = vmul.f32 %v878, %v899
  %v948 = vmul.f32 %v879, %v899
  %v949 = vmul.f32 %v880, %v899
  %v950 = vmul.f32 %v881, %v899
  %v951 = vmul.f32 %v882, %v899
  %v952 = vmul.f32 %v883, %v899
  %v953 = vmul.f32 %v884, %v899
  %v954 = vmul.f32 %v885, %v899
  %v955 = vmul.f32 %v886, %v899
  %v956 = vmul.f32 %v887, %v899
  %v957 = vmul.f32 %v888, %v899
  %v958 = vmul.f32 %v889, %v899
  %v959 = vmul.f32 %v890, %v899
  %v960 = vmul.f32 %v891, %v899
  %v961 = vmul.f32 %v892, %v899
  %v962 = vmul.f32 %v893, %v899
  %v963 = vmul.f32 %v894, %v899
  %v964 = vadd.f32 %v767, %v900
  %v965 = vadd.f32 %v768, %v901
  %v966 = vadd.f32 %v769, %v902
  %v967 = vadd.f32 %v770, %v903
  %v968 = vadd.f32 %v771, %v904
  %v969 = vadd.f32 %v772, %v905
  %v970 = vadd.f32 %v773, %v906
  %v971 = vadd.f32 %v774, %v907
  %v972 = vadd.f32 %v775, %v908
  %v973 = vadd.f32 %v776, %v909
  %v974 = vadd.f32 %v777, %v910
  %v975 = vadd.f32 %v778, %v911
  %v976 = vadd.f32 %v779, %v912
  %v977 = vadd.f32 %v780, %v913
  %v978 = vadd.f32 %v781, %v914
  %v979 = vadd.f32 %v782, %v915
  %v980 = vadd.f32 %v783, %v916
  %v981 = vadd.f32 %v784, %v917
  %v982 = vadd.f32 %v785, %v918
  %v983 = vadd.f32 %v786, %v919
  %v984 = vadd.f32 %v787, %v920
  %v985 = vadd.f32 %v788, %v921
  %v986 = vadd.f32 %v789, %v922
  %v987 = vadd.f32 %v790, %v923
  %v988 = vadd.f32 %v791, %v924
  %v989 = vadd.f32 %v792, %v925
  %v990 = vadd.f32 %v793, %v926
  %v991 = vadd.f32 %v794, %v927
  %v992 = vadd.f32 %v795, %v928
  %v993 = vadd.f32 %v796, %v929
  %v994 = vadd.f32 %v797, %v930
  %v995 = vadd.f32 %v798, %v931
  %v996 = vadd.f32 %v799, %v932
  %v997 = vadd.f32 %v800, %v933
  %v998 = vadd.f32 %v801, %v934
  %v999 = vadd.f32 %v802, %v935
  %v1000 = vadd.f32 %v803, %v936
  %v1001 = vadd.f32 %v804, %v937
  %v1002 = vadd.f32 %v805, %v938
  %v1003 = vadd.f32 %v806, %v939
  %v1004 = vadd.f32 %v807, %v940
  %v1005 = vadd.f32 %v808, %v941
  %v1006 = vadd.f32 %v809, %v942
  %v1007 = vadd.f32 %v810, %v943
  %v1008 = vadd.f32 %v811, %v944
  %v1009 = vadd.f32 %v812, %v945
  %v1010 = vadd.f32 %v813, %v946
  %v1011 = vadd.f32 %v814, %v947
  %v1012 = vadd.f32 %v815, %v948
  %v1013 = vadd.f32 %v816, %v949
  %v1014 = vadd.f32 %v817, %v950
  %v1015 = vadd.f32 %v818, %v951
  %v1016 = vadd.f32 %v819, %v952
  %v1017 = vadd.f32 %v820, %v953
  %v1018 = vadd.f32 %v821, %v954
  %v1019 = vadd.f32 %v822, %v955
  %v1020 = vadd.f32 %v823, %v956
  %v1021 = vadd.f32 %v824, %v957
  %v1022 = vadd.f32 %v825, %v958
  %v1023 = vadd.f32 %v826, %v959
  %v1024 = vadd.f32 %v827, %v960
  %v1025 = vadd.f32 %v828, %v961
  %v1026 = vadd.f32 %v829, %v962
  %v1027 = vadd.f32 %v830, %v963
  %v1028 = vld [vmem:[%s175 + $0x1] sm:$0xff]
  %v1029 = vld [vmem:[%s175 + $0x9] sm:$0xff]
  %v1030 = vld [vmem:[%s175 + $0x19] sm:$0xff]
  %v1031 = vld [vmem:[%s175 + $0x21] sm:$0xff]
  %v1032 = vld [vmem:[%s175 + $0x31] sm:$0xff]
  %v1033 = vld [vmem:[%s175 + $0x39] sm:$0xff]
  %v1034 = vld [vmem:[%s175 + $0x49] sm:$0xff]
  %v1035 = vld [vmem:[%s175 + $0x51] sm:$0xff]
  %v1036 = vld [vmem:[%s175 + $0x61] sm:$0xff]
  %v1037 = vld [vmem:[%s175 + $0x69] sm:$0xff]
  %v1038 = vld [vmem:[%s175 + $0x79] sm:$0xff]
  %v1039 = vld [vmem:[%s175 + $0x81] sm:$0xff]
  %v1040 = vld [vmem:[%s175 + $0x91] sm:$0xff]
  %v1041 = vld [vmem:[%s175 + $0x99] sm:$0xff]
  %v1042 = vld [vmem:[%s175 + $0xa9] sm:$0xff]
  %v1043 = vld [vmem:[%s175 + $0xb1] sm:$0xff]
  %v1044 = vld [vmem:[%s175 + $0xc1] sm:$0xff]
  %v1045 = vld [vmem:[%s175 + $0xc9] sm:$0xff]
  %v1046 = vld [vmem:[%s175 + $0xd9] sm:$0xff]
  %v1047 = vld [vmem:[%s175 + $0xe1] sm:$0xff]
  %v1048 = vld [vmem:[%s175 + $0xf1] sm:$0xff]
  %v1049 = vld [vmem:[%s175 + $0xf9] sm:$0xff]
  %v1050 = vld [vmem:[%s175 + $0x109] sm:$0xff]
  %v1051 = vld [vmem:[%s175 + $0x111] sm:$0xff]
  %v1052 = vld [vmem:[%s175 + $0x121] sm:$0xff]
  %v1053 = vld [vmem:[%s175 + $0x129] sm:$0xff]
  %v1054 = vld [vmem:[%s175 + $0x139] sm:$0xff]
  %v1055 = vld [vmem:[%s175 + $0x141] sm:$0xff]
  %v1056 = vld [vmem:[%s175 + $0x151] sm:$0xff]
  %v1057 = vld [vmem:[%s175 + $0x159] sm:$0xff]
  %v1058 = vld [vmem:[%s175 + $0x169] sm:$0xff]
  %v1059 = vld [vmem:[%s175 + $0x171] sm:$0xff]
  %v1060 = vld [vmem:[%s175 + $0x1b1] sm:$0xff]
  %v1061 = vld [vmem:[%s175 + $0x1b9] sm:$0xff]
  %v1062 = vld [vmem:[%s175 + $0x1c9] sm:$0xff]
  %v1063 = vld [vmem:[%s175 + $0x1d1] sm:$0xff]
  %v1064 = vld [vmem:[%s175 + $0x1e1] sm:$0xff]
  %v1065 = vld [vmem:[%s175 + $0x1e9] sm:$0xff]
  %v1066 = vld [vmem:[%s175 + $0x1f9] sm:$0xff]
  %v1067 = vld [vmem:[%s175 + $0x201] sm:$0xff]
  %v1068 = vld [vmem:[%s175 + $0x211] sm:$0xff]
  %v1069 = vld [vmem:[%s175 + $0x219] sm:$0xff]
  %v1070 = vld [vmem:[%s175 + $0x229] sm:$0xff]
  %v1071 = vld [vmem:[%s175 + $0x231] sm:$0xff]
  %v1072 = vld [vmem:[%s175 + $0x241] sm:$0xff]
  %v1073 = vld [vmem:[%s175 + $0x249] sm:$0xff]
  %v1074 = vld [vmem:[%s175 + $0x259] sm:$0xff]
  %v1075 = vld [vmem:[%s175 + $0x261] sm:$0xff]
  %v1076 = vld [vmem:[%s175 + $0x271] sm:$0xff]
  %v1077 = vld [vmem:[%s175 + $0x279] sm:$0xff]
  %v1078 = vld [vmem:[%s175 + $0x289] sm:$0xff]
  %v1079 = vld [vmem:[%s175 + $0x291] sm:$0xff]
  %v1080 = vld [vmem:[%s175 + $0x2a1] sm:$0xff]
  %v1081 = vld [vmem:[%s175 + $0x2a9] sm:$0xff]
  %v1082 = vld [vmem:[%s175 + $0x2b9] sm:$0xff]
  %v1083 = vld [vmem:[%s175 + $0x2c1] sm:$0xff]
  %v1084 = vld [vmem:[%s175 + $0x2d1] sm:$0xff]
  %v1085 = vld [vmem:[%s175 + $0x2d9] sm:$0xff]
  %v1086 = vld [vmem:[%s175 + $0x2e9] sm:$0xff]
  %v1087 = vld [vmem:[%s175 + $0x2f1] sm:$0xff]
  %v1088 = vld [vmem:[%s175 + $0x301] sm:$0xff]
  %v1089 = vld [vmem:[%s175 + $0x309] sm:$0xff]
  %v1090 = vld [vmem:[%s175 + $0x319] sm:$0xff]
  %v1091 = vld [vmem:[%s175 + $0x321] sm:$0xff]
  %v1092 = vld [vmem:[%s1 + $0x4] sm:$0x1]
  %v1093 = vlaneseq
  %v1094 = vshrl.u32 %v1093, 7
  %v1095 = vsub.s32 0, %v1094
  %v1096 = vrot.slane %v1092, %v1095
  %v1097 = vmul.f32 %v1028, %v1096
  %v1098 = vmul.f32 %v1029, %v1096
  %v1099 = vmul.f32 %v1030, %v1096
  %v1100 = vmul.f32 %v1031, %v1096
  %v1101 = vmul.f32 %v1032, %v1096
  %v1102 = vmul.f32 %v1033, %v1096
  %v1103 = vmul.f32 %v1034, %v1096
  %v1104 = vmul.f32 %v1035, %v1096
  %v1105 = vmul.f32 %v1036, %v1096
  %v1106 = vmul.f32 %v1037, %v1096
  %v1107 = vmul.f32 %v1038, %v1096
  %v1108 = vmul.f32 %v1039, %v1096
  %v1109 = vmul.f32 %v1040, %v1096
  %v1110 = vmul.f32 %v1041, %v1096
  %v1111 = vmul.f32 %v1042, %v1096
  %v1112 = vmul.f32 %v1043, %v1096
  %v1113 = vmul.f32 %v1044, %v1096
  %v1114 = vmul.f32 %v1045, %v1096
  %v1115 = vmul.f32 %v1046, %v1096
  %v1116 = vmul.f32 %v1047, %v1096
  %v1117 = vmul.f32 %v1048, %v1096
  %v1118 = vmul.f32 %v1049, %v1096
  %v1119 = vmul.f32 %v1050, %v1096
  %v1120 = vmul.f32 %v1051, %v1096
  %v1121 = vmul.f32 %v1052, %v1096
  %v1122 = vmul.f32 %v1053, %v1096
  %v1123 = vmul.f32 %v1054, %v1096
  %v1124 = vmul.f32 %v1055, %v1096
  %v1125 = vmul.f32 %v1056, %v1096
  %v1126 = vmul.f32 %v1057, %v1096
  %v1127 = vmul.f32 %v1058, %v1096
  %v1128 = vmul.f32 %v1059, %v1096
  %v1129 = vmul.f32 %v1060, %v1096
  %v1130 = vmul.f32 %v1061, %v1096
  %v1131 = vmul.f32 %v1062, %v1096
  %v1132 = vmul.f32 %v1063, %v1096
  %v1133 = vmul.f32 %v1064, %v1096
  %v1134 = vmul.f32 %v1065, %v1096
  %v1135 = vmul.f32 %v1066, %v1096
  %v1136 = vmul.f32 %v1067, %v1096
  %v1137 = vmul.f32 %v1068, %v1096
  %v1138 = vmul.f32 %v1069, %v1096
  %v1139 = vmul.f32 %v1070, %v1096
  %v1140 = vmul.f32 %v1071, %v1096
  %v1141 = vmul.f32 %v1072, %v1096
  %v1142 = vmul.f32 %v1073, %v1096
  %v1143 = vmul.f32 %v1074, %v1096
  %v1144 = vmul.f32 %v1075, %v1096
  %v1145 = vmul.f32 %v1076, %v1096
  %v1146 = vmul.f32 %v1077, %v1096
  %v1147 = vmul.f32 %v1078, %v1096
  %v1148 = vmul.f32 %v1079, %v1096
  %v1149 = vmul.f32 %v1080, %v1096
  %v1150 = vmul.f32 %v1081, %v1096
  %v1151 = vmul.f32 %v1082, %v1096
  %v1152 = vmul.f32 %v1083, %v1096
  %v1153 = vmul.f32 %v1084, %v1096
  %v1154 = vmul.f32 %v1085, %v1096
  %v1155 = vmul.f32 %v1086, %v1096
  %v1156 = vmul.f32 %v1087, %v1096
  %v1157 = vmul.f32 %v1088, %v1096
  %v1158 = vmul.f32 %v1089, %v1096
  %v1159 = vmul.f32 %v1090, %v1096
  %v1160 = vmul.f32 %v1091, %v1096
  %v1161 = vadd.f32 %v964, %v1097
  %v1162 = vadd.f32 %v965, %v1098
  %v1163 = vadd.f32 %v966, %v1099
  %v1164 = vadd.f32 %v967, %v1100
  %v1165 = vadd.f32 %v968, %v1101
  %v1166 = vadd.f32 %v969, %v1102
  %v1167 = vadd.f32 %v970, %v1103
  %v1168 = vadd.f32 %v971, %v1104
  %v1169 = vadd.f32 %v972, %v1105
  %v1170 = vadd.f32 %v973, %v1106
  %v1171 = vadd.f32 %v974, %v1107
  %v1172 = vadd.f32 %v975, %v1108
  %v1173 = vadd.f32 %v976, %v1109
  %v1174 = vadd.f32 %v977, %v1110
  %v1175 = vadd.f32 %v978, %v1111
  %v1176 = vadd.f32 %v979, %v1112
  %v1177 = vadd.f32 %v980, %v1113
  %v1178 = vadd.f32 %v981, %v1114
  %v1179 = vadd.f32 %v982, %v1115
  %v1180 = vadd.f32 %v983, %v1116
  %v1181 = vadd.f32 %v984, %v1117
  %v1182 = vadd.f32 %v985, %v1118
  %v1183 = vadd.f32 %v986, %v1119
  %v1184 = vadd.f32 %v987, %v1120
  %v1185 = vadd.f32 %v988, %v1121
  %v1186 = vadd.f32 %v989, %v1122
  %v1187 = vadd.f32 %v990, %v1123
  %v1188 = vadd.f32 %v991, %v1124
  %v1189 = vadd.f32 %v992, %v1125
  %v1190 = vadd.f32 %v993, %v1126
  %v1191 = vadd.f32 %v994, %v1127
  %v1192 = vadd.f32 %v995, %v1128
  %v1193 = vadd.f32 %v996, %v1129
  %v1194 = vadd.f32 %v997, %v1130
  %v1195 = vadd.f32 %v998, %v1131
  %v1196 = vadd.f32 %v999, %v1132
  %v1197 = vadd.f32 %v1000, %v1133
  %v1198 = vadd.f32 %v1001, %v1134
  %v1199 = vadd.f32 %v1002, %v1135
  %v1200 = vadd.f32 %v1003, %v1136
  %v1201 = vadd.f32 %v1004, %v1137
  %v1202 = vadd.f32 %v1005, %v1138
  %v1203 = vadd.f32 %v1006, %v1139
  %v1204 = vadd.f32 %v1007, %v1140
  %v1205 = vadd.f32 %v1008, %v1141
  %v1206 = vadd.f32 %v1009, %v1142
  %v1207 = vadd.f32 %v1010, %v1143
  %v1208 = vadd.f32 %v1011, %v1144
  %v1209 = vadd.f32 %v1012, %v1145
  %v1210 = vadd.f32 %v1013, %v1146
  %v1211 = vadd.f32 %v1014, %v1147
  %v1212 = vadd.f32 %v1015, %v1148
  %v1213 = vadd.f32 %v1016, %v1149
  %v1214 = vadd.f32 %v1017, %v1150
  %v1215 = vadd.f32 %v1018, %v1151
  %v1216 = vadd.f32 %v1019, %v1152
  %v1217 = vadd.f32 %v1020, %v1153
  %v1218 = vadd.f32 %v1021, %v1154
  %v1219 = vadd.f32 %v1022, %v1155
  %v1220 = vadd.f32 %v1023, %v1156
  %v1221 = vadd.f32 %v1024, %v1157
  %v1222 = vadd.f32 %v1025, %v1158
  %v1223 = vadd.f32 %v1026, %v1159
  %v1224 = vadd.f32 %v1027, %v1160
  %v1225 = vld [vmem:[%s175 + $0x2] sm:$0xff]
  %v1226 = vld [vmem:[%s175 + $0xa] sm:$0xff]
  %v1227 = vld [vmem:[%s175 + $0x1a] sm:$0xff]
  %v1228 = vld [vmem:[%s175 + $0x22] sm:$0xff]
  %v1229 = vld [vmem:[%s175 + $0x32] sm:$0xff]
  %v1230 = vld [vmem:[%s175 + $0x3a] sm:$0xff]
  %v1231 = vld [vmem:[%s175 + $0x4a] sm:$0xff]
  %v1232 = vld [vmem:[%s175 + $0x52] sm:$0xff]
  %v1233 = vld [vmem:[%s175 + $0x62] sm:$0xff]
  %v1234 = vld [vmem:[%s175 + $0x6a] sm:$0xff]
  %v1235 = vld [vmem:[%s175 + $0x7a] sm:$0xff]
  %v1236 = vld [vmem:[%s175 + $0x82] sm:$0xff]
  %v1237 = vld [vmem:[%s175 + $0x92] sm:$0xff]
  %v1238 = vld [vmem:[%s175 + $0x9a] sm:$0xff]
  %v1239 = vld [vmem:[%s175 + $0xaa] sm:$0xff]
  %v1240 = vld [vmem:[%s175 + $0xb2] sm:$0xff]
  %v1241 = vld [vmem:[%s175 + $0xc2] sm:$0xff]
  %v1242 = vld [vmem:[%s175 + $0xca] sm:$0xff]
  %v1243 = vld [vmem:[%s175 + $0xda] sm:$0xff]
  %v1244 = vld [vmem:[%s175 + $0xe2] sm:$0xff]
  %v1245 = vld [vmem:[%s175 + $0xf2] sm:$0xff]
  %v1246 = vld [vmem:[%s175 + $0xfa] sm:$0xff]
  %v1247 = vld [vmem:[%s175 + $0x10a] sm:$0xff]
  %v1248 = vld [vmem:[%s175 + $0x112] sm:$0xff]
  %v1249 = vld [vmem:[%s175 + $0x122] sm:$0xff]
  %v1250 = vld [vmem:[%s175 + $0x12a] sm:$0xff]
  %v1251 = vld [vmem:[%s175 + $0x13a] sm:$0xff]
  %v1252 = vld [vmem:[%s175 + $0x142] sm:$0xff]
  %v1253 = vld [vmem:[%s175 + $0x152] sm:$0xff]
  %v1254 = vld [vmem:[%s175 + $0x15a] sm:$0xff]
  %v1255 = vld [vmem:[%s175 + $0x16a] sm:$0xff]
  %v1256 = vld [vmem:[%s175 + $0x172] sm:$0xff]
  %v1257 = vld [vmem:[%s175 + $0x1b2] sm:$0xff]
  %v1258 = vld [vmem:[%s175 + $0x1ba] sm:$0xff]
  %v1259 = vld [vmem:[%s175 + $0x1ca] sm:$0xff]
  %v1260 = vld [vmem:[%s175 + $0x1d2] sm:$0xff]
  %v1261 = vld [vmem:[%s175 + $0x1e2] sm:$0xff]
  %v1262 = vld [vmem:[%s175 + $0x1ea] sm:$0xff]
  %v1263 = vld [vmem:[%s175 + $0x1fa] sm:$0xff]
  %v1264 = vld [vmem:[%s175 + $0x202] sm:$0xff]
  %v1265 = vld [vmem:[%s175 + $0x212] sm:$0xff]
  %v1266 = vld [vmem:[%s175 + $0x21a] sm:$0xff]
  %v1267 = vld [vmem:[%s175 + $0x22a] sm:$0xff]
  %v1268 = vld [vmem:[%s175 + $0x232] sm:$0xff]
  %v1269 = vld [vmem:[%s175 + $0x242] sm:$0xff]
  %v1270 = vld [vmem:[%s175 + $0x24a] sm:$0xff]
  %v1271 = vld [vmem:[%s175 + $0x25a] sm:$0xff]
  %v1272 = vld [vmem:[%s175 + $0x262] sm:$0xff]
  %v1273 = vld [vmem:[%s175 + $0x272] sm:$0xff]
  %v1274 = vld [vmem:[%s175 + $0x27a] sm:$0xff]
  %v1275 = vld [vmem:[%s175 + $0x28a] sm:$0xff]
  %v1276 = vld [vmem:[%s175 + $0x292] sm:$0xff]
  %v1277 = vld [vmem:[%s175 + $0x2a2] sm:$0xff]
  %v1278 = vld [vmem:[%s175 + $0x2aa] sm:$0xff]
  %v1279 = vld [vmem:[%s175 + $0x2ba] sm:$0xff]
  %v1280 = vld [vmem:[%s175 + $0x2c2] sm:$0xff]
  %v1281 = vld [vmem:[%s175 + $0x2d2] sm:$0xff]
  %v1282 = vld [vmem:[%s175 + $0x2da] sm:$0xff]
  %v1283 = vld [vmem:[%s175 + $0x2ea] sm:$0xff]
  %v1284 = vld [vmem:[%s175 + $0x2f2] sm:$0xff]
  %v1285 = vld [vmem:[%s175 + $0x302] sm:$0xff]
  %v1286 = vld [vmem:[%s175 + $0x30a] sm:$0xff]
  %v1287 = vld [vmem:[%s175 + $0x31a] sm:$0xff]
  %v1288 = vld [vmem:[%s175 + $0x322] sm:$0xff]
  %v1289 = vld [vmem:[%s1 + $0x5] sm:$0x1]
  %v1290 = vlaneseq
  %v1291 = vshrl.u32 %v1290, 7
  %v1292 = vsub.s32 0, %v1291
  %v1293 = vrot.slane %v1289, %v1292
  %v1294 = vmul.f32 %v1225, %v1293
  %v1295 = vmul.f32 %v1226, %v1293
  %v1296 = vmul.f32 %v1227, %v1293
  %v1297 = vmul.f32 %v1228, %v1293
  %v1298 = vmul.f32 %v1229, %v1293
  %v1299 = vmul.f32 %v1230, %v1293
  %v1300 = vmul.f32 %v1231, %v1293
  %v1301 = vmul.f32 %v1232, %v1293
  %v1302 = vmul.f32 %v1233, %v1293
  %v1303 = vmul.f32 %v1234, %v1293
  %v1304 = vmul.f32 %v1235, %v1293
  %v1305 = vmul.f32 %v1236, %v1293
  %v1306 = vmul.f32 %v1237, %v1293
  %v1307 = vmul.f32 %v1238, %v1293
  %v1308 = vmul.f32 %v1239, %v1293
  %v1309 = vmul.f32 %v1240, %v1293
  %v1310 = vmul.f32 %v1241, %v1293
  %v1311 = vmul.f32 %v1242, %v1293
  %v1312 = vmul.f32 %v1243, %v1293
  %v1313 = vmul.f32 %v1244, %v1293
  %v1314 = vmul.f32 %v1245, %v1293
  %v1315 = vmul.f32 %v1246, %v1293
  %v1316 = vmul.f32 %v1247, %v1293
  %v1317 = vmul.f32 %v1248, %v1293
  %v1318 = vmul.f32 %v1249, %v1293
  %v1319 = vmul.f32 %v1250, %v1293
  %v1320 = vmul.f32 %v1251, %v1293
  %v1321 = vmul.f32 %v1252, %v1293
  %v1322 = vmul.f32 %v1253, %v1293
  %v1323 = vmul.f32 %v1254, %v1293
  %v1324 = vmul.f32 %v1255, %v1293
  %v1325 = vmul.f32 %v1256, %v1293
  %v1326 = vmul.f32 %v1257, %v1293
  %v1327 = vmul.f32 %v1258, %v1293
  %v1328 = vmul.f32 %v1259, %v1293
  %v1329 = vmul.f32 %v1260, %v1293
  %v1330 = vmul.f32 %v1261, %v1293
  %v1331 = vmul.f32 %v1262, %v1293
  %v1332 = vmul.f32 %v1263, %v1293
  %v1333 = vmul.f32 %v1264, %v1293
  %v1334 = vmul.f32 %v1265, %v1293
  %v1335 = vmul.f32 %v1266, %v1293
  %v1336 = vmul.f32 %v1267, %v1293
  %v1337 = vmul.f32 %v1268, %v1293
  %v1338 = vmul.f32 %v1269, %v1293
  %v1339 = vmul.f32 %v1270, %v1293
  %v1340 = vmul.f32 %v1271, %v1293
  %v1341 = vmul.f32 %v1272, %v1293
  %v1342 = vmul.f32 %v1273, %v1293
  %v1343 = vmul.f32 %v1274, %v1293
  %v1344 = vmul.f32 %v1275, %v1293
  %v1345 = vmul.f32 %v1276, %v1293
  %v1346 = vmul.f32 %v1277, %v1293
  %v1347 = vmul.f32 %v1278, %v1293
  %v1348 = vmul.f32 %v1279, %v1293
  %v1349 = vmul.f32 %v1280, %v1293
  %v1350 = vmul.f32 %v1281, %v1293
  %v1351 = vmul.f32 %v1282, %v1293
  %v1352 = vmul.f32 %v1283, %v1293
  %v1353 = vmul.f32 %v1284, %v1293
  %v1354 = vmul.f32 %v1285, %v1293
  %v1355 = vmul.f32 %v1286, %v1293
  %v1356 = vmul.f32 %v1287, %v1293
  %v1357 = vmul.f32 %v1288, %v1293
  %v1358 = vadd.f32 %v1161, %v1294
  %v1359 = vadd.f32 %v1162, %v1295
  %v1360 = vadd.f32 %v1163, %v1296
  %v1361 = vadd.f32 %v1164, %v1297
  %v1362 = vadd.f32 %v1165, %v1298
  %v1363 = vadd.f32 %v1166, %v1299
  %v1364 = vadd.f32 %v1167, %v1300
  %v1365 = vadd.f32 %v1168, %v1301
  %v1366 = vadd.f32 %v1169, %v1302
  %v1367 = vadd.f32 %v1170, %v1303
  %v1368 = vadd.f32 %v1171, %v1304
  %v1369 = vadd.f32 %v1172, %v1305
  %v1370 = vadd.f32 %v1173, %v1306
  %v1371 = vadd.f32 %v1174, %v1307
  %v1372 = vadd.f32 %v1175, %v1308
  %v1373 = vadd.f32 %v1176, %v1309
  %v1374 = vadd.f32 %v1177, %v1310
  %v1375 = vadd.f32 %v1178, %v1311
  %v1376 = vadd.f32 %v1179, %v1312
  %v1377 = vadd.f32 %v1180, %v1313
  %v1378 = vadd.f32 %v1181, %v1314
  %v1379 = vadd.f32 %v1182, %v1315
  %v1380 = vadd.f32 %v1183, %v1316
  %v1381 = vadd.f32 %v1184, %v1317
  %v1382 = vadd.f32 %v1185, %v1318
  %v1383 = vadd.f32 %v1186, %v1319
  %v1384 = vadd.f32 %v1187, %v1320
  %v1385 = vadd.f32 %v1188, %v1321
  %v1386 = vadd.f32 %v1189, %v1322
  %v1387 = vadd.f32 %v1190, %v1323
  %v1388 = vadd.f32 %v1191, %v1324
  %v1389 = vadd.f32 %v1192, %v1325
  %v1390 = vadd.f32 %v1193, %v1326
  %v1391 = vadd.f32 %v1194, %v1327
  %v1392 = vadd.f32 %v1195, %v1328
  %v1393 = vadd.f32 %v1196, %v1329
  %v1394 = vadd.f32 %v1197, %v1330
  %v1395 = vadd.f32 %v1198, %v1331
  %v1396 = vadd.f32 %v1199, %v1332
  %v1397 = vadd.f32 %v1200, %v1333
  %v1398 = vadd.f32 %v1201, %v1334
  %v1399 = vadd.f32 %v1202, %v1335
  %v1400 = vadd.f32 %v1203, %v1336
  %v1401 = vadd.f32 %v1204, %v1337
  %v1402 = vadd.f32 %v1205, %v1338
  %v1403 = vadd.f32 %v1206, %v1339
  %v1404 = vadd.f32 %v1207, %v1340
  %v1405 = vadd.f32 %v1208, %v1341
  %v1406 = vadd.f32 %v1209, %v1342
  %v1407 = vadd.f32 %v1210, %v1343
  %v1408 = vadd.f32 %v1211, %v1344
  %v1409 = vadd.f32 %v1212, %v1345
  %v1410 = vadd.f32 %v1213, %v1346
  %v1411 = vadd.f32 %v1214, %v1347
  %v1412 = vadd.f32 %v1215, %v1348
  %v1413 = vadd.f32 %v1216, %v1349
  %v1414 = vadd.f32 %v1217, %v1350
  %v1415 = vadd.f32 %v1218, %v1351
  %v1416 = vadd.f32 %v1219, %v1352
  %v1417 = vadd.f32 %v1220, %v1353
  %v1418 = vadd.f32 %v1221, %v1354
  %v1419 = vadd.f32 %v1222, %v1355
  %v1420 = vadd.f32 %v1223, %v1356
  %v1421 = vadd.f32 %v1224, %v1357
  %s1422 = scalar_lea.vmem [#allocation2], 48
  %v1423 = vld [vmem:[%s1422] sm:$0xff]
  %v1424 = vld [vmem:[%s1422 + $0x8] sm:$0xff]
  %v1425 = vld [vmem:[%s1422 + $0x18] sm:$0xff]
  %v1426 = vld [vmem:[%s1422 + $0x20] sm:$0xff]
  %v1427 = vld [vmem:[%s1422 + $0x30] sm:$0xff]
  %v1428 = vld [vmem:[%s1422 + $0x38] sm:$0xff]
  %v1429 = vld [vmem:[%s1422 + $0x48] sm:$0xff]
  %v1430 = vld [vmem:[%s1422 + $0x50] sm:$0xff]
  %v1431 = vld [vmem:[%s1422 + $0x60] sm:$0xff]
  %v1432 = vld [vmem:[%s1422 + $0x68] sm:$0xff]
  %v1433 = vld [vmem:[%s1422 + $0x78] sm:$0xff]
  %v1434 = vld [vmem:[%s1422 + $0x80] sm:$0xff]
  %v1435 = vld [vmem:[%s1422 + $0x90] sm:$0xff]
  %v1436 = vld [vmem:[%s1422 + $0x98] sm:$0xff]
  %v1437 = vld [vmem:[%s1422 + $0xa8] sm:$0xff]
  %v1438 = vld [vmem:[%s1422 + $0xb0] sm:$0xff]
  %v1439 = vld [vmem:[%s1422 + $0xc0] sm:$0xff]
  %v1440 = vld [vmem:[%s1422 + $0xc8] sm:$0xff]
  %v1441 = vld [vmem:[%s1422 + $0xd8] sm:$0xff]
  %v1442 = vld [vmem:[%s1422 + $0xe0] sm:$0xff]
  %v1443 = vld [vmem:[%s1422 + $0xf0] sm:$0xff]
  %v1444 = vld [vmem:[%s1422 + $0xf8] sm:$0xff]
  %v1445 = vld [vmem:[%s1422 + $0x108] sm:$0xff]
  %v1446 = vld [vmem:[%s1422 + $0x110] sm:$0xff]
  %v1447 = vld [vmem:[%s1422 + $0x120] sm:$0xff]
  %v1448 = vld [vmem:[%s1422 + $0x128] sm:$0xff]
  %v1449 = vld [vmem:[%s1422 + $0x138] sm:$0xff]
  %v1450 = vld [vmem:[%s1422 + $0x140] sm:$0xff]
  %v1451 = vld [vmem:[%s1422 + $0x150] sm:$0xff]
  %v1452 = vld [vmem:[%s1422 + $0x158] sm:$0xff]
  %v1453 = vld [vmem:[%s1422 + $0x168] sm:$0xff]
  %v1454 = vld [vmem:[%s1422 + $0x170] sm:$0xff]
  %v1455 = vld [vmem:[%s1422 + $0x1b0] sm:$0xff]
  %v1456 = vld [vmem:[%s1422 + $0x1b8] sm:$0xff]
  %v1457 = vld [vmem:[%s1422 + $0x1c8] sm:$0xff]
  %v1458 = vld [vmem:[%s1422 + $0x1d0] sm:$0xff]
  %v1459 = vld [vmem:[%s1422 + $0x1e0] sm:$0xff]
  %v1460 = vld [vmem:[%s1422 + $0x1e8] sm:$0xff]
  %v1461 = vld [vmem:[%s1422 + $0x1f8] sm:$0xff]
  %v1462 = vld [vmem:[%s1422 + $0x200] sm:$0xff]
  %v1463 = vld [vmem:[%s1422 + $0x210] sm:$0xff]
  %v1464 = vld [vmem:[%s1422 + $0x218] sm:$0xff]
  %v1465 = vld [vmem:[%s1422 + $0x228] sm:$0xff]
  %v1466 = vld [vmem:[%s1422 + $0x230] sm:$0xff]
  %v1467 = vld [vmem:[%s1422 + $0x240] sm:$0xff]
  %v1468 = vld [vmem:[%s1422 + $0x248] sm:$0xff]
  %v1469 = vld [vmem:[%s1422 + $0x258] sm:$0xff]
  %v1470 = vld [vmem:[%s1422 + $0x260] sm:$0xff]
  %v1471 = vld [vmem:[%s1422 + $0x270] sm:$0xff]
  %v1472 = vld [vmem:[%s1422 + $0x278] sm:$0xff]
  %v1473 = vld [vmem:[%s1422 + $0x288] sm:$0xff]
  %v1474 = vld [vmem:[%s1422 + $0x290] sm:$0xff]
  %v1475 = vld [vmem:[%s1422 + $0x2a0] sm:$0xff]
  %v1476 = vld [vmem:[%s1422 + $0x2a8] sm:$0xff]
  %v1477 = vld [vmem:[%s1422 + $0x2b8] sm:$0xff]
  %v1478 = vld [vmem:[%s1422 + $0x2c0] sm:$0xff]
  %v1479 = vld [vmem:[%s1422 + $0x2d0] sm:$0xff]
  %v1480 = vld [vmem:[%s1422 + $0x2d8] sm:$0xff]
  %v1481 = vld [vmem:[%s1422 + $0x2e8] sm:$0xff]
  %v1482 = vld [vmem:[%s1422 + $0x2f0] sm:$0xff]
  %v1483 = vld [vmem:[%s1422 + $0x300] sm:$0xff]
  %v1484 = vld [vmem:[%s1422 + $0x308] sm:$0xff]
  %v1485 = vld [vmem:[%s1422 + $0x318] sm:$0xff]
  %v1486 = vld [vmem:[%s1422 + $0x320] sm:$0xff]
  %v1487 = vld [vmem:[%s1 + $0x6] sm:$0x1]
  %v1488 = vlaneseq
  %v1489 = vshrl.u32 %v1488, 7
  %v1490 = vsub.s32 0, %v1489
  %v1491 = vrot.slane %v1487, %v1490
  %v1492 = vmul.f32 %v1423, %v1491
  %v1493 = vmul.f32 %v1424, %v1491
  %v1494 = vmul.f32 %v1425, %v1491
  %v1495 = vmul.f32 %v1426, %v1491
  %v1496 = vmul.f32 %v1427, %v1491
  %v1497 = vmul.f32 %v1428, %v1491
  %v1498 = vmul.f32 %v1429, %v1491
  %v1499 = vmul.f32 %v1430, %v1491
  %v1500 = vmul.f32 %v1431, %v1491
  %v1501 = vmul.f32 %v1432, %v1491
  %v1502 = vmul.f32 %v1433, %v1491
  %v1503 = vmul.f32 %v1434, %v1491
  %v1504 = vmul.f32 %v1435, %v1491
  %v1505 = vmul.f32 %v1436, %v1491
  %v1506 = vmul.f32 %v1437, %v1491
  %v1507 = vmul.f32 %v1438, %v1491
  %v1508 = vmul.f32 %v1439, %v1491
  %v1509 = vmul.f32 %v1440, %v1491
  %v1510 = vmul.f32 %v1441, %v1491
  %v1511 = vmul.f32 %v1442, %v1491
  %v1512 = vmul.f32 %v1443, %v1491
  %v1513 = vmul.f32 %v1444, %v1491
  %v1514 = vmul.f32 %v1445, %v1491
  %v1515 = vmul.f32 %v1446, %v1491
  %v1516 = vmul.f32 %v1447, %v1491
  %v1517 = vmul.f32 %v1448, %v1491
  %v1518 = vmul.f32 %v1449, %v1491
  %v1519 = vmul.f32 %v1450, %v1491
  %v1520 = vmul.f32 %v1451, %v1491
  %v1521 = vmul.f32 %v1452, %v1491
  %v1522 = vmul.f32 %v1453, %v1491
  %v1523 = vmul.f32 %v1454, %v1491
  %v1524 = vmul.f32 %v1455, %v1491
  %v1525 = vmul.f32 %v1456, %v1491
  %v1526 = vmul.f32 %v1457, %v1491
  %v1527 = vmul.f32 %v1458, %v1491
  %v1528 = vmul.f32 %v1459, %v1491
  %v1529 = vmul.f32 %v1460, %v1491
  %v1530 = vmul.f32 %v1461, %v1491
  %v1531 = vmul.f32 %v1462, %v1491
  %v1532 = vmul.f32 %v1463, %v1491
  %v1533 = vmul.f32 %v1464, %v1491
  %v1534 = vmul.f32 %v1465, %v1491
  %v1535 = vmul.f32 %v1466, %v1491
  %v1536 = vmul.f32 %v1467, %v1491
  %v1537 = vmul.f32 %v1468, %v1491
  %v1538 = vmul.f32 %v1469, %v1491
  %v1539 = vmul.f32 %v1470, %v1491
  %v1540 = vmul.f32 %v1471, %v1491
  %v1541 = vmul.f32 %v1472, %v1491
  %v1542 = vmul.f32 %v1473, %v1491
  %v1543 = vmul.f32 %v1474, %v1491
  %v1544 = vmul.f32 %v1475, %v1491
  %v1545 = vmul.f32 %v1476, %v1491
  %v1546 = vmul.f32 %v1477, %v1491
  %v1547 = vmul.f32 %v1478, %v1491
  %v1548 = vmul.f32 %v1479, %v1491
  %v1549 = vmul.f32 %v1480, %v1491
  %v1550 = vmul.f32 %v1481, %v1491
  %v1551 = vmul.f32 %v1482, %v1491
  %v1552 = vmul.f32 %v1483, %v1491
  %v1553 = vmul.f32 %v1484, %v1491
  %v1554 = vmul.f32 %v1485, %v1491
  %v1555 = vmul.f32 %v1486, %v1491
  %v1556 = vadd.f32 %v1358, %v1492
  %v1557 = vadd.f32 %v1359, %v1493
  %v1558 = vadd.f32 %v1360, %v1494
  %v1559 = vadd.f32 %v1361, %v1495
  %v1560 = vadd.f32 %v1362, %v1496
  %v1561 = vadd.f32 %v1363, %v1497
  %v1562 = vadd.f32 %v1364, %v1498
  %v1563 = vadd.f32 %v1365, %v1499
  %v1564 = vadd.f32 %v1366, %v1500
  %v1565 = vadd.f32 %v1367, %v1501
  %v1566 = vadd.f32 %v1368, %v1502
  %v1567 = vadd.f32 %v1369, %v1503
  %v1568 = vadd.f32 %v1370, %v1504
  %v1569 = vadd.f32 %v1371, %v1505
  %v1570 = vadd.f32 %v1372, %v1506
  %v1571 = vadd.f32 %v1373, %v1507
  %v1572 = vadd.f32 %v1374, %v1508
  %v1573 = vadd.f32 %v1375, %v1509
  %v1574 = vadd.f32 %v1376, %v1510
  %v1575 = vadd.f32 %v1377, %v1511
  %v1576 = vadd.f32 %v1378, %v1512
  %v1577 = vadd.f32 %v1379, %v1513
  %v1578 = vadd.f32 %v1380, %v1514
  %v1579 = vadd.f32 %v1381, %v1515
  %v1580 = vadd.f32 %v1382, %v1516
  %v1581 = vadd.f32 %v1383, %v1517
  %v1582 = vadd.f32 %v1384, %v1518
  %v1583 = vadd.f32 %v1385, %v1519
  %v1584 = vadd.f32 %v1386, %v1520
  %v1585 = vadd.f32 %v1387, %v1521
  %v1586 = vadd.f32 %v1388, %v1522
  %v1587 = vadd.f32 %v1389, %v1523
  %v1588 = vadd.f32 %v1390, %v1524
  %v1589 = vadd.f32 %v1391, %v1525
  %v1590 = vadd.f32 %v1392, %v1526
  %v1591 = vadd.f32 %v1393, %v1527
  %v1592 = vadd.f32 %v1394, %v1528
  %v1593 = vadd.f32 %v1395, %v1529
  %v1594 = vadd.f32 %v1396, %v1530
  %v1595 = vadd.f32 %v1397, %v1531
  %v1596 = vadd.f32 %v1398, %v1532
  %v1597 = vadd.f32 %v1399, %v1533
  %v1598 = vadd.f32 %v1400, %v1534
  %v1599 = vadd.f32 %v1401, %v1535
  %v1600 = vadd.f32 %v1402, %v1536
  %v1601 = vadd.f32 %v1403, %v1537
  %v1602 = vadd.f32 %v1404, %v1538
  %v1603 = vadd.f32 %v1405, %v1539
  %v1604 = vadd.f32 %v1406, %v1540
  %v1605 = vadd.f32 %v1407, %v1541
  %v1606 = vadd.f32 %v1408, %v1542
  %v1607 = vadd.f32 %v1409, %v1543
  %v1608 = vadd.f32 %v1410, %v1544
  %v1609 = vadd.f32 %v1411, %v1545
  %v1610 = vadd.f32 %v1412, %v1546
  %v1611 = vadd.f32 %v1413, %v1547
  %v1612 = vadd.f32 %v1414, %v1548
  %v1613 = vadd.f32 %v1415, %v1549
  %v1614 = vadd.f32 %v1416, %v1550
  %v1615 = vadd.f32 %v1417, %v1551
  %v1616 = vadd.f32 %v1418, %v1552
  %v1617 = vadd.f32 %v1419, %v1553
  %v1618 = vadd.f32 %v1420, %v1554
  %v1619 = vadd.f32 %v1421, %v1555
  %v1620 = vld [vmem:[%s1422 + $0x1] sm:$0xff]
  %v1621 = vld [vmem:[%s1422 + $0x9] sm:$0xff]
  %v1622 = vld [vmem:[%s1422 + $0x19] sm:$0xff]
  %v1623 = vld [vmem:[%s1422 + $0x21] sm:$0xff]
  %v1624 = vld [vmem:[%s1422 + $0x31] sm:$0xff]
  %v1625 = vld [vmem:[%s1422 + $0x39] sm:$0xff]
  %v1626 = vld [vmem:[%s1422 + $0x49] sm:$0xff]
  %v1627 = vld [vmem:[%s1422 + $0x51] sm:$0xff]
  %v1628 = vld [vmem:[%s1422 + $0x61] sm:$0xff]
  %v1629 = vld [vmem:[%s1422 + $0x69] sm:$0xff]
  %v1630 = vld [vmem:[%s1422 + $0x79] sm:$0xff]
  %v1631 = vld [vmem:[%s1422 + $0x81] sm:$0xff]
  %v1632 = vld [vmem:[%s1422 + $0x91] sm:$0xff]
  %v1633 = vld [vmem:[%s1422 + $0x99] sm:$0xff]
  %v1634 = vld [vmem:[%s1422 + $0xa9] sm:$0xff]
  %v1635 = vld [vmem:[%s1422 + $0xb1] sm:$0xff]
  %v1636 = vld [vmem:[%s1422 + $0xc1] sm:$0xff]
  %v1637 = vld [vmem:[%s1422 + $0xc9] sm:$0xff]
  %v1638 = vld [vmem:[%s1422 + $0xd9] sm:$0xff]
  %v1639 = vld [vmem:[%s1422 + $0xe1] sm:$0xff]
  %v1640 = vld [vmem:[%s1422 + $0xf1] sm:$0xff]
  %v1641 = vld [vmem:[%s1422 + $0xf9] sm:$0xff]
  %v1642 = vld [vmem:[%s1422 + $0x109] sm:$0xff]
  %v1643 = vld [vmem:[%s1422 + $0x111] sm:$0xff]
  %v1644 = vld [vmem:[%s1422 + $0x121] sm:$0xff]
  %v1645 = vld [vmem:[%s1422 + $0x129] sm:$0xff]
  %v1646 = vld [vmem:[%s1422 + $0x139] sm:$0xff]
  %v1647 = vld [vmem:[%s1422 + $0x141] sm:$0xff]
  %v1648 = vld [vmem:[%s1422 + $0x151] sm:$0xff]
  %v1649 = vld [vmem:[%s1422 + $0x159] sm:$0xff]
  %v1650 = vld [vmem:[%s1422 + $0x169] sm:$0xff]
  %v1651 = vld [vmem:[%s1422 + $0x171] sm:$0xff]
  %v1652 = vld [vmem:[%s1422 + $0x1b1] sm:$0xff]
  %v1653 = vld [vmem:[%s1422 + $0x1b9] sm:$0xff]
  %v1654 = vld [vmem:[%s1422 + $0x1c9] sm:$0xff]
  %v1655 = vld [vmem:[%s1422 + $0x1d1] sm:$0xff]
  %v1656 = vld [vmem:[%s1422 + $0x1e1] sm:$0xff]
  %v1657 = vld [vmem:[%s1422 + $0x1e9] sm:$0xff]
  %v1658 = vld [vmem:[%s1422 + $0x1f9] sm:$0xff]
  %v1659 = vld [vmem:[%s1422 + $0x201] sm:$0xff]
  %v1660 = vld [vmem:[%s1422 + $0x211] sm:$0xff]
  %v1661 = vld [vmem:[%s1422 + $0x219] sm:$0xff]
  %v1662 = vld [vmem:[%s1422 + $0x229] sm:$0xff]
  %v1663 = vld [vmem:[%s1422 + $0x231] sm:$0xff]
  %v1664 = vld [vmem:[%s1422 + $0x241] sm:$0xff]
  %v1665 = vld [vmem:[%s1422 + $0x249] sm:$0xff]
  %v1666 = vld [vmem:[%s1422 + $0x259] sm:$0xff]
  %v1667 = vld [vmem:[%s1422 + $0x261] sm:$0xff]
  %v1668 = vld [vmem:[%s1422 + $0x271] sm:$0xff]
  %v1669 = vld [vmem:[%s1422 + $0x279] sm:$0xff]
  %v1670 = vld [vmem:[%s1422 + $0x289] sm:$0xff]
  %v1671 = vld [vmem:[%s1422 + $0x291] sm:$0xff]
  %v1672 = vld [vmem:[%s1422 + $0x2a1] sm:$0xff]
  %v1673 = vld [vmem:[%s1422 + $0x2a9] sm:$0xff]
  %v1674 = vld [vmem:[%s1422 + $0x2b9] sm:$0xff]
  %v1675 = vld [vmem:[%s1422 + $0x2c1] sm:$0xff]
  %v1676 = vld [vmem:[%s1422 + $0x2d1] sm:$0xff]
  %v1677 = vld [vmem:[%s1422 + $0x2d9] sm:$0xff]
  %v1678 = vld [vmem:[%s1422 + $0x2e9] sm:$0xff]
  %v1679 = vld [vmem:[%s1422 + $0x2f1] sm:$0xff]
  %v1680 = vld [vmem:[%s1422 + $0x301] sm:$0xff]
  %v1681 = vld [vmem:[%s1422 + $0x309] sm:$0xff]
  %v1682 = vld [vmem:[%s1422 + $0x319] sm:$0xff]
  %v1683 = vld [vmem:[%s1422 + $0x321] sm:$0xff]
  %v1684 = vld [vmem:[%s1 + $0x7] sm:$0x1]
  %v1685 = vlaneseq
  %v1686 = vshrl.u32 %v1685, 7
  %v1687 = vsub.s32 0, %v1686
  %v1688 = vrot.slane %v1684, %v1687
  %v1689 = vmul.f32 %v1620, %v1688
  %v1690 = vmul.f32 %v1621, %v1688
  %v1691 = vmul.f32 %v1622, %v1688
  %v1692 = vmul.f32 %v1623, %v1688
  %v1693 = vmul.f32 %v1624, %v1688
  %v1694 = vmul.f32 %v1625, %v1688
  %v1695 = vmul.f32 %v1626, %v1688
  %v1696 = vmul.f32 %v1627, %v1688
  %v1697 = vmul.f32 %v1628, %v1688
  %v1698 = vmul.f32 %v1629, %v1688
  %v1699 = vmul.f32 %v1630, %v1688
  %v1700 = vmul.f32 %v1631, %v1688
  %v1701 = vmul.f32 %v1632, %v1688
  %v1702 = vmul.f32 %v1633, %v1688
  %v1703 = vmul.f32 %v1634, %v1688
  %v1704 = vmul.f32 %v1635, %v1688
  %v1705 = vmul.f32 %v1636, %v1688
  %v1706 = vmul.f32 %v1637, %v1688
  %v1707 = vmul.f32 %v1638, %v1688
  %v1708 = vmul.f32 %v1639, %v1688
  %v1709 = vmul.f32 %v1640, %v1688
  %v1710 = vmul.f32 %v1641, %v1688
  %v1711 = vmul.f32 %v1642, %v1688
  %v1712 = vmul.f32 %v1643, %v1688
  %v1713 = vmul.f32 %v1644, %v1688
  %v1714 = vmul.f32 %v1645, %v1688
  %v1715 = vmul.f32 %v1646, %v1688
  %v1716 = vmul.f32 %v1647, %v1688
  %v1717 = vmul.f32 %v1648, %v1688
  %v1718 = vmul.f32 %v1649, %v1688
  %v1719 = vmul.f32 %v1650, %v1688
  %v1720 = vmul.f32 %v1651, %v1688
  %v1721 = vmul.f32 %v1652, %v1688
  %v1722 = vmul.f32 %v1653, %v1688
  %v1723 = vmul.f32 %v1654, %v1688
  %v1724 = vmul.f32 %v1655, %v1688
  %v1725 = vmul.f32 %v1656, %v1688
  %v1726 = vmul.f32 %v1657, %v1688
  %v1727 = vmul.f32 %v1658, %v1688
  %v1728 = vmul.f32 %v1659, %v1688
  %v1729 = vmul.f32 %v1660, %v1688
  %v1730 = vmul.f32 %v1661, %v1688
  %v1731 = vmul.f32 %v1662, %v1688
  %v1732 = vmul.f32 %v1663, %v1688
  %v1733 = vmul.f32 %v1664, %v1688
  %v1734 = vmul.f32 %v1665, %v1688
  %v1735 = vmul.f32 %v1666, %v1688
  %v1736 = vmul.f32 %v1667, %v1688
  %v1737 = vmul.f32 %v1668, %v1688
  %v1738 = vmul.f32 %v1669, %v1688
  %v1739 = vmul.f32 %v1670, %v1688
  %v1740 = vmul.f32 %v1671, %v1688
  %v1741 = vmul.f32 %v1672, %v1688
  %v1742 = vmul.f32 %v1673, %v1688
  %v1743 = vmul.f32 %v1674, %v1688
  %v1744 = vmul.f32 %v1675, %v1688
  %v1745 = vmul.f32 %v1676, %v1688
  %v1746 = vmul.f32 %v1677, %v1688
  %v1747 = vmul.f32 %v1678, %v1688
  %v1748 = vmul.f32 %v1679, %v1688
  %v1749 = vmul.f32 %v1680, %v1688
  %v1750 = vmul.f32 %v1681, %v1688
  %v1751 = vmul.f32 %v1682, %v1688
  %v1752 = vmul.f32 %v1683, %v1688
  %v1753 = vadd.f32 %v1556, %v1689
  %v1754 = vadd.f32 %v1557, %v1690
  %v1755 = vadd.f32 %v1558, %v1691
  %v1756 = vadd.f32 %v1559, %v1692
  %v1757 = vadd.f32 %v1560, %v1693
  %v1758 = vadd.f32 %v1561, %v1694
  %v1759 = vadd.f32 %v1562, %v1695
  %v1760 = vadd.f32 %v1563, %v1696
  %v1761 = vadd.f32 %v1564, %v1697
  %v1762 = vadd.f32 %v1565, %v1698
  %v1763 = vadd.f32 %v1566, %v1699
  %v1764 = vadd.f32 %v1567, %v1700
  %v1765 = vadd.f32 %v1568, %v1701
  %v1766 = vadd.f32 %v1569, %v1702
  %v1767 = vadd.f32 %v1570, %v1703
  %v1768 = vadd.f32 %v1571, %v1704
  %v1769 = vadd.f32 %v1572, %v1705
  %v1770 = vadd.f32 %v1573, %v1706
  %v1771 = vadd.f32 %v1574, %v1707
  %v1772 = vadd.f32 %v1575, %v1708
  %v1773 = vadd.f32 %v1576, %v1709
  %v1774 = vadd.f32 %v1577, %v1710
  %v1775 = vadd.f32 %v1578, %v1711
  %v1776 = vadd.f32 %v1579, %v1712
  %v1777 = vadd.f32 %v1580, %v1713
  %v1778 = vadd.f32 %v1581, %v1714
  %v1779 = vadd.f32 %v1582, %v1715
  %v1780 = vadd.f32 %v1583, %v1716
  %v1781 = vadd.f32 %v1584, %v1717
  %v1782 = vadd.f32 %v1585, %v1718
  %v1783 = vadd.f32 %v1586, %v1719
  %v1784 = vadd.f32 %v1587, %v1720
  %v1785 = vadd.f32 %v1588, %v1721
  %v1786 = vadd.f32 %v1589, %v1722
  %v1787 = vadd.f32 %v1590, %v1723
  %v1788 = vadd.f32 %v1591, %v1724
  %v1789 = vadd.f32 %v1592, %v1725
  %v1790 = vadd.f32 %v1593, %v1726
  %v1791 = vadd.f32 %v1594, %v1727
  %v1792 = vadd.f32 %v1595, %v1728
  %v1793 = vadd.f32 %v1596, %v1729
  %v1794 = vadd.f32 %v1597, %v1730
  %v1795 = vadd.f32 %v1598, %v1731
  %v1796 = vadd.f32 %v1599, %v1732
  %v1797 = vadd.f32 %v1600, %v1733
  %v1798 = vadd.f32 %v1601, %v1734
  %v1799 = vadd.f32 %v1602, %v1735
  %v1800 = vadd.f32 %v1603, %v1736
  %v1801 = vadd.f32 %v1604, %v1737
  %v1802 = vadd.f32 %v1605, %v1738
  %v1803 = vadd.f32 %v1606, %v1739
  %v1804 = vadd.f32 %v1607, %v1740
  %v1805 = vadd.f32 %v1608, %v1741
  %v1806 = vadd.f32 %v1609, %v1742
  %v1807 = vadd.f32 %v1610, %v1743
  %v1808 = vadd.f32 %v1611, %v1744
  %v1809 = vadd.f32 %v1612, %v1745
  %v1810 = vadd.f32 %v1613, %v1746
  %v1811 = vadd.f32 %v1614, %v1747
  %v1812 = vadd.f32 %v1615, %v1748
  %v1813 = vadd.f32 %v1616, %v1749
  %v1814 = vadd.f32 %v1617, %v1750
  %v1815 = vadd.f32 %v1618, %v1751
  %v1816 = vadd.f32 %v1619, %v1752
  %v1817 = vld [vmem:[%s1422 + $0x2] sm:$0xff]
  %v1818 = vld [vmem:[%s1422 + $0xa] sm:$0xff]
  %v1819 = vld [vmem:[%s1422 + $0x1a] sm:$0xff]
  %v1820 = vld [vmem:[%s1422 + $0x22] sm:$0xff]
  %v1821 = vld [vmem:[%s1422 + $0x32] sm:$0xff]
  %v1822 = vld [vmem:[%s1422 + $0x3a] sm:$0xff]
  %v1823 = vld [vmem:[%s1422 + $0x4a] sm:$0xff]
  %v1824 = vld [vmem:[%s1422 + $0x52] sm:$0xff]
  %v1825 = vld [vmem:[%s1422 + $0x62] sm:$0xff]
  %v1826 = vld [vmem:[%s1422 + $0x6a] sm:$0xff]
  %v1827 = vld [vmem:[%s1422 + $0x7a] sm:$0xff]
  %v1828 = vld [vmem:[%s1422 + $0x82] sm:$0xff]
  %v1829 = vld [vmem:[%s1422 + $0x92] sm:$0xff]
  %v1830 = vld [vmem:[%s1422 + $0x9a] sm:$0xff]
  %v1831 = vld [vmem:[%s1422 + $0xaa] sm:$0xff]
  %v1832 = vld [vmem:[%s1422 + $0xb2] sm:$0xff]
  %v1833 = vld [vmem:[%s1422 + $0xc2] sm:$0xff]
  %v1834 = vld [vmem:[%s1422 + $0xca] sm:$0xff]
  %v1835 = vld [vmem:[%s1422 + $0xda] sm:$0xff]
  %v1836 = vld [vmem:[%s1422 + $0xe2] sm:$0xff]
  %v1837 = vld [vmem:[%s1422 + $0xf2] sm:$0xff]
  %v1838 = vld [vmem:[%s1422 + $0xfa] sm:$0xff]
  %v1839 = vld [vmem:[%s1422 + $0x10a] sm:$0xff]
  %v1840 = vld [vmem:[%s1422 + $0x112] sm:$0xff]
  %v1841 = vld [vmem:[%s1422 + $0x122] sm:$0xff]
  %v1842 = vld [vmem:[%s1422 + $0x12a] sm:$0xff]
  %v1843 = vld [vmem:[%s1422 + $0x13a] sm:$0xff]
  %v1844 = vld [vmem:[%s1422 + $0x142] sm:$0xff]
  %v1845 = vld [vmem:[%s1422 + $0x152] sm:$0xff]
  %v1846 = vld [vmem:[%s1422 + $0x15a] sm:$0xff]
  %v1847 = vld [vmem:[%s1422 + $0x16a] sm:$0xff]
  %v1848 = vld [vmem:[%s1422 + $0x172] sm:$0xff]
  %v1849 = vld [vmem:[%s1422 + $0x1b2] sm:$0xff]
  %v1850 = vld [vmem:[%s1422 + $0x1ba] sm:$0xff]
  %v1851 = vld [vmem:[%s1422 + $0x1ca] sm:$0xff]
  %v1852 = vld [vmem:[%s1422 + $0x1d2] sm:$0xff]
  %v1853 = vld [vmem:[%s1422 + $0x1e2] sm:$0xff]
  %v1854 = vld [vmem:[%s1422 + $0x1ea] sm:$0xff]
  %v1855 = vld [vmem:[%s1422 + $0x1fa] sm:$0xff]
  %v1856 = vld [vmem:[%s1422 + $0x202] sm:$0xff]
  %v1857 = vld [vmem:[%s1422 + $0x212] sm:$0xff]
  %v1858 = vld [vmem:[%s1422 + $0x21a] sm:$0xff]
  %v1859 = vld [vmem:[%s1422 + $0x22a] sm:$0xff]
  %v1860 = vld [vmem:[%s1422 + $0x232] sm:$0xff]
  %v1861 = vld [vmem:[%s1422 + $0x242] sm:$0xff]
  %v1862 = vld [vmem:[%s1422 + $0x24a] sm:$0xff]
  %v1863 = vld [vmem:[%s1422 + $0x25a] sm:$0xff]
  %v1864 = vld [vmem:[%s1422 + $0x262] sm:$0xff]
  %v1865 = vld [vmem:[%s1422 + $0x272] sm:$0xff]
  %v1866 = vld [vmem:[%s1422 + $0x27a] sm:$0xff]
  %v1867 = vld [vmem:[%s1422 + $0x28a] sm:$0xff]
  %v1868 = vld [vmem:[%s1422 + $0x292] sm:$0xff]
  %v1869 = vld [vmem:[%s1422 + $0x2a2] sm:$0xff]
  %v1870 = vld [vmem:[%s1422 + $0x2aa] sm:$0xff]
  %v1871 = vld [vmem:[%s1422 + $0x2ba] sm:$0xff]
  %v1872 = vld [vmem:[%s1422 + $0x2c2] sm:$0xff]
  %v1873 = vld [vmem:[%s1422 + $0x2d2] sm:$0xff]
  %v1874 = vld [vmem:[%s1422 + $0x2da] sm:$0xff]
  %v1875 = vld [vmem:[%s1422 + $0x2ea] sm:$0xff]
  %v1876 = vld [vmem:[%s1422 + $0x2f2] sm:$0xff]
  %v1877 = vld [vmem:[%s1422 + $0x302] sm:$0xff]
  %v1878 = vld [vmem:[%s1422 + $0x30a] sm:$0xff]
  %v1879 = vld [vmem:[%s1422 + $0x31a] sm:$0xff]
  %v1880 = vld [vmem:[%s1422 + $0x322] sm:$0xff]
  %v1881 = vld [vmem:[%s1 + $0x8] sm:$0x1]
  %v1882 = vlaneseq
  %v1883 = vshrl.u32 %v1882, 7
  %v1884 = vsub.s32 0, %v1883
  %v1885 = vrot.slane %v1881, %v1884
  %v1886 = vmul.f32 %v1817, %v1885
  %v1887 = vmul.f32 %v1818, %v1885
  %v1888 = vmul.f32 %v1819, %v1885
  %v1889 = vmul.f32 %v1820, %v1885
  %v1890 = vmul.f32 %v1821, %v1885
  %v1891 = vmul.f32 %v1822, %v1885
  %v1892 = vmul.f32 %v1823, %v1885
  %v1893 = vmul.f32 %v1824, %v1885
  %v1894 = vmul.f32 %v1825, %v1885
  %v1895 = vmul.f32 %v1826, %v1885
  %v1896 = vmul.f32 %v1827, %v1885
  %v1897 = vmul.f32 %v1828, %v1885
  %v1898 = vmul.f32 %v1829, %v1885
  %v1899 = vmul.f32 %v1830, %v1885
  %v1900 = vmul.f32 %v1831, %v1885
  %v1901 = vmul.f32 %v1832, %v1885
  %v1902 = vmul.f32 %v1833, %v1885
  %v1903 = vmul.f32 %v1834, %v1885
  %v1904 = vmul.f32 %v1835, %v1885
  %v1905 = vmul.f32 %v1836, %v1885
  %v1906 = vmul.f32 %v1837, %v1885
  %v1907 = vmul.f32 %v1838, %v1885
  %v1908 = vmul.f32 %v1839, %v1885
  %v1909 = vmul.f32 %v1840, %v1885
  %v1910 = vmul.f32 %v1841, %v1885
  %v1911 = vmul.f32 %v1842, %v1885
  %v1912 = vmul.f32 %v1843, %v1885
  %v1913 = vmul.f32 %v1844, %v1885
  %v1914 = vmul.f32 %v1845, %v1885
  %v1915 = vmul.f32 %v1846, %v1885
  %v1916 = vmul.f32 %v1847, %v1885
  %v1917 = vmul.f32 %v1848, %v1885
  %v1918 = vmul.f32 %v1849, %v1885
  %v1919 = vmul.f32 %v1850, %v1885
  %v1920 = vmul.f32 %v1851, %v1885
  %v1921 = vmul.f32 %v1852, %v1885
  %v1922 = vmul.f32 %v1853, %v1885
  %v1923 = vmul.f32 %v1854, %v1885
  %v1924 = vmul.f32 %v1855, %v1885
  %v1925 = vmul.f32 %v1856, %v1885
  %v1926 = vmul.f32 %v1857, %v1885
  %v1927 = vmul.f32 %v1858, %v1885
  %v1928 = vmul.f32 %v1859, %v1885
  %v1929 = vmul.f32 %v1860, %v1885
  %v1930 = vmul.f32 %v1861, %v1885
  %v1931 = vmul.f32 %v1862, %v1885
  %v1932 = vmul.f32 %v1863, %v1885
  %v1933 = vmul.f32 %v1864, %v1885
  %v1934 = vmul.f32 %v1865, %v1885
  %v1935 = vmul.f32 %v1866, %v1885
  %v1936 = vmul.f32 %v1867, %v1885
  %v1937 = vmul.f32 %v1868, %v1885
  %v1938 = vmul.f32 %v1869, %v1885
  %v1939 = vmul.f32 %v1870, %v1885
  %v1940 = vmul.f32 %v1871, %v1885
  %v1941 = vmul.f32 %v1872, %v1885
  %v1942 = vmul.f32 %v1873, %v1885
  %v1943 = vmul.f32 %v1874, %v1885
  %v1944 = vmul.f32 %v1875, %v1885
  %v1945 = vmul.f32 %v1876, %v1885
  %v1946 = vmul.f32 %v1877, %v1885
  %v1947 = vmul.f32 %v1878, %v1885
  %v1948 = vmul.f32 %v1879, %v1885
  %v1949 = vmul.f32 %v1880, %v1885
  %v1950 = vadd.f32 %v1753, %v1886
  %v1951 = vadd.f32 %v1754, %v1887
  %v1952 = vadd.f32 %v1755, %v1888
  %v1953 = vadd.f32 %v1756, %v1889
  %v1954 = vadd.f32 %v1757, %v1890
  %v1955 = vadd.f32 %v1758, %v1891
  %v1956 = vadd.f32 %v1759, %v1892
  %v1957 = vadd.f32 %v1760, %v1893
  %v1958 = vadd.f32 %v1761, %v1894
  %v1959 = vadd.f32 %v1762, %v1895
  %v1960 = vadd.f32 %v1763, %v1896
  %v1961 = vadd.f32 %v1764, %v1897
  %v1962 = vadd.f32 %v1765, %v1898
  %v1963 = vadd.f32 %v1766, %v1899
  %v1964 = vadd.f32 %v1767, %v1900
  %v1965 = vadd.f32 %v1768, %v1901
  %v1966 = vadd.f32 %v1769, %v1902
  %v1967 = vadd.f32 %v1770, %v1903
  %v1968 = vadd.f32 %v1771, %v1904
  %v1969 = vadd.f32 %v1772, %v1905
  %v1970 = vadd.f32 %v1773, %v1906
  %v1971 = vadd.f32 %v1774, %v1907
  %v1972 = vadd.f32 %v1775, %v1908
  %v1973 = vadd.f32 %v1776, %v1909
  %v1974 = vadd.f32 %v1777, %v1910
  %v1975 = vadd.f32 %v1778, %v1911
  %v1976 = vadd.f32 %v1779, %v1912
  %v1977 = vadd.f32 %v1780, %v1913
  %v1978 = vadd.f32 %v1781, %v1914
  %v1979 = vadd.f32 %v1782, %v1915
  %v1980 = vadd.f32 %v1783, %v1916
  %v1981 = vadd.f32 %v1784, %v1917
  %v1982 = vadd.f32 %v1785, %v1918
  %v1983 = vadd.f32 %v1786, %v1919
  %v1984 = vadd.f32 %v1787, %v1920
  %v1985 = vadd.f32 %v1788, %v1921
  %v1986 = vadd.f32 %v1789, %v1922
  %v1987 = vadd.f32 %v1790, %v1923
  %v1988 = vadd.f32 %v1791, %v1924
  %v1989 = vadd.f32 %v1792, %v1925
  %v1990 = vadd.f32 %v1793, %v1926
  %v1991 = vadd.f32 %v1794, %v1927
  %v1992 = vadd.f32 %v1795, %v1928
  %v1993 = vadd.f32 %v1796, %v1929
  %v1994 = vadd.f32 %v1797, %v1930
  %v1995 = vadd.f32 %v1798, %v1931
  %v1996 = vadd.f32 %v1799, %v1932
  %v1997 = vadd.f32 %v1800, %v1933
  %v1998 = vadd.f32 %v1801, %v1934
  %v1999 = vadd.f32 %v1802, %v1935
  %v2000 = vadd.f32 %v1803, %v1936
  %v2001 = vadd.f32 %v1804, %v1937
  %v2002 = vadd.f32 %v1805, %v1938
  %v2003 = vadd.f32 %v1806, %v1939
  %v2004 = vadd.f32 %v1807, %v1940
  %v2005 = vadd.f32 %v1808, %v1941
  %v2006 = vadd.f32 %v1809, %v1942
  %v2007 = vadd.f32 %v1810, %v1943
  %v2008 = vadd.f32 %v1811, %v1944
  %v2009 = vadd.f32 %v1812, %v1945
  %v2010 = vadd.f32 %v1813, %v1946
  %v2011 = vadd.f32 %v1814, %v1947
  %v2012 = vadd.f32 %v1815, %v1948
  %v2013 = vadd.f32 %v1816, %v1949
  %v2014 = vsel %vm23, %v1950, 0.0
  %v2015 = vsel %vm23, %v1951, 0.0
  %v2016 = vadd.f32 %v2014, %v2015
  %v2017 = vsel %vm23, %v1952, 0.0
  %v2018 = vadd.f32 %v2016, %v2017
  %v2019 = vsel %vm23, %v1953, 0.0
  %v2020 = vadd.f32 %v2018, %v2019
  %v2021 = vsel %vm23, %v1954, 0.0
  %v2022 = vadd.f32 %v2020, %v2021
  %v2023 = vsel %vm23, %v1955, 0.0
  %v2024 = vadd.f32 %v2022, %v2023
  %v2025 = vsel %vm23, %v1956, 0.0
  %v2026 = vadd.f32 %v2024, %v2025
  %v2027 = vsel %vm23, %v1957, 0.0
  %v2028 = vadd.f32 %v2026, %v2027
  %v2029 = vsel %vm23, %v1958, 0.0
  %v2030 = vadd.f32 %v2028, %v2029
  %v2031 = vsel %vm23, %v1959, 0.0
  %v2032 = vadd.f32 %v2030, %v2031
  %v2033 = vsel %vm23, %v1960, 0.0
  %v2034 = vadd.f32 %v2032, %v2033
  %v2035 = vsel %vm23, %v1961, 0.0
  %v2036 = vadd.f32 %v2034, %v2035
  %v2037 = vsel %vm23, %v1962, 0.0
  %v2038 = vadd.f32 %v2036, %v2037
  %v2039 = vsel %vm23, %v1963, 0.0
  %v2040 = vadd.f32 %v2038, %v2039
  %v2041 = vsel %vm23, %v1964, 0.0
  %v2042 = vadd.f32 %v2040, %v2041
  %v2043 = vsel %vm23, %v1965, 0.0
  %v2044 = vadd.f32 %v2042, %v2043
  %v2045 = vsel %vm23, %v1966, 0.0
  %v2046 = vadd.f32 %v2044, %v2045
  %v2047 = vsel %vm23, %v1967, 0.0
  %v2048 = vadd.f32 %v2046, %v2047
  %v2049 = vsel %vm23, %v1968, 0.0
  %v2050 = vadd.f32 %v2048, %v2049
  %v2051 = vsel %vm23, %v1969, 0.0
  %v2052 = vadd.f32 %v2050, %v2051
  %v2053 = vsel %vm23, %v1970, 0.0
  %v2054 = vadd.f32 %v2052, %v2053
  %v2055 = vsel %vm23, %v1971, 0.0
  %v2056 = vadd.f32 %v2054, %v2055
  %v2057 = vsel %vm23, %v1972, 0.0
  %v2058 = vadd.f32 %v2056, %v2057
  %v2059 = vsel %vm23, %v1973, 0.0
  %v2060 = vadd.f32 %v2058, %v2059
  %v2061 = vsel %vm23, %v1974, 0.0
  %v2062 = vadd.f32 %v2060, %v2061
  %v2063 = vsel %vm23, %v1975, 0.0
  %v2064 = vadd.f32 %v2062, %v2063
  %v2065 = vsel %vm23, %v1976, 0.0
  %v2066 = vadd.f32 %v2064, %v2065
  %v2067 = vsel %vm23, %v1977, 0.0
  %v2068 = vadd.f32 %v2066, %v2067
  %v2069 = vsel %vm23, %v1978, 0.0
  %v2070 = vadd.f32 %v2068, %v2069
  %v2071 = vsel %vm23, %v1979, 0.0
  %v2072 = vadd.f32 %v2070, %v2071
  %v2073 = vsel %vm23, %v1980, 0.0
  %v2074 = vadd.f32 %v2072, %v2073
  %v2075 = vsel %vm23, %v1981, 0.0
  %v2076 = vadd.f32 %v2074, %v2075
  %v2077 = vsel %vm23, %v1982, 0.0
  %v2078 = vadd.f32 %v2076, %v2077
  %v2079 = vsel %vm23, %v1983, 0.0
  %v2080 = vadd.f32 %v2078, %v2079
  %v2081 = vsel %vm23, %v1984, 0.0
  %v2082 = vadd.f32 %v2080, %v2081
  %v2083 = vsel %vm23, %v1985, 0.0
  %v2084 = vadd.f32 %v2082, %v2083
  %v2085 = vsel %vm23, %v1986, 0.0
  %v2086 = vadd.f32 %v2084, %v2085
  %v2087 = vsel %vm23, %v1987, 0.0
  %v2088 = vadd.f32 %v2086, %v2087
  %v2089 = vsel %vm23, %v1988, 0.0
  %v2090 = vadd.f32 %v2088, %v2089
  %v2091 = vsel %vm23, %v1989, 0.0
  %v2092 = vadd.f32 %v2090, %v2091
  %v2093 = vsel %vm23, %v1990, 0.0
  %v2094 = vadd.f32 %v2092, %v2093
  %v2095 = vsel %vm23, %v1991, 0.0
  %v2096 = vadd.f32 %v2094, %v2095
  %v2097 = vsel %vm23, %v1992, 0.0
  %v2098 = vadd.f32 %v2096, %v2097
  %v2099 = vsel %vm23, %v1993, 0.0
  %v2100 = vadd.f32 %v2098, %v2099
  %v2101 = vsel %vm23, %v1994, 0.0
  %v2102 = vadd.f32 %v2100, %v2101
  %v2103 = vsel %vm23, %v1995, 0.0
  %v2104 = vadd.f32 %v2102, %v2103
  %v2105 = vsel %vm23, %v1996, 0.0
  %v2106 = vadd.f32 %v2104, %v2105
  %v2107 = vsel %vm23, %v1997, 0.0
  %v2108 = vadd.f32 %v2106, %v2107
  %v2109 = vsel %vm23, %v1998, 0.0
  %v2110 = vadd.f32 %v2108, %v2109
  %v2111 = vsel %vm23, %v1999, 0.0
  %v2112 = vadd.f32 %v2110, %v2111
  %v2113 = vsel %vm23, %v2000, 0.0
  %v2114 = vadd.f32 %v2112, %v2113
  %v2115 = vsel %vm23, %v2001, 0.0
  %v2116 = vadd.f32 %v2114, %v2115
  %v2117 = vsel %vm23, %v2002, 0.0
  %v2118 = vadd.f32 %v2116, %v2117
  %v2119 = vsel %vm23, %v2003, 0.0
  %v2120 = vadd.f32 %v2118, %v2119
  %v2121 = vsel %vm23, %v2004, 0.0
  %v2122 = vadd.f32 %v2120, %v2121
  %v2123 = vsel %vm23, %v2005, 0.0
  %v2124 = vadd.f32 %v2122, %v2123
  %v2125 = vsel %vm23, %v2006, 0.0
  %v2126 = vadd.f32 %v2124, %v2125
  %v2127 = vsel %vm23, %v2007, 0.0
  %v2128 = vadd.f32 %v2126, %v2127
  %v2129 = vsel %vm23, %v2008, 0.0
  %v2130 = vadd.f32 %v2128, %v2129
  %v2131 = vsel %vm23, %v2009, 0.0
  %v2132 = vadd.f32 %v2130, %v2131
  %v2133 = vsel %vm23, %v2010, 0.0
  %v2134 = vadd.f32 %v2132, %v2133
  %v2135 = vsel %vm23, %v2011, 0.0
  %v2136 = vadd.f32 %v2134, %v2135
  %v2137 = vsel %vm23, %v2012, 0.0
  %v2138 = vadd.f32 %v2136, %v2137
  %v2139 = vsel %vm23, %v2013, 0.0
  %v2140 = vadd.f32 %v2138, %v2139
  %v2141 = vrot.slane %v2140, 4
  %v2142 = vadd.f32 %v2140, %v2141
  %v2143 = vrot.slane %v2142, 2
  %v2144 = vadd.f32 %v2142, %v2143
  %v2145 = vrot.slane %v2144, 1
  %v2146 = vadd.f32 %v2144, %v2145
  %v2147 = vmul.f32 %v2146, 0.001953125
  %v2148 = vmul.f32 %v1950, %v1950
  %v2149 = vmul.f32 %v1951, %v1951
  %v2150 = vmul.f32 %v1952, %v1952
  %v2151 = vmul.f32 %v1953, %v1953
  %v2152 = vmul.f32 %v1954, %v1954
  %v2153 = vmul.f32 %v1955, %v1955
  %v2154 = vmul.f32 %v1956, %v1956
  %v2155 = vmul.f32 %v1957, %v1957
  %v2156 = vmul.f32 %v1958, %v1958
  %v2157 = vmul.f32 %v1959, %v1959
  %v2158 = vmul.f32 %v1960, %v1960
  %v2159 = vmul.f32 %v1961, %v1961
  %v2160 = vmul.f32 %v1962, %v1962
  %v2161 = vmul.f32 %v1963, %v1963
  %v2162 = vmul.f32 %v1964, %v1964
  %v2163 = vmul.f32 %v1965, %v1965
  %v2164 = vmul.f32 %v1966, %v1966
  %v2165 = vmul.f32 %v1967, %v1967
  %v2166 = vmul.f32 %v1968, %v1968
  %v2167 = vmul.f32 %v1969, %v1969
  %v2168 = vmul.f32 %v1970, %v1970
  %v2169 = vmul.f32 %v1971, %v1971
  %v2170 = vmul.f32 %v1972, %v1972
  %v2171 = vmul.f32 %v1973, %v1973
  %v2172 = vmul.f32 %v1974, %v1974
  %v2173 = vmul.f32 %v1975, %v1975
  %v2174 = vmul.f32 %v1976, %v1976
  %v2175 = vmul.f32 %v1977, %v1977
  %v2176 = vmul.f32 %v1978, %v1978
  %v2177 = vmul.f32 %v1979, %v1979
  %v2178 = vmul.f32 %v1980, %v1980
  %v2179 = vmul.f32 %v1981, %v1981
  %v2180 = vmul.f32 %v1982, %v1982
  %v2181 = vmul.f32 %v1983, %v1983
  %v2182 = vmul.f32 %v1984, %v1984
  %v2183 = vmul.f32 %v1985, %v1985
  %v2184 = vmul.f32 %v1986, %v1986
  %v2185 = vmul.f32 %v1987, %v1987
  %v2186 = vmul.f32 %v1988, %v1988
  %v2187 = vmul.f32 %v1989, %v1989
  %v2188 = vmul.f32 %v1990, %v1990
  %v2189 = vmul.f32 %v1991, %v1991
  %v2190 = vmul.f32 %v1992, %v1992
  %v2191 = vmul.f32 %v1993, %v1993
  %v2192 = vmul.f32 %v1994, %v1994
  %v2193 = vmul.f32 %v1995, %v1995
  %v2194 = vmul.f32 %v1996, %v1996
  %v2195 = vmul.f32 %v1997, %v1997
  %v2196 = vmul.f32 %v1998, %v1998
  %v2197 = vmul.f32 %v1999, %v1999
  %v2198 = vmul.f32 %v2000, %v2000
  %v2199 = vmul.f32 %v2001, %v2001
  %v2200 = vmul.f32 %v2002, %v2002
  %v2201 = vmul.f32 %v2003, %v2003
  %v2202 = vmul.f32 %v2004, %v2004
  %v2203 = vmul.f32 %v2005, %v2005
  %v2204 = vmul.f32 %v2006, %v2006
  %v2205 = vmul.f32 %v2007, %v2007
  %v2206 = vmul.f32 %v2008, %v2008
  %v2207 = vmul.f32 %v2009, %v2009
  %v2208 = vmul.f32 %v2010, %v2010
  %v2209 = vmul.f32 %v2011, %v2011
  %v2210 = vmul.f32 %v2012, %v2012
  %v2211 = vmul.f32 %v2013, %v2013
  %v2212 = vsel %vm23, %v2148, 0.0
  %v2213 = vsel %vm23, %v2149, 0.0
  %v2214 = vadd.f32 %v2212, %v2213
  %v2215 = vsel %vm23, %v2150, 0.0
  %v2216 = vadd.f32 %v2214, %v2215
  %v2217 = vsel %vm23, %v2151, 0.0
  %v2218 = vadd.f32 %v2216, %v2217
  %v2219 = vsel %vm23, %v2152, 0.0
  %v2220 = vadd.f32 %v2218, %v2219
  %v2221 = vsel %vm23, %v2153, 0.0
  %v2222 = vadd.f32 %v2220, %v2221
  %v2223 = vsel %vm23, %v2154, 0.0
  %v2224 = vadd.f32 %v2222, %v2223
  %v2225 = vsel %vm23, %v2155, 0.0
  %v2226 = vadd.f32 %v2224, %v2225
  %v2227 = vsel %vm23, %v2156, 0.0
  %v2228 = vadd.f32 %v2226, %v2227
  %v2229 = vsel %vm23, %v2157, 0.0
  %v2230 = vadd.f32 %v2228, %v2229
  %v2231 = vsel %vm23, %v2158, 0.0
  %v2232 = vadd.f32 %v2230, %v2231
  %v2233 = vsel %vm23, %v2159, 0.0
  %v2234 = vadd.f32 %v2232, %v2233
  %v2235 = vsel %vm23, %v2160, 0.0
  %v2236 = vadd.f32 %v2234, %v2235
  %v2237 = vsel %vm23, %v2161, 0.0
  %v2238 = vadd.f32 %v2236, %v2237
  %v2239 = vsel %vm23, %v2162, 0.0
  %v2240 = vadd.f32 %v2238, %v2239
  %v2241 = vsel %vm23, %v2163, 0.0
  %v2242 = vadd.f32 %v2240, %v2241
  %v2243 = vsel %vm23, %v2164, 0.0
  %v2244 = vadd.f32 %v2242, %v2243
  %v2245 = vsel %vm23, %v2165, 0.0
  %v2246 = vadd.f32 %v2244, %v2245
  %v2247 = vsel %vm23, %v2166, 0.0
  %v2248 = vadd.f32 %v2246, %v2247
  %v2249 = vsel %vm23, %v2167, 0.0
  %v2250 = vadd.f32 %v2248, %v2249
  %v2251 = vsel %vm23, %v2168, 0.0
  %v2252 = vadd.f32 %v2250, %v2251
  %v2253 = vsel %vm23, %v2169, 0.0
  %v2254 = vadd.f32 %v2252, %v2253
  %v2255 = vsel %vm23, %v2170, 0.0
  %v2256 = vadd.f32 %v2254, %v2255
  %v2257 = vsel %vm23, %v2171, 0.0
  %v2258 = vadd.f32 %v2256, %v2257
  %v2259 = vsel %vm23, %v2172, 0.0
  %v2260 = vadd.f32 %v2258, %v2259
  %v2261 = vsel %vm23, %v2173, 0.0
  %v2262 = vadd.f32 %v2260, %v2261
  %v2263 = vsel %vm23, %v2174, 0.0
  %v2264 = vadd.f32 %v2262, %v2263
  %v2265 = vsel %vm23, %v2175, 0.0
  %v2266 = vadd.f32 %v2264, %v2265
  %v2267 = vsel %vm23, %v2176, 0.0
  %v2268 = vadd.f32 %v2266, %v2267
  %v2269 = vsel %vm23, %v2177, 0.0
  %v2270 = vadd.f32 %v2268, %v2269
  %v2271 = vsel %vm23, %v2178, 0.0
  %v2272 = vadd.f32 %v2270, %v2271
  %v2273 = vsel %vm23, %v2179, 0.0
  %v2274 = vadd.f32 %v2272, %v2273
  %v2275 = vsel %vm23, %v2180, 0.0
  %v2276 = vadd.f32 %v2274, %v2275
  %v2277 = vsel %vm23, %v2181, 0.0
  %v2278 = vadd.f32 %v2276, %v2277
  %v2279 = vsel %vm23, %v2182, 0.0
  %v2280 = vadd.f32 %v2278, %v2279
  %v2281 = vsel %vm23, %v2183, 0.0
  %v2282 = vadd.f32 %v2280, %v2281
  %v2283 = vsel %vm23, %v2184, 0.0
  %v2284 = vadd.f32 %v2282, %v2283
  %v2285 = vsel %vm23, %v2185, 0.0
  %v2286 = vadd.f32 %v2284, %v2285
  %v2287 = vsel %vm23, %v2186, 0.0
  %v2288 = vadd.f32 %v2286, %v2287
  %v2289 = vsel %vm23, %v2187, 0.0
  %v2290 = vadd.f32 %v2288, %v2289
  %v2291 = vsel %vm23, %v2188, 0.0
  %v2292 = vadd.f32 %v2290, %v2291
  %v2293 = vsel %vm23, %v2189, 0.0
  %v2294 = vadd.f32 %v2292, %v2293
  %v2295 = vsel %vm23, %v2190, 0.0
  %v2296 = vadd.f32 %v2294, %v2295
  %v2297 = vsel %vm23, %v2191, 0.0
  %v2298 = vadd.f32 %v2296, %v2297
  %v2299 = vsel %vm23, %v2192, 0.0
  %v2300 = vadd.f32 %v2298, %v2299
  %v2301 = vsel %vm23, %v2193, 0.0
  %v2302 = vadd.f32 %v2300, %v2301
  %v2303 = vsel %vm23, %v2194, 0.0
  %v2304 = vadd.f32 %v2302, %v2303
  %v2305 = vsel %vm23, %v2195, 0.0
  %v2306 = vadd.f32 %v2304, %v2305
  %v2307 = vsel %vm23, %v2196, 0.0
  %v2308 = vadd.f32 %v2306, %v2307
  %v2309 = vsel %vm23, %v2197, 0.0
  %v2310 = vadd.f32 %v2308, %v2309
  %v2311 = vsel %vm23, %v2198, 0.0
  %v2312 = vadd.f32 %v2310, %v2311
  %v2313 = vsel %vm23, %v2199, 0.0
  %v2314 = vadd.f32 %v2312, %v2313
  %v2315 = vsel %vm23, %v2200, 0.0
  %v2316 = vadd.f32 %v2314, %v2315
  %v2317 = vsel %vm23, %v2201, 0.0
  %v2318 = vadd.f32 %v2316, %v2317
  %v2319 = vsel %vm23, %v2202, 0.0
  %v2320 = vadd.f32 %v2318, %v2319
  %v2321 = vsel %vm23, %v2203, 0.0
  %v2322 = vadd.f32 %v2320, %v2321
  %v2323 = vsel %vm23, %v2204, 0.0
  %v2324 = vadd.f32 %v2322, %v2323
  %v2325 = vsel %vm23, %v2205, 0.0
  %v2326 = vadd.f32 %v2324, %v2325
  %v2327 = vsel %vm23, %v2206, 0.0
  %v2328 = vadd.f32 %v2326, %v2327
  %v2329 = vsel %vm23, %v2207, 0.0
  %v2330 = vadd.f32 %v2328, %v2329
  %v2331 = vsel %vm23, %v2208, 0.0
  %v2332 = vadd.f32 %v2330, %v2331
  %v2333 = vsel %vm23, %v2209, 0.0
  %v2334 = vadd.f32 %v2332, %v2333
  %v2335 = vsel %vm23, %v2210, 0.0
  %v2336 = vadd.f32 %v2334, %v2335
  %v2337 = vsel %vm23, %v2211, 0.0
  %v2338 = vadd.f32 %v2336, %v2337
  %v2339 = vrot.slane %v2338, 4
  %v2340 = vadd.f32 %v2338, %v2339
  %v2341 = vrot.slane %v2340, 2
  %v2342 = vadd.f32 %v2340, %v2341
  %v2343 = vrot.slane %v2342, 1
  %v2344 = vadd.f32 %v2342, %v2343
  %v2345 = vmul.f32 %v2344, 0.001953125
  %v2346 = vmul.f32 %v2147, %v2147
  %v2347 = vsub.f32 %v2345, %v2346
  %v2348 = vmax.f32 %v2347, 0.0
  %v2349 = vadd.f32 %v2348, 1e-05
  %v2350 = vrsqrt.pop %v2349
  %v2351 = vld [vmem:[%s2] sm:$0x1]
  %v2352 = vmul.f32 %v2350, %v2351
  %v2353 = vld [vmem:[%s3] sm:$0xff]
  %v2354 = vlaneseq
  %v2355 = vshrl.u32 %v2354, 7
  %v2356 = vsub.s32 0, %v2355
  %v2357 = vrot.slane %v2352, %v2356
  %2359 = vbcast.lane.b32.xlu0 %v2357, 256
  %v2360 = vpop.permute.xlu0 %2359
  %v2361 = vmul.f32 %v2353, %v2360
  %v2363 = vsel %vm23, %v1950, 0
  %v2366 = vsel %vm23, %v1951, 0
  %v2369 = vsel %vm23, %v1952, 0
  %v2372 = vsel %vm23, %v1953, 0
  %v2375 = vsel %vm23, %v1954, 0
  %v2378 = vsel %vm23, %v1955, 0
  %v2381 = vsel %vm23, %v1956, 0
  %v2384 = vsel %vm23, %v1957, 0
  %v2387 = vsel %vm23, %v1958, 0
  %v2390 = vsel %vm23, %v1959, 0
  %v2393 = vsel %vm23, %v1960, 0
  %v2396 = vsel %vm23, %v1961, 0
  %v2399 = vsel %vm23, %v1962, 0
  %v2402 = vsel %vm23, %v1963, 0
  %v2405 = vsel %vm23, %v1964, 0
  %v2408 = vsel %vm23, %v1965, 0
  %v2411 = vsel %vm23, %v1966, 0
  %v2414 = vsel %vm23, %v1967, 0
  %v2417 = vsel %vm23, %v1968, 0
  %v2420 = vsel %vm23, %v1969, 0
  %v2423 = vsel %vm23, %v1970, 0
  %v2426 = vsel %vm23, %v1971, 0
  %v2429 = vsel %vm23, %v1972, 0
  %v2432 = vsel %vm23, %v1973, 0
  %v2435 = vsel %vm23, %v1974, 0
  %v2438 = vsel %vm23, %v1975, 0
  %v2441 = vsel %vm23, %v1976, 0
  %v2444 = vsel %vm23, %v1977, 0
  %v2447 = vsel %vm23, %v1978, 0
  %v2450 = vsel %vm23, %v1979, 0
  %v2453 = vsel %vm23, %v1980, 0
  %v2456 = vsel %vm23, %v1981, 0
  %v2459 = vsel %vm23, %v1982, 0
  %v2462 = vsel %vm23, %v1983, 0
  %v2465 = vsel %vm23, %v1984, 0
  %v2468 = vsel %vm23, %v1985, 0
  %v2471 = vsel %vm23, %v1986, 0
  %v2474 = vsel %vm23, %v1987, 0
  %v2477 = vsel %vm23, %v1988, 0
  %v2480 = vsel %vm23, %v1989, 0
  %v2483 = vsel %vm23, %v1990, 0
  %v2486 = vsel %vm23, %v1991, 0
  %v2489 = vsel %vm23, %v1992, 0
  %v2492 = vsel %vm23, %v1993, 0
  %v2495 = vsel %vm23, %v1994, 0
  %v2498 = vsel %vm23, %v1995, 0
  %v2501 = vsel %vm23, %v1996, 0
  %v2504 = vsel %vm23, %v1997, 0
  %v2507 = vsel %vm23, %v1998, 0
  %v2510 = vsel %vm23, %v1999, 0
  %v2513 = vsel %vm23, %v2000, 0
  %v2516 = vsel %vm23, %v2001, 0
  %v2519 = vsel %vm23, %v2002, 0
  %v2522 = vsel %vm23, %v2003, 0
  %v2525 = vsel %vm23, %v2004, 0
  %v2528 = vsel %vm23, %v2005, 0
  %v2531 = vsel %vm23, %v2006, 0
  %v2534 = vsel %vm23, %v2007, 0
  %v2537 = vsel %vm23, %v2008, 0
  %v2540 = vsel %vm23, %v2009, 0
  %v2543 = vsel %vm23, %v2010, 0
  %v2546 = vsel %vm23, %v2011, 0
  %v2549 = vsel %vm23, %v2012, 0
  %v2552 = vsel %vm23, %v2013, 0
  %2554 = vmatprep.subr.mxu0 0.0
  %2555 = vmatpush1.msra.mxu0 %v2361
  %2556 = vmatprep.subr.mxu0 0.0
  %2557 = vmatpush1.msra.mxu0 0.0
  %2558 = vmatprep.subr.mxu0 0.0
  %2559 = vmatpush1.msra.mxu0 0.0
  %2560 = vmatprep.subr.mxu0 0.0
  %2561 = vmatpush1.msra.mxu0 0.0
  %2562 = vmatprep.subr.mxu0 0.0
  %2563 = vmatpush1.msra.mxu0 0.0
  %2564 = vmatprep.subr.mxu0 0.0
  %2565 = vmatpush1.msra.mxu0 0.0
  %2566 = vmatprep.subr.mxu0 0.0
  %2567 = vmatpush1.msra.mxu0 0.0
  %2568 = vmatprep.subr.mxu0 0.0
  %2569 = vmatpush1.msra.mxu0 0.0
  %2570 = vmatprep.subr.mxu0 0.0
  %2571 = vmatpush1.msra.mxu0 0.0
  %2572 = vmatprep.subr.mxu0 0.0
  %2573 = vmatpush1.msra.mxu0 0.0
  %2574 = vmatprep.subr.mxu0 0.0
  %2575 = vmatpush1.msra.mxu0 0.0
  %2576 = vmatprep.subr.mxu0 0.0
  %2577 = vmatpush1.msra.mxu0 0.0
  %2578 = vmatprep.subr.mxu0 0.0
  %2579 = vmatpush1.msra.mxu0 0.0
  %2580 = vmatprep.subr.mxu0 0.0
  %2581 = vmatpush1.msra.mxu0 0.0
  %2582 = vmatprep.subr.mxu0 0.0
  %2583 = vmatpush1.msra.mxu0 0.0
  %2584 = vmatprep.subr.mxu0 0.0
  %2585 = vmatpush1.msra.mxu0 0.0
  %2586 = vmatprep.subr.mxu0 0.0
  %2587 = vmatpush1.msra.mxu0 0.0
  %2588 = vmatprep.subr.mxu0 0.0
  %2589 = vmatpush1.msra.mxu0 0.0
  %2590 = vmatprep.subr.mxu0 0.0
  %2591 = vmatpush1.msra.mxu0 0.0
  %2592 = vmatprep.subr.mxu0 0.0
  %2593 = vmatpush1.msra.mxu0 0.0
  %2594 = vmatprep.subr.mxu0 0.0
  %2595 = vmatpush1.msra.mxu0 0.0
  %2596 = vmatprep.subr.mxu0 0.0
  %2597 = vmatpush1.msra.mxu0 0.0
  %2598 = vmatprep.subr.mxu0 0.0
  %2599 = vmatpush1.msra.mxu0 0.0
  %2600 = vmatprep.subr.mxu0 0.0
  %2601 = vmatpush1.msra.mxu0 0.0
  %2602 = vmatprep.subr.mxu0 0.0
  %2603 = vmatpush1.msra.mxu0 0.0
  %2604 = vmatprep.subr.mxu0 0.0
  %2605 = vmatpush1.msra.mxu0 0.0
  %2606 = vmatprep.subr.mxu0 0.0
  %2607 = vmatpush1.msra.mxu0 0.0
  %2608 = vmatprep.subr.mxu0 0.0
  %2609 = vmatpush1.msra.mxu0 0.0
  %2610 = vmatprep.subr.mxu0 0.0
  %2611 = vmatpush1.msra.mxu0 0.0
  %2612 = vmatprep.subr.mxu0 0.0
  %2613 = vmatpush1.msra.mxu0 0.0
  %2614 = vmatprep.subr.mxu0 0.0
  %2615 = vmatpush1.msra.mxu0 0.0
  %2616 = vmatprep.subr.mxu0 0.0
  %2617 = vmatpush1.msra.mxu0 0.0
  %2618 = vmatprep.mubr.f32.mxu0 0.0
  %2619 = vmatmul.mubr.f32.gmra.mrb[0].mxu0 %v2363
  %v2620 = vpop.f32.mrb[0].mxu0
  %v2621 = vadd.f32 0.0, %v2620
  %v2622 = vpop.f32.mrb[0].mxu0
  %2623 = vmatprep.mubr.f32.mxu0 0.0
  %2624 = vmatmul.mubr.f32.gmra.mrb[0].mxu0 %v2366
  %v2625 = vpop.f32.mrb[0].mxu0
  %v2626 = vadd.f32 0.0, %v2625
  %v2627 = vpop.f32.mrb[0].mxu0
  %2628 = vmatprep.mubr.f32.mxu0 0.0
  %2629 = vmatmul.mubr.f32.gmra.mrb[0].mxu0 %v2369
  %v2630 = vpop.f32.mrb[0].mxu0
  %v2631 = vadd.f32 0.0, %v2630
  %v2632 = vpop.f32.mrb[0].mxu0
  %2633 = vmatprep.mubr.f32.mxu0 0.0
  %2634 = vmatmul.mubr.f32.gmra.mrb[0].mxu0 %v2372
  %v2635 = vpop.f32.mrb[0].mxu0
  %v2636 = vadd.f32 0.0, %v2635
  %v2637 = vpop.f32.mrb[0].mxu0
  %2638 = vmatprep.mubr.f32.mxu0 0.0
  %2639 = vmatmul.mubr.f32.gmra.mrb[0].mxu0 %v2375
  %v2640 = vpop.f32.mrb[0].mxu0
  %v2641 = vadd.f32 0.0, %v2640
  %v2642 = vpop.f32.mrb[0].mxu0
  %2643 = vmatprep.mubr.f32.mxu0 0.0
  %2644 = vmatmul.mubr.f32.gmra.mrb[0].mxu0 %v2378
  %v2645 = vpop.f32.mrb[0].mxu0
  %v2646 = vadd.f32 0.0, %v2645
  %v2647 = vpop.f32.mrb[0].mxu0
  %2648 = vmatprep.mubr.f32.mxu0 0.0
  %2649 = vmatmul.mubr.f32.gmra.mrb[0].mxu0 %v2381
  %v2650 = vpop.f32.mrb[0].mxu0
  %v2651 = vadd.f32 0.0, %v2650
  %v2652 = vpop.f32.mrb[0].mxu0
  %2653 = vmatprep.mubr.f32.mxu0 0.0
  %2654 = vmatmul.mubr.f32.gmra.mrb[0].mxu0 %v2384
  %v2655 = vpop.f32.mrb[0].mxu0
  %v2656 = vadd.f32 0.0, %v2655
  %v2657 = vpop.f32.mrb[0].mxu0
  %2658 = vmatprep.mubr.f32.mxu0 0.0
  %2659 = vmatmul.mubr.f32.gmra.mrb[0].mxu0 %v2387
  %v2660 = vpop.f32.mrb[0].mxu0
  %v2661 = vadd.f32 0.0, %v2660
  %v2662 = vpop.f32.mrb[0].mxu0
  %2663 = vmatprep.mubr.f32.mxu0 0.0
  %2664 = vmatmul.mubr.f32.gmra.mrb[0].mxu0 %v2390
  %v2665 = vpop.f32.mrb[0].mxu0
  %v2666 = vadd.f32 0.0, %v2665
  %v2667 = vpop.f32.mrb[0].mxu0
  %2668 = vmatprep.mubr.f32.mxu0 0.0
  %2669 = vmatmul.mubr.f32.gmra.mrb[0].mxu0 %v2393
  %v2670 = vpop.f32.mrb[0].mxu0
  %v2671 = vadd.f32 0.0, %v2670
  %v2672 = vpop.f32.mrb[0].mxu0
  %2673 = vmatprep.mubr.f32.mxu0 0.0
  %2674 = vmatmul.mubr.f32.gmra.mrb[0].mxu0 %v2396
  %v2675 = vpop.f32.mrb[0].mxu0
  %v2676 = vadd.f32 0.0, %v2675
  %v2677 = vpop.f32.mrb[0].mxu0
  %2678 = vmatprep.mubr.f32.mxu0 0.0
  %2679 = vmatmul.mubr.f32.gmra.mrb[0].mxu0 %v2399
  %v2680 = vpop.f32.mrb[0].mxu0
  %v2681 = vadd.f32 0.0, %v2680
  %v2682 = vpop.f32.mrb[0].mxu0
  %2683 = vmatprep.mubr.f32.mxu0 0.0
  %2684 = vmatmul.mubr.f32.gmra.mrb[0].mxu0 %v2402
  %v2685 = vpop.f32.mrb[0].mxu0
  %v2686 = vadd.f32 0.0, %v2685
  %v2687 = vpop.f32.mrb[0].mxu0
  %2688 = vmatprep.mubr.f32.mxu0 0.0
  %2689 = vmatmul.mubr.f32.gmra.mrb[0].mxu0 %v2405
  %v2690 = vpop.f32.mrb[0].mxu0
  %v2691 = vadd.f32 0.0, %v2690
  %v2692 = vpop.f32.mrb[0].mxu0
  %2693 = vmatprep.mubr.f32.mxu0 0.0
  %2694 = vmatmul.mubr.f32.gmra.mrb[0].mxu0 %v2408
  %v2695 = vpop.f32.mrb[0].mxu0
  %v2696 = vadd.f32 0.0, %v2695
  %v2697 = vpop.f32.mrb[0].mxu0
  %2698 = vmatprep.mubr.f32.mxu0 0.0
  %2699 = vmatmul.mubr.f32.gmra.mrb[0].mxu0 %v2411
  %v2700 = vpop.f32.mrb[0].mxu0
  %v2701 = vadd.f32 0.0, %v2700
  %v2702 = vpop.f32.mrb[0].mxu0
  %2703 = vmatprep.mubr.f32.mxu0 0.0
  %2704 = vmatmul.mubr.f32.gmra.mrb[0].mxu0 %v2414
  %v2705 = vpop.f32.mrb[0].mxu0
  %v2706 = vadd.f32 0.0, %v2705
  %v2707 = vpop.f32.mrb[0].mxu0
  %2708 = vmatprep.mubr.f32.mxu0 0.0
  %2709 = vmatmul.mubr.f32.gmra.mrb[0].mxu0 %v2417
  %v2710 = vpop.f32.mrb[0].mxu0
  %v2711 = vadd.f32 0.0, %v2710
  %v2712 = vpop.f32.mrb[0].mxu0
  %2713 = vmatprep.mubr.f32.mxu0 0.0
  %2714 = vmatmul.mubr.f32.gmra.mrb[0].mxu0 %v2420
  %v2715 = vpop.f32.mrb[0].mxu0
  %v2716 = vadd.f32 0.0, %v2715
  %v2717 = vpop.f32.mrb[0].mxu0
  %2718 = vmatprep.mubr.f32.mxu0 0.0
  %2719 = vmatmul.mubr.f32.gmra.mrb[0].mxu0 %v2423
  %v2720 = vpop.f32.mrb[0].mxu0
  %v2721 = vadd.f32 0.0, %v2720
  %v2722 = vpop.f32.mrb[0].mxu0
  %2723 = vmatprep.mubr.f32.mxu0 0.0
  %2724 = vmatmul.mubr.f32.gmra.mrb[0].mxu0 %v2426
  %v2725 = vpop.f32.mrb[0].mxu0
  %v2726 = vadd.f32 0.0, %v2725
  %v2727 = vpop.f32.mrb[0].mxu0
  %2728 = vmatprep.mubr.f32.mxu0 0.0
  %2729 = vmatmul.mubr.f32.gmra.mrb[0].mxu0 %v2429
  %v2730 = vpop.f32.mrb[0].mxu0
  %v2731 = vadd.f32 0.0, %v2730
  %v2732 = vpop.f32.mrb[0].mxu0
  %2733 = vmatprep.mubr.f32.mxu0 0.0
  %2734 = vmatmul.mubr.f32.gmra.mrb[0].mxu0 %v2432
  %v2735 = vpop.f32.mrb[0].mxu0
  %v2736 = vadd.f32 0.0, %v2735
  %v2737 = vpop.f32.mrb[0].mxu0
  %2738 = vmatprep.mubr.f32.mxu0 0.0
  %2739 = vmatmul.mubr.f32.gmra.mrb[0].mxu0 %v2435
  %v2740 = vpop.f32.mrb[0].mxu0
  %v2741 = vadd.f32 0.0, %v2740
  %v2742 = vpop.f32.mrb[0].mxu0
  %2743 = vmatprep.mubr.f32.mxu0 0.0
  %2744 = vmatmul.mubr.f32.gmra.mrb[0].mxu0 %v2438
  %v2745 = vpop.f32.mrb[0].mxu0
  %v2746 = vadd.f32 0.0, %v2745
  %v2747 = vpop.f32.mrb[0].mxu0
  %2748 = vmatprep.mubr.f32.mxu0 0.0
  %2749 = vmatmul.mubr.f32.gmra.mrb[0].mxu0 %v2441
  %v2750 = vpop.f32.mrb[0].mxu0
  %v2751 = vadd.f32 0.0, %v2750
  %v2752 = vpop.f32.mrb[0].mxu0
  %2753 = vmatprep.mubr.f32.mxu0 0.0
  %2754 = vmatmul.mubr.f32.gmra.mrb[0].mxu0 %v2444
  %v2755 = vpop.f32.mrb[0].mxu0
  %v2756 = vadd.f32 0.0, %v2755
  %v2757 = vpop.f32.mrb[0].mxu0
  %2758 = vmatprep.mubr.f32.mxu0 0.0
  %2759 = vmatmul.mubr.f32.gmra.mrb[0].mxu0 %v2447
  %v2760 = vpop.f32.mrb[0].mxu0
  %v2761 = vadd.f32 0.0, %v2760
  %v2762 = vpop.f32.mrb[0].mxu0
  %2763 = vmatprep.mubr.f32.mxu0 0.0
  %2764 = vmatmul.mubr.f32.gmra.mrb[0].mxu0 %v2450
  %v2765 = vpop.f32.mrb[0].mxu0
  %v2766 = vadd.f32 0.0, %v2765
  %v2767 = vpop.f32.mrb[0].mxu0
  %2768 = vmatprep.mubr.f32.mxu0 0.0
  %2769 = vmatmul.mubr.f32.gmra.mrb[0].mxu0 %v2453
  %v2770 = vpop.f32.mrb[0].mxu0
  %v2771 = vadd.f32 0.0, %v2770
  %v2772 = vpop.f32.mrb[0].mxu0
  %2773 = vmatprep.mubr.f32.mxu0 0.0
  %2774 = vmatmul.mubr.f32.gmra.mrb[0].mxu0 %v2456
  %v2775 = vpop.f32.mrb[0].mxu0
  %v2776 = vadd.f32 0.0, %v2775
  %v2777 = vpop.f32.mrb[0].mxu0
  %2778 = vmatprep.mubr.f32.mxu0 0.0
  %2779 = vmatmul.mubr.f32.gmra.mrb[0].mxu0 %v2459
  %v2780 = vpop.f32.mrb[0].mxu0
  %v2781 = vadd.f32 0.0, %v2780
  %v2782 = vpop.f32.mrb[0].mxu0
  %2783 = vmatprep.mubr.f32.mxu0 0.0
  %2784 = vmatmul.mubr.f32.gmra.mrb[0].mxu0 %v2462
  %v2785 = vpop.f32.mrb[0].mxu0
  %v2786 = vadd.f32 0.0, %v2785
  %v2787 = vpop.f32.mrb[0].mxu0
  %2788 = vmatprep.mubr.f32.mxu0 0.0
  %2789 = vmatmul.mubr.f32.gmra.mrb[0].mxu0 %v2465
  %v2790 = vpop.f32.mrb[0].mxu0
  %v2791 = vadd.f32 0.0, %v2790
  %v2792 = vpop.f32.mrb[0].mxu0
  %2793 = vmatprep.mubr.f32.mxu0 0.0
  %2794 = vmatmul.mubr.f32.gmra.mrb[0].mxu0 %v2468
  %v2795 = vpop.f32.mrb[0].mxu0
  %v2796 = vadd.f32 0.0, %v2795
  %v2797 = vpop.f32.mrb[0].mxu0
  %2798 = vmatprep.mubr.f32.mxu0 0.0
  %2799 = vmatmul.mubr.f32.gmra.mrb[0].mxu0 %v2471
  %v2800 = vpop.f32.mrb[0].mxu0
  %v2801 = vadd.f32 0.0, %v2800
  %v2802 = vpop.f32.mrb[0].mxu0
  %2803 = vmatprep.mubr.f32.mxu0 0.0
  %2804 = vmatmul.mubr.f32.gmra.mrb[0].mxu0 %v2474
  %v2805 = vpop.f32.mrb[0].mxu0
  %v2806 = vadd.f32 0.0, %v2805
  %v2807 = vpop.f32.mrb[0].mxu0
  %2808 = vmatprep.mubr.f32.mxu0 0.0
  %2809 = vmatmul.mubr.f32.gmra.mrb[0].mxu0 %v2477
  %v2810 = vpop.f32.mrb[0].mxu0
  %v2811 = vadd.f32 0.0, %v2810
  %v2812 = vpop.f32.mrb[0].mxu0
  %2813 = vmatprep.mubr.f32.mxu0 0.0
  %2814 = vmatmul.mubr.f32.gmra.mrb[0].mxu0 %v2480
  %v2815 = vpop.f32.mrb[0].mxu0
  %v2816 = vadd.f32 0.0, %v2815
  %v2817 = vpop.f32.mrb[0].mxu0
  %2818 = vmatprep.mubr.f32.mxu0 0.0
  %2819 = vmatmul.mubr.f32.gmra.mrb[0].mxu0 %v2483
  %v2820 = vpop.f32.mrb[0].mxu0
  %v2821 = vadd.f32 0.0, %v2820
  %v2822 = vpop.f32.mrb[0].mxu0
  %2823 = vmatprep.mubr.f32.mxu0 0.0
  %2824 = vmatmul.mubr.f32.gmra.mrb[0].mxu0 %v2486
  %v2825 = vpop.f32.mrb[0].mxu0
  %v2826 = vadd.f32 0.0, %v2825
  %v2827 = vpop.f32.mrb[0].mxu0
  %2828 = vmatprep.mubr.f32.mxu0 0.0
  %2829 = vmatmul.mubr.f32.gmra.mrb[0].mxu0 %v2489
  %v2830 = vpop.f32.mrb[0].mxu0
  %v2831 = vadd.f32 0.0, %v2830
  %v2832 = vpop.f32.mrb[0].mxu0
  %2833 = vmatprep.mubr.f32.mxu0 0.0
  %2834 = vmatmul.mubr.f32.gmra.mrb[0].mxu0 %v2492
  %v2835 = vpop.f32.mrb[0].mxu0
  %v2836 = vadd.f32 0.0, %v2835
  %v2837 = vpop.f32.mrb[0].mxu0
  %2838 = vmatprep.mubr.f32.mxu0 0.0
  %2839 = vmatmul.mubr.f32.gmra.mrb[0].mxu0 %v2495
  %v2840 = vpop.f32.mrb[0].mxu0
  %v2841 = vadd.f32 0.0, %v2840
  %v2842 = vpop.f32.mrb[0].mxu0
  %2843 = vmatprep.mubr.f32.mxu0 0.0
  %2844 = vmatmul.mubr.f32.gmra.mrb[0].mxu0 %v2498
  %v2845 = vpop.f32.mrb[0].mxu0
  %v2846 = vadd.f32 0.0, %v2845
  %v2847 = vpop.f32.mrb[0].mxu0
  %2848 = vmatprep.mubr.f32.mxu0 0.0
  %2849 = vmatmul.mubr.f32.gmra.mrb[0].mxu0 %v2501
  %v2850 = vpop.f32.mrb[0].mxu0
  %v2851 = vadd.f32 0.0, %v2850
  %v2852 = vpop.f32.mrb[0].mxu0
  %2853 = vmatprep.mubr.f32.mxu0 0.0
  %2854 = vmatmul.mubr.f32.gmra.mrb[0].mxu0 %v2504
  %v2855 = vpop.f32.mrb[0].mxu0
  %v2856 = vadd.f32 0.0, %v2855
  %v2857 = vpop.f32.mrb[0].mxu0
  %2858 = vmatprep.mubr.f32.mxu0 0.0
  %2859 = vmatmul.mubr.f32.gmra.mrb[0].mxu0 %v2507
  %v2860 = vpop.f32.mrb[0].mxu0
  %v2861 = vadd.f32 0.0, %v2860
  %v2862 = vpop.f32.mrb[0].mxu0
  %2863 = vmatprep.mubr.f32.mxu0 0.0
  %2864 = vmatmul.mubr.f32.gmra.mrb[0].mxu0 %v2510
  %v2865 = vpop.f32.mrb[0].mxu0
  %v2866 = vadd.f32 0.0, %v2865
  %v2867 = vpop.f32.mrb[0].mxu0
  %2868 = vmatprep.mubr.f32.mxu0 0.0
  %2869 = vmatmul.mubr.f32.gmra.mrb[0].mxu0 %v2513
  %v2870 = vpop.f32.mrb[0].mxu0
  %v2871 = vadd.f32 0.0, %v2870
  %v2872 = vpop.f32.mrb[0].mxu0
  %2873 = vmatprep.mubr.f32.mxu0 0.0
  %2874 = vmatmul.mubr.f32.gmra.mrb[0].mxu0 %v2516
  %v2875 = vpop.f32.mrb[0].mxu0
  %v2876 = vadd.f32 0.0, %v2875
  %v2877 = vpop.f32.mrb[0].mxu0
  %2878 = vmatprep.mubr.f32.mxu0 0.0
  %2879 = vmatmul.mubr.f32.gmra.mrb[0].mxu0 %v2519
  %v2880 = vpop.f32.mrb[0].mxu0
  %v2881 = vadd.f32 0.0, %v2880
  %v2882 = vpop.f32.mrb[0].mxu0
  %2883 = vmatprep.mubr.f32.mxu0 0.0
  %2884 = vmatmul.mubr.f32.gmra.mrb[0].mxu0 %v2522
  %v2885 = vpop.f32.mrb[0].mxu0
  %v2886 = vadd.f32 0.0, %v2885
  %v2887 = vpop.f32.mrb[0].mxu0
  %2888 = vmatprep.mubr.f32.mxu0 0.0
  %2889 = vmatmul.mubr.f32.gmra.mrb[0].mxu0 %v2525
  %v2890 = vpop.f32.mrb[0].mxu0
  %v2891 = vadd.f32 0.0, %v2890
  %v2892 = vpop.f32.mrb[0].mxu0
  %2893 = vmatprep.mubr.f32.mxu0 0.0
  %2894 = vmatmul.mubr.f32.gmra.mrb[0].mxu0 %v2528
  %v2895 = vpop.f32.mrb[0].mxu0
  %v2896 = vadd.f32 0.0, %v2895
  %v2897 = vpop.f32.mrb[0].mxu0
  %2898 = vmatprep.mubr.f32.mxu0 0.0
  %2899 = vmatmul.mubr.f32.gmra.mrb[0].mxu0 %v2531
  %v2900 = vpop.f32.mrb[0].mxu0
  %v2901 = vadd.f32 0.0, %v2900
  %v2902 = vpop.f32.mrb[0].mxu0
  %2903 = vmatprep.mubr.f32.mxu0 0.0
  %2904 = vmatmul.mubr.f32.gmra.mrb[0].mxu0 %v2534
  %v2905 = vpop.f32.mrb[0].mxu0
  %v2906 = vadd.f32 0.0, %v2905
  %v2907 = vpop.f32.mrb[0].mxu0
  %2908 = vmatprep.mubr.f32.mxu0 0.0
  %2909 = vmatmul.mubr.f32.gmra.mrb[0].mxu0 %v2537
  %v2910 = vpop.f32.mrb[0].mxu0
  %v2911 = vadd.f32 0.0, %v2910
  %v2912 = vpop.f32.mrb[0].mxu0
  %2913 = vmatprep.mubr.f32.mxu0 0.0
  %2914 = vmatmul.mubr.f32.gmra.mrb[0].mxu0 %v2540
  %v2915 = vpop.f32.mrb[0].mxu0
  %v2916 = vadd.f32 0.0, %v2915
  %v2917 = vpop.f32.mrb[0].mxu0
  %2918 = vmatprep.mubr.f32.mxu0 0.0
  %2919 = vmatmul.mubr.f32.gmra.mrb[0].mxu0 %v2543
  %v2920 = vpop.f32.mrb[0].mxu0
  %v2921 = vadd.f32 0.0, %v2920
  %v2922 = vpop.f32.mrb[0].mxu0
  %2923 = vmatprep.mubr.f32.mxu0 0.0
  %2924 = vmatmul.mubr.f32.gmra.mrb[0].mxu0 %v2546
  %v2925 = vpop.f32.mrb[0].mxu0
  %v2926 = vadd.f32 0.0, %v2925
  %v2927 = vpop.f32.mrb[0].mxu0
  %2928 = vmatprep.mubr.f32.mxu0 0.0
  %2929 = vmatmul.mubr.f32.gmra.mrb[0].mxu0 %v2549
  %v2930 = vpop.f32.mrb[0].mxu0
  %v2931 = vadd.f32 0.0, %v2930
  %v2932 = vpop.f32.mrb[0].mxu0
  %2933 = vmatprep.mubr.f32.mxu0 0.0
  %2934 = vmatmul.mubr.f32.gmra.mrb[0].mxu0 %v2552
  %v2935 = vpop.f32.mrb[0].mxu0
  %v2936 = vadd.f32 0.0, %v2935
  %v2937 = vpop.f32.mrb[0].mxu0
  %2938 = vdwg.mxu0
  %vm2939 = vcmask 130048
  %v2940 = vsel %vm2939, %v2621, 0.0
  %v2941 = vsel %vm2939, %v2626, 0.0
  %v2942 = vadd.f32 %v2940, %v2941
  %v2943 = vsel %vm2939, %v2631, 0.0
  %v2944 = vadd.f32 %v2942, %v2943
  %v2945 = vsel %vm2939, %v2636, 0.0
  %v2946 = vadd.f32 %v2944, %v2945
  %v2947 = vsel %vm2939, %v2641, 0.0
  %v2948 = vadd.f32 %v2946, %v2947
  %v2949 = vsel %vm2939, %v2646, 0.0
  %v2950 = vadd.f32 %v2948, %v2949
  %v2951 = vsel %vm2939, %v2651, 0.0
  %v2952 = vadd.f32 %v2950, %v2951
  %v2953 = vsel %vm2939, %v2656, 0.0
  %v2954 = vadd.f32 %v2952, %v2953
  %v2955 = vsel %vm2939, %v2661, 0.0
  %v2956 = vadd.f32 %v2954, %v2955
  %v2957 = vsel %vm2939, %v2666, 0.0
  %v2958 = vadd.f32 %v2956, %v2957
  %v2959 = vsel %vm2939, %v2671, 0.0
  %v2960 = vadd.f32 %v2958, %v2959
  %v2961 = vsel %vm2939, %v2676, 0.0
  %v2962 = vadd.f32 %v2960, %v2961
  %v2963 = vsel %vm2939, %v2681, 0.0
  %v2964 = vadd.f32 %v2962, %v2963
  %v2965 = vsel %vm2939, %v2686, 0.0
  %v2966 = vadd.f32 %v2964, %v2965
  %v2967 = vsel %vm2939, %v2691, 0.0
  %v2968 = vadd.f32 %v2966, %v2967
  %v2969 = vsel %vm2939, %v2696, 0.0
  %v2970 = vadd.f32 %v2968, %v2969
  %v2971 = vsel %vm2939, %v2701, 0.0
  %v2972 = vadd.f32 %v2970, %v2971
  %v2973 = vsel %vm2939, %v2706, 0.0
  %v2974 = vadd.f32 %v2972, %v2973
  %v2975 = vsel %vm2939, %v2711, 0.0
  %v2976 = vadd.f32 %v2974, %v2975
  %v2977 = vsel %vm2939, %v2716, 0.0
  %v2978 = vadd.f32 %v2976, %v2977
  %v2979 = vsel %vm2939, %v2721, 0.0
  %v2980 = vadd.f32 %v2978, %v2979
  %v2981 = vsel %vm2939, %v2726, 0.0
  %v2982 = vadd.f32 %v2980, %v2981
  %v2983 = vsel %vm2939, %v2731, 0.0
  %v2984 = vadd.f32 %v2982, %v2983
  %v2985 = vsel %vm2939, %v2736, 0.0
  %v2986 = vadd.f32 %v2984, %v2985
  %v2987 = vsel %vm2939, %v2741, 0.0
  %v2988 = vadd.f32 %v2986, %v2987
  %v2989 = vsel %vm2939, %v2746, 0.0
  %v2990 = vadd.f32 %v2988, %v2989
  %v2991 = vsel %vm2939, %v2751, 0.0
  %v2992 = vadd.f32 %v2990, %v2991
  %v2993 = vsel %vm2939, %v2756, 0.0
  %v2994 = vadd.f32 %v2992, %v2993
  %v2995 = vsel %vm2939, %v2761, 0.0
  %v2996 = vadd.f32 %v2994, %v2995
  %v2997 = vsel %vm2939, %v2766, 0.0
  %v2998 = vadd.f32 %v2996, %v2997
  %v2999 = vsel %vm2939, %v2771, 0.0
  %v3000 = vadd.f32 %v2998, %v2999
  %v3001 = vsel %vm2939, %v2776, 0.0
  %v3002 = vadd.f32 %v3000, %v3001
  %v3003 = vsel %vm2939, %v2781, 0.0
  %v3004 = vadd.f32 %v3002, %v3003
  %v3005 = vsel %vm2939, %v2786, 0.0
  %v3006 = vadd.f32 %v3004, %v3005
  %v3007 = vsel %vm2939, %v2791, 0.0
  %v3008 = vadd.f32 %v3006, %v3007
  %v3009 = vsel %vm2939, %v2796, 0.0
  %v3010 = vadd.f32 %v3008, %v3009
  %v3011 = vsel %vm2939, %v2801, 0.0
  %v3012 = vadd.f32 %v3010, %v3011
  %v3013 = vsel %vm2939, %v2806, 0.0
  %v3014 = vadd.f32 %v3012, %v3013
  %v3015 = vsel %vm2939, %v2811, 0.0
  %v3016 = vadd.f32 %v3014, %v3015
  %v3017 = vsel %vm2939, %v2816, 0.0
  %v3018 = vadd.f32 %v3016, %v3017
  %v3019 = vsel %vm2939, %v2821, 0.0
  %v3020 = vadd.f32 %v3018, %v3019
  %v3021 = vsel %vm2939, %v2826, 0.0
  %v3022 = vadd.f32 %v3020, %v3021
  %v3023 = vsel %vm2939, %v2831, 0.0
  %v3024 = vadd.f32 %v3022, %v3023
  %v3025 = vsel %vm2939, %v2836, 0.0
  %v3026 = vadd.f32 %v3024, %v3025
  %v3027 = vsel %vm2939, %v2841, 0.0
  %v3028 = vadd.f32 %v3026, %v3027
  %v3029 = vsel %vm2939, %v2846, 0.0
  %v3030 = vadd.f32 %v3028, %v3029
  %v3031 = vsel %vm2939, %v2851, 0.0
  %v3032 = vadd.f32 %v3030, %v3031
  %v3033 = vsel %vm2939, %v2856, 0.0
  %v3034 = vadd.f32 %v3032, %v3033
  %v3035 = vsel %vm2939, %v2861, 0.0
  %v3036 = vadd.f32 %v3034, %v3035
  %v3037 = vsel %vm2939, %v2866, 0.0
  %v3038 = vadd.f32 %v3036, %v3037
  %v3039 = vsel %vm2939, %v2871, 0.0
  %v3040 = vadd.f32 %v3038, %v3039
  %v3041 = vsel %vm2939, %v2876, 0.0
  %v3042 = vadd.f32 %v3040, %v3041
  %v3043 = vsel %vm2939, %v2881, 0.0
  %v3044 = vadd.f32 %v3042, %v3043
  %v3045 = vsel %vm2939, %v2886, 0.0
  %v3046 = vadd.f32 %v3044, %v3045
  %v3047 = vsel %vm2939, %v2891, 0.0
  %v3048 = vadd.f32 %v3046, %v3047
  %v3049 = vsel %vm2939, %v2896, 0.0
  %v3050 = vadd.f32 %v3048, %v3049
  %v3051 = vsel %vm2939, %v2901, 0.0
  %v3052 = vadd.f32 %v3050, %v3051
  %v3053 = vsel %vm2939, %v2906, 0.0
  %v3054 = vadd.f32 %v3052, %v3053
  %v3055 = vsel %vm2939, %v2911, 0.0
  %v3056 = vadd.f32 %v3054, %v3055
  %v3057 = vsel %vm2939, %v2916, 0.0
  %v3058 = vadd.f32 %v3056, %v3057
  %v3059 = vsel %vm2939, %v2921, 0.0
  %v3060 = vadd.f32 %v3058, %v3059
  %v3061 = vsel %vm2939, %v2926, 0.0
  %v3062 = vadd.f32 %v3060, %v3061
  %v3063 = vsel %vm2939, %v2931, 0.0
  %v3064 = vadd.f32 %v3062, %v3063
  %v3065 = vsel %vm2939, %v2936, 0.0
  %v3066 = vadd.f32 %v3064, %v3065
  %v3067 = vrot.slane %v3066, 4
  %v3068 = vadd.f32 %v3066, %v3067
  %v3069 = vrot.slane %v3068, 2
  %v3070 = vadd.f32 %v3068, %v3069
  %v3071 = vrot.slane %v3070, 1
  %v3072 = vadd.f32 %v3070, %v3071
  %v3073 = vmul.f32 %v3072, 0.001953125
  %v3074 = vmul.f32 %v2621, %v2621
  %v3075 = vmul.f32 %v2626, %v2626
  %v3076 = vmul.f32 %v2631, %v2631
  %v3077 = vmul.f32 %v2636, %v2636
  %v3078 = vmul.f32 %v2641, %v2641
  %v3079 = vmul.f32 %v2646, %v2646
  %v3080 = vmul.f32 %v2651, %v2651
  %v3081 = vmul.f32 %v2656, %v2656
  %v3082 = vmul.f32 %v2661, %v2661
  %v3083 = vmul.f32 %v2666, %v2666
  %v3084 = vmul.f32 %v2671, %v2671
  %v3085 = vmul.f32 %v2676, %v2676
  %v3086 = vmul.f32 %v2681, %v2681
  %v3087 = vmul.f32 %v2686, %v2686
  %v3088 = vmul.f32 %v2691, %v2691
  %v3089 = vmul.f32 %v2696, %v2696
  %v3090 = vmul.f32 %v2701, %v2701
  %v3091 = vmul.f32 %v2706, %v2706
  %v3092 = vmul.f32 %v2711, %v2711
  %v3093 = vmul.f32 %v2716, %v2716
  %v3094 = vmul.f32 %v2721, %v2721
  %v3095 = vmul.f32 %v2726, %v2726
  %v3096 = vmul.f32 %v2731, %v2731
  %v3097 = vmul.f32 %v2736, %v2736
  %v3098 = vmul.f32 %v2741, %v2741
  %v3099 = vmul.f32 %v2746, %v2746
  %v3100 = vmul.f32 %v2751, %v2751
  %v3101 = vmul.f32 %v2756, %v2756
  %v3102 = vmul.f32 %v2761, %v2761
  %v3103 = vmul.f32 %v2766, %v2766
  %v3104 = vmul.f32 %v2771, %v2771
  %v3105 = vmul.f32 %v2776, %v2776
  %v3106 = vmul.f32 %v2781, %v2781
  %v3107 = vmul.f32 %v2786, %v2786
  %v3108 = vmul.f32 %v2791, %v2791
  %v3109 = vmul.f32 %v2796, %v2796
  %v3110 = vmul.f32 %v2801, %v2801
  %v3111 = vmul.f32 %v2806, %v2806
  %v3112 = vmul.f32 %v2811, %v2811
  %v3113 = vmul.f32 %v2816, %v2816
  %v3114 = vmul.f32 %v2821, %v2821
  %v3115 = vmul.f32 %v2826, %v2826
  %v3116 = vmul.f32 %v2831, %v2831
  %v3117 = vmul.f32 %v2836, %v2836
  %v3118 = vmul.f32 %v2841, %v2841
  %v3119 = vmul.f32 %v2846, %v2846
  %v3120 = vmul.f32 %v2851, %v2851
  %v3121 = vmul.f32 %v2856, %v2856
  %v3122 = vmul.f32 %v2861, %v2861
  %v3123 = vmul.f32 %v2866, %v2866
  %v3124 = vmul.f32 %v2871, %v2871
  %v3125 = vmul.f32 %v2876, %v2876
  %v3126 = vmul.f32 %v2881, %v2881
  %v3127 = vmul.f32 %v2886, %v2886
  %v3128 = vmul.f32 %v2891, %v2891
  %v3129 = vmul.f32 %v2896, %v2896
  %v3130 = vmul.f32 %v2901, %v2901
  %v3131 = vmul.f32 %v2906, %v2906
  %v3132 = vmul.f32 %v2911, %v2911
  %v3133 = vmul.f32 %v2916, %v2916
  %v3134 = vmul.f32 %v2921, %v2921
  %v3135 = vmul.f32 %v2926, %v2926
  %v3136 = vmul.f32 %v2931, %v2931
  %v3137 = vmul.f32 %v2936, %v2936
  %v3138 = vsel %vm2939, %v3074, 0.0
  %v3139 = vsel %vm2939, %v3075, 0.0
  %v3140 = vadd.f32 %v3138, %v3139
  %v3141 = vsel %vm2939, %v3076, 0.0
  %v3142 = vadd.f32 %v3140, %v3141
  %v3143 = vsel %vm2939, %v3077, 0.0
  %v3144 = vadd.f32 %v3142, %v3143
  %v3145 = vsel %vm2939, %v3078, 0.0
  %v3146 = vadd.f32 %v3144, %v3145
  %v3147 = vsel %vm2939, %v3079, 0.0
  %v3148 = vadd.f32 %v3146, %v3147
  %v3149 = vsel %vm2939, %v3080, 0.0
  %v3150 = vadd.f32 %v3148, %v3149
  %v3151 = vsel %vm2939, %v3081, 0.0
  %v3152 = vadd.f32 %v3150, %v3151
  %v3153 = vsel %vm2939, %v3082, 0.0
  %v3154 = vadd.f32 %v3152, %v3153
  %v3155 = vsel %vm2939, %v3083, 0.0
  %v3156 = vadd.f32 %v3154, %v3155
  %v3157 = vsel %vm2939, %v3084, 0.0
  %v3158 = vadd.f32 %v3156, %v3157
  %v3159 = vsel %vm2939, %v3085, 0.0
  %v3160 = vadd.f32 %v3158, %v3159
  %v3161 = vsel %vm2939, %v3086, 0.0
  %v3162 = vadd.f32 %v3160, %v3161
  %v3163 = vsel %vm2939, %v3087, 0.0
  %v3164 = vadd.f32 %v3162, %v3163
  %v3165 = vsel %vm2939, %v3088, 0.0
  %v3166 = vadd.f32 %v3164, %v3165
  %v3167 = vsel %vm2939, %v3089, 0.0
  %v3168 = vadd.f32 %v3166, %v3167
  %v3169 = vsel %vm2939, %v3090, 0.0
  %v3170 = vadd.f32 %v3168, %v3169
  %v3171 = vsel %vm2939, %v3091, 0.0
  %v3172 = vadd.f32 %v3170, %v3171
  %v3173 = vsel %vm2939, %v3092, 0.0
  %v3174 = vadd.f32 %v3172, %v3173
  %v3175 = vsel %vm2939, %v3093, 0.0
  %v3176 = vadd.f32 %v3174, %v3175
  %v3177 = vsel %vm2939, %v3094, 0.0
  %v3178 = vadd.f32 %v3176, %v3177
  %v3179 = vsel %vm2939, %v3095, 0.0
  %v3180 = vadd.f32 %v3178, %v3179
  %v3181 = vsel %vm2939, %v3096, 0.0
  %v3182 = vadd.f32 %v3180, %v3181
  %v3183 = vsel %vm2939, %v3097, 0.0
  %v3184 = vadd.f32 %v3182, %v3183
  %v3185 = vsel %vm2939, %v3098, 0.0
  %v3186 = vadd.f32 %v3184, %v3185
  %v3187 = vsel %vm2939, %v3099, 0.0
  %v3188 = vadd.f32 %v3186, %v3187
  %v3189 = vsel %vm2939, %v3100, 0.0
  %v3190 = vadd.f32 %v3188, %v3189
  %v3191 = vsel %vm2939, %v3101, 0.0
  %v3192 = vadd.f32 %v3190, %v3191
  %v3193 = vsel %vm2939, %v3102, 0.0
  %v3194 = vadd.f32 %v3192, %v3193
  %v3195 = vsel %vm2939, %v3103, 0.0
  %v3196 = vadd.f32 %v3194, %v3195
  %v3197 = vsel %vm2939, %v3104, 0.0
  %v3198 = vadd.f32 %v3196, %v3197
  %v3199 = vsel %vm2939, %v3105, 0.0
  %v3200 = vadd.f32 %v3198, %v3199
  %v3201 = vsel %vm2939, %v3106, 0.0
  %v3202 = vadd.f32 %v3200, %v3201
  %v3203 = vsel %vm2939, %v3107, 0.0
  %v3204 = vadd.f32 %v3202, %v3203
  %v3205 = vsel %vm2939, %v3108, 0.0
  %v3206 = vadd.f32 %v3204, %v3205
  %v3207 = vsel %vm2939, %v3109, 0.0
  %v3208 = vadd.f32 %v3206, %v3207
  %v3209 = vsel %vm2939, %v3110, 0.0
  %v3210 = vadd.f32 %v3208, %v3209
  %v3211 = vsel %vm2939, %v3111, 0.0
  %v3212 = vadd.f32 %v3210, %v3211
  %v3213 = vsel %vm2939, %v3112, 0.0
  %v3214 = vadd.f32 %v3212, %v3213
  %v3215 = vsel %vm2939, %v3113, 0.0
  %v3216 = vadd.f32 %v3214, %v3215
  %v3217 = vsel %vm2939, %v3114, 0.0
  %v3218 = vadd.f32 %v3216, %v3217
  %v3219 = vsel %vm2939, %v3115, 0.0
  %v3220 = vadd.f32 %v3218, %v3219
  %v3221 = vsel %vm2939, %v3116, 0.0
  %v3222 = vadd.f32 %v3220, %v3221
  %v3223 = vsel %vm2939, %v3117, 0.0
  %v3224 = vadd.f32 %v3222, %v3223
  %v3225 = vsel %vm2939, %v3118, 0.0
  %v3226 = vadd.f32 %v3224, %v3225
  %v3227 = vsel %vm2939, %v3119, 0.0
  %v3228 = vadd.f32 %v3226, %v3227
  %v3229 = vsel %vm2939, %v3120, 0.0
  %v3230 = vadd.f32 %v3228, %v3229
  %v3231 = vsel %vm2939, %v3121, 0.0
  %v3232 = vadd.f32 %v3230, %v3231
  %v3233 = vsel %vm2939, %v3122, 0.0
  %v3234 = vadd.f32 %v3232, %v3233
  %v3235 = vsel %vm2939, %v3123, 0.0
  %v3236 = vadd.f32 %v3234, %v3235
  %v3237 = vsel %vm2939, %v3124, 0.0
  %v3238 = vadd.f32 %v3236, %v3237
  %v3239 = vsel %vm2939, %v3125, 0.0
  %v3240 = vadd.f32 %v3238, %v3239
  %v3241 = vsel %vm2939, %v3126, 0.0
  %v3242 = vadd.f32 %v3240, %v3241
  %v3243 = vsel %vm2939, %v3127, 0.0
  %v3244 = vadd.f32 %v3242, %v3243
  %v3245 = vsel %vm2939, %v3128, 0.0
  %v3246 = vadd.f32 %v3244, %v3245
  %v3247 = vsel %vm2939, %v3129, 0.0
  %v3248 = vadd.f32 %v3246, %v3247
  %v3249 = vsel %vm2939, %v3130, 0.0
  %v3250 = vadd.f32 %v3248, %v3249
  %v3251 = vsel %vm2939, %v3131, 0.0
  %v3252 = vadd.f32 %v3250, %v3251
  %v3253 = vsel %vm2939, %v3132, 0.0
  %v3254 = vadd.f32 %v3252, %v3253
  %v3255 = vsel %vm2939, %v3133, 0.0
  %v3256 = vadd.f32 %v3254, %v3255
  %v3257 = vsel %vm2939, %v3134, 0.0
  %v3258 = vadd.f32 %v3256, %v3257
  %v3259 = vsel %vm2939, %v3135, 0.0
  %v3260 = vadd.f32 %v3258, %v3259
  %v3261 = vsel %vm2939, %v3136, 0.0
  %v3262 = vadd.f32 %v3260, %v3261
  %v3263 = vsel %vm2939, %v3137, 0.0
  %v3264 = vadd.f32 %v3262, %v3263
  %v3265 = vrot.slane %v3264, 4
  %v3266 = vadd.f32 %v3264, %v3265
  %v3267 = vrot.slane %v3266, 2
  %v3268 = vadd.f32 %v3266, %v3267
  %v3269 = vrot.slane %v3268, 1
  %v3270 = vadd.f32 %v3268, %v3269
  %v3271 = vmul.f32 %v3270, 0.001953125
  %v3272 = vmul.f32 %v3073, %v3073
  %v3273 = vsub.f32 %v3271, %v3272
  %v3274 = vmax.f32 %v3273, 0.0
  %v3275 = vadd.f32 %v3274, 1e-05
  %v3276 = vrsqrt.pop %v3275
  %v3277 = vld [vmem:[%s4] sm:$0x1]
  %v3278 = vmul.f32 %v3276, %v3277
  %v3279 = vlaneseq
  %v3280 = vshrl.u32 %v3279, 7
  %v3281 = vsub.s32 0, %v3280
  %v3282 = vrot.slane %v3278, %v3281
  %v3283 = vmul.f32 %v2621, %v3282
  %v3284 = vmul.f32 %v2626, %v3282
  %v3285 = vmul.f32 %v2631, %v3282
  %v3286 = vmul.f32 %v2636, %v3282
  %v3287 = vmul.f32 %v2641, %v3282
  %v3288 = vmul.f32 %v2646, %v3282
  %v3289 = vmul.f32 %v2651, %v3282
  %v3290 = vmul.f32 %v2656, %v3282
  %v3291 = vmul.f32 %v2661, %v3282
  %v3292 = vmul.f32 %v2666, %v3282
  %v3293 = vmul.f32 %v2671, %v3282
  %v3294 = vmul.f32 %v2676, %v3282
  %v3295 = vmul.f32 %v2681, %v3282
  %v3296 = vmul.f32 %v2686, %v3282
  %v3297 = vmul.f32 %v2691, %v3282
  %v3298 = vmul.f32 %v2696, %v3282
  %v3299 = vmul.f32 %v2701, %v3282
  %v3300 = vmul.f32 %v2706, %v3282
  %v3301 = vmul.f32 %v2711, %v3282
  %v3302 = vmul.f32 %v2716, %v3282
  %v3303 = vmul.f32 %v2721, %v3282
  %v3304 = vmul.f32 %v2726, %v3282
  %v3305 = vmul.f32 %v2731, %v3282
  %v3306 = vmul.f32 %v2736, %v3282
  %v3307 = vmul.f32 %v2741, %v3282
  %v3308 = vmul.f32 %v2746, %v3282
  %v3309 = vmul.f32 %v2751, %v3282
  %v3310 = vmul.f32 %v2756, %v3282
  %v3311 = vmul.f32 %v2761, %v3282
  %v3312 = vmul.f32 %v2766, %v3282
  %v3313 = vmul.f32 %v2771, %v3282
  %v3314 = vmul.f32 %v2776, %v3282
  %v3315 = vmul.f32 %v2781, %v3282
  %v3316 = vmul.f32 %v2786, %v3282
  %v3317 = vmul.f32 %v2791, %v3282
  %v3318 = vmul.f32 %v2796, %v3282
  %v3319 = vmul.f32 %v2801, %v3282
  %v3320 = vmul.f32 %v2806, %v3282
  %v3321 = vmul.f32 %v2811, %v3282
  %v3322 = vmul.f32 %v2816, %v3282
  %v3323 = vmul.f32 %v2821, %v3282
  %v3324 = vmul.f32 %v2826, %v3282
  %v3325 = vmul.f32 %v2831, %v3282
  %v3326 = vmul.f32 %v2836, %v3282
  %v3327 = vmul.f32 %v2841, %v3282
  %v3328 = vmul.f32 %v2846, %v3282
  %v3329 = vmul.f32 %v2851, %v3282
  %v3330 = vmul.f32 %v2856, %v3282
  %v3331 = vmul.f32 %v2861, %v3282
  %v3332 = vmul.f32 %v2866, %v3282
  %v3333 = vmul.f32 %v2871, %v3282
  %v3334 = vmul.f32 %v2876, %v3282
  %v3335 = vmul.f32 %v2881, %v3282
  %v3336 = vmul.f32 %v2886, %v3282
  %v3337 = vmul.f32 %v2891, %v3282
  %v3338 = vmul.f32 %v2896, %v3282
  %v3339 = vmul.f32 %v2901, %v3282
  %v3340 = vmul.f32 %v2906, %v3282
  %v3341 = vmul.f32 %v2911, %v3282
  %v3342 = vmul.f32 %v2916, %v3282
  %v3343 = vmul.f32 %v2921, %v3282
  %v3344 = vmul.f32 %v2926, %v3282
  %v3345 = vmul.f32 %v2931, %v3282
  %v3346 = vmul.f32 %v2936, %v3282
  %v3347 = vld [vmem:[%s5] sm:$0x1]
  %v3348 = vmul.f32 %v3073, %v3278
  %v3349 = vsub.f32 %v3347, %v3348
  %v3351 = vlaneseq
  %v3352 = vshrl.u32 %v3351, 7
  %v3353 = vsub.s32 0, %v3352
  %v3354 = vrot.slane %v3349, %v3353
  %v3356 = vadd.f32 %v3283, %v3354
  %v3357 = vadd.f32 %v3284, %v3354
  %v3358 = vadd.f32 %v3285, %v3354
  %v3359 = vadd.f32 %v3286, %v3354
  %v3360 = vadd.f32 %v3287, %v3354
  %v3361 = vadd.f32 %v3288, %v3354
  %v3362 = vadd.f32 %v3289, %v3354
  %v3363 = vadd.f32 %v3290, %v3354
  %v3364 = vadd.f32 %v3291, %v3354
  %v3365 = vadd.f32 %v3292, %v3354
  %v3366 = vadd.f32 %v3293, %v3354
  %v3367 = vadd.f32 %v3294, %v3354
  %v3368 = vadd.f32 %v3295, %v3354
  %v3369 = vadd.f32 %v3296, %v3354
  %v3370 = vadd.f32 %v3297, %v3354
  %v3371 = vadd.f32 %v3298, %v3354
  %v3372 = vadd.f32 %v3299, %v3354
  %v3373 = vadd.f32 %v3300, %v3354
  %v3374 = vadd.f32 %v3301, %v3354
  %v3375 = vadd.f32 %v3302, %v3354
  %v3376 = vadd.f32 %v3303, %v3354
  %v3377 = vadd.f32 %v3304, %v3354
  %v3378 = vadd.f32 %v3305, %v3354
  %v3379 = vadd.f32 %v3306, %v3354
  %v3380 = vadd.f32 %v3307, %v3354
  %v3381 = vadd.f32 %v3308, %v3354
  %v3382 = vadd.f32 %v3309, %v3354
  %v3383 = vadd.f32 %v3310, %v3354
  %v3384 = vadd.f32 %v3311, %v3354
  %v3385 = vadd.f32 %v3312, %v3354
  %v3386 = vadd.f32 %v3313, %v3354
  %v3387 = vadd.f32 %v3314, %v3354
  %v3388 = vadd.f32 %v3315, %v3354
  %v3389 = vadd.f32 %v3316, %v3354
  %v3390 = vadd.f32 %v3317, %v3354
  %v3391 = vadd.f32 %v3318, %v3354
  %v3392 = vadd.f32 %v3319, %v3354
  %v3393 = vadd.f32 %v3320, %v3354
  %v3394 = vadd.f32 %v3321, %v3354
  %v3395 = vadd.f32 %v3322, %v3354
  %v3396 = vadd.f32 %v3323, %v3354
  %v3397 = vadd.f32 %v3324, %v3354
  %v3398 = vadd.f32 %v3325, %v3354
  %v3399 = vadd.f32 %v3326, %v3354
  %v3400 = vadd.f32 %v3327, %v3354
  %v3401 = vadd.f32 %v3328, %v3354
  %v3402 = vadd.f32 %v3329, %v3354
  %v3403 = vadd.f32 %v3330, %v3354
  %v3404 = vadd.f32 %v3331, %v3354
  %v3405 = vadd.f32 %v3332, %v3354
  %v3406 = vadd.f32 %v3333, %v3354
  %v3407 = vadd.f32 %v3334, %v3354
  %v3408 = vadd.f32 %v3335, %v3354
  %v3409 = vadd.f32 %v3336, %v3354
  %v3410 = vadd.f32 %v3337, %v3354
  %v3411 = vadd.f32 %v3338, %v3354
  %v3412 = vadd.f32 %v3339, %v3354
  %v3413 = vadd.f32 %v3340, %v3354
  %v3414 = vadd.f32 %v3341, %v3354
  %v3415 = vadd.f32 %v3342, %v3354
  %v3416 = vadd.f32 %v3343, %v3354
  %v3417 = vadd.f32 %v3344, %v3354
  %v3418 = vadd.f32 %v3345, %v3354
  %v3419 = vadd.f32 %v3346, %v3354
  %3420 = vst.msk [vmem:[%s6] sm:$0xff] %vm2939, %v3356
  %3421 = vst.msk [vmem:[%s6 + $0x8] sm:$0xff] %vm2939, %v3357
  %3422 = vst.msk [vmem:[%s6 + $0x10] sm:$0xff] %vm2939, %v3358
  %3423 = vst.msk [vmem:[%s6 + $0x18] sm:$0xff] %vm2939, %v3359
  %3424 = vst.msk [vmem:[%s6 + $0x20] sm:$0xff] %vm2939, %v3360
  %3425 = vst.msk [vmem:[%s6 + $0x28] sm:$0xff] %vm2939, %v3361
  %3426 = vst.msk [vmem:[%s6 + $0x30] sm:$0xff] %vm2939, %v3362
  %3427 = vst.msk [vmem:[%s6 + $0x38] sm:$0xff] %vm2939, %v3363
  %3428 = vst.msk [vmem:[%s6 + $0x40] sm:$0xff] %vm2939, %v3364
  %3429 = vst.msk [vmem:[%s6 + $0x48] sm:$0xff] %vm2939, %v3365
  %3430 = vst.msk [vmem:[%s6 + $0x50] sm:$0xff] %vm2939, %v3366
  %3431 = vst.msk [vmem:[%s6 + $0x58] sm:$0xff] %vm2939, %v3367
  %3432 = vst.msk [vmem:[%s6 + $0x60] sm:$0xff] %vm2939, %v3368
  %3433 = vst.msk [vmem:[%s6 + $0x68] sm:$0xff] %vm2939, %v3369
  %3434 = vst.msk [vmem:[%s6 + $0x70] sm:$0xff] %vm2939, %v3370
  %3435 = vst.msk [vmem:[%s6 + $0x78] sm:$0xff] %vm2939, %v3371
  %3436 = vst.msk [vmem:[%s6 + $0x80] sm:$0xff] %vm2939, %v3372
  %3437 = vst.msk [vmem:[%s6 + $0x88] sm:$0xff] %vm2939, %v3373
  %3438 = vst.msk [vmem:[%s6 + $0x90] sm:$0xff] %vm2939, %v3374
  %3439 = vst.msk [vmem:[%s6 + $0x98] sm:$0xff] %vm2939, %v3375
  %3440 = vst.msk [vmem:[%s6 + $0xa0] sm:$0xff] %vm2939, %v3376
  %3441 = vst.msk [vmem:[%s6 + $0xa8] sm:$0xff] %vm2939, %v3377
  %3442 = vst.msk [vmem:[%s6 + $0xb0] sm:$0xff] %vm2939, %v3378
  %3443 = vst.msk [vmem:[%s6 + $0xb8] sm:$0xff] %vm2939, %v3379
  %3444 = vst.msk [vmem:[%s6 + $0xc0] sm:$0xff] %vm2939, %v3380
  %3445 = vst.msk [vmem:[%s6 + $0xc8] sm:$0xff] %vm2939, %v3381
  %3446 = vst.msk [vmem:[%s6 + $0xd0] sm:$0xff] %vm2939, %v3382
  %3447 = vst.msk [vmem:[%s6 + $0xd8] sm:$0xff] %vm2939, %v3383
  %3448 = vst.msk [vmem:[%s6 + $0xe0] sm:$0xff] %vm2939, %v3384
  %3449 = vst.msk [vmem:[%s6 + $0xe8] sm:$0xff] %vm2939, %v3385
  %3450 = vst.msk [vmem:[%s6 + $0xf0] sm:$0xff] %vm2939, %v3386
  %3451 = vst.msk [vmem:[%s6 + $0xf8] sm:$0xff] %vm2939, %v3387
  %3452 = vst.msk [vmem:[%s6 + $0x100] sm:$0xff] %vm2939, %v3388
  %3453 = vst.msk [vmem:[%s6 + $0x108] sm:$0xff] %vm2939, %v3389
  %3454 = vst.msk [vmem:[%s6 + $0x110] sm:$0xff] %vm2939, %v3390
  %3455 = vst.msk [vmem:[%s6 + $0x118] sm:$0xff] %vm2939, %v3391
  %3456 = vst.msk [vmem:[%s6 + $0x120] sm:$0xff] %vm2939, %v3392
  %3457 = vst.msk [vmem:[%s6 + $0x128] sm:$0xff] %vm2939, %v3393
  %3458 = vst.msk [vmem:[%s6 + $0x130] sm:$0xff] %vm2939, %v3394
  %3459 = vst.msk [vmem:[%s6 + $0x138] sm:$0xff] %vm2939, %v3395
  %3460 = vst.msk [vmem:[%s6 + $0x140] sm:$0xff] %vm2939, %v3396
  %3461 = vst.msk [vmem:[%s6 + $0x148] sm:$0xff] %vm2939, %v3397
  %3462 = vst.msk [vmem:[%s6 + $0x150] sm:$0xff] %vm2939, %v3398
  %3463 = vst.msk [vmem:[%s6 + $0x158] sm:$0xff] %vm2939, %v3399
  %3464 = vst.msk [vmem:[%s6 + $0x160] sm:$0xff] %vm2939, %v3400
  %3465 = vst.msk [vmem:[%s6 + $0x168] sm:$0xff] %vm2939, %v3401
  %3466 = vst.msk [vmem:[%s6 + $0x170] sm:$0xff] %vm2939, %v3402
  %3467 = vst.msk [vmem:[%s6 + $0x178] sm:$0xff] %vm2939, %v3403
  %3468 = vst.msk [vmem:[%s6 + $0x180] sm:$0xff] %vm2939, %v3404
  %3469 = vst.msk [vmem:[%s6 + $0x188] sm:$0xff] %vm2939, %v3405
  %3470 = vst.msk [vmem:[%s6 + $0x190] sm:$0xff] %vm2939, %v3406
  %3471 = vst.msk [vmem:[%s6 + $0x198] sm:$0xff] %vm2939, %v3407
  %3472 = vst.msk [vmem:[%s6 + $0x1a0] sm:$0xff] %vm2939, %v3408
  %3473 = vst.msk [vmem:[%s6 + $0x1a8] sm:$0xff] %vm2939, %v3409
  %3474 = vst.msk [vmem:[%s6 + $0x1b0] sm:$0xff] %vm2939, %v3410
  %3475 = vst.msk [vmem:[%s6 + $0x1b8] sm:$0xff] %vm2939, %v3411
  %3476 = vst.msk [vmem:[%s6 + $0x1c0] sm:$0xff] %vm2939, %v3412
  %3477 = vst.msk [vmem:[%s6 + $0x1c8] sm:$0xff] %vm2939, %v3413
  %3478 = vst.msk [vmem:[%s6 + $0x1d0] sm:$0xff] %vm2939, %v3414
  %3479 = vst.msk [vmem:[%s6 + $0x1d8] sm:$0xff] %vm2939, %v3415
  %3480 = vst.msk [vmem:[%s6 + $0x1e0] sm:$0xff] %vm2939, %v3416
  %3481 = vst.msk [vmem:[%s6 + $0x1e8] sm:$0xff] %vm2939, %v3417
  %3482 = vst.msk [vmem:[%s6 + $0x1f0] sm:$0xff] %vm2939, %v3418
  %3483 = vst.msk [vmem:[%s6 + $0x1f8] sm:$0xff] %vm2939, %v3419
  // Predicated region
  $region26: #{basic_block_gumbel_forward.1} parent=0 // pred_check
    _
  $region27: #{basic_block_gumbel_forward.1} parent=0 // pred_check_branch
    %3485 = sbr.rel (0) target = $region29
  $region28: #{basic_block_gumbel_forward.1} parent=0 // pred_region
    _
  $region29: #{basic_block_gumbel_forward.1} parent=0 // pred_fallthru
    _
  // Predicated region
  $region30: #{basic_block_gumbel_forward.1} parent=0 // pred_check
    _
  $region31: #{basic_block_gumbel_forward.1} parent=0 // pred_check_branch
    %3487 = sbr.rel (0) target = $region33
  $region32: #{basic_block_gumbel_forward.1} parent=0 // pred_region
    _
  $region33: #{basic_block_gumbel_forward.1} parent=0 // pred_fallthru
    _

</llo_original>
